<compile_context>
chip_gen: v6e
topology: v6e:2x2x1
jax: 0.10.0
libtpu: 0.0.40
codegen_flags: <defaults>
</compile_context>

<pallas_src>
import jax
import jax.numpy as jnp
from jax.experimental import pallas as pl
from jax.experimental.pallas import tpu as pltpu


# ---------------------------------------------------------------------------
# Kernel 1: 3x3 conv (pad=1, via im2col) + bias + 2x2 max pool + ReLU.
# One batch element per grid step; grid axis is "parallel" (v7x megacore).
# ---------------------------------------------------------------------------
def conv_relu_pool_kernel(x_ref, w_ref, b_ref, o_ref, xpad_ref, col_ref):
    # x_ref:    (1, H, W, Cin)    one batch element, NHWC (channels on lanes)
    # w_ref:    (9*Cin, Cout)     3x3 taps flattened in (kh, kw, ci) row order
    # b_ref:    (1, Cout)
    # o_ref:    (1, Hp*Wp, Cout)  pooled features, rows in (hp, wp) order
    # xpad_ref: (H+2, W+2, Cin)   VMEM scratch: zero halo, padded input
    # col_ref:  (H*W, 9*Cin)      VMEM scratch: im2col matrix
    H, W, Cin = x_ref.shape[1], x_ref.shape[2], x_ref.shape[3]
    Cout = w_ref.shape[1]
    Hp, Wp = H // 2, W // 2

    # In-kernel halo padding (replaces wrapper-side jnp.pad HBM round trip).
    xpad_ref[...] = jnp.zeros_like(xpad_ref)
    xpad_ref[1:H + 1, 1:W + 1, :] = x_ref[0, :, :, :]

    # im2col: 9 shifted (H*W, Cin) patches packed into one (H*W, 9*Cin) tile
    # so the whole conv is a single K=9*Cin MXU matmul.
    for kh in range(3):                       # static unroll (9 small stores)
        for kw in range(3):
            idx = kh * 3 + kw
            patch = xpad_ref[kh:kh + H, kw:kw + W, :].reshape(H * W, Cin)
            col_ref[:, idx * Cin:(idx + 1) * Cin] = patch

    acc = jnp.dot(col_ref[...], w_ref[...],
                  preferred_element_type=jnp.float32) + b_ref[...]

    # 2x2 max pool first, ReLU after (monotone -> identical result, less VPU work).
    y = acc.reshape(H, W, Cout)
    y = y.reshape(Hp, 2, W, Cout).max(axis=1)         # pool rows
    y = y.reshape(Hp, Wp, 2, Cout).max(axis=2)        # pool cols
    y = jnp.maximum(y, 0.0)                           # ReLU

    o_ref[0, ...] = y.reshape(Hp * Wp, Cout).astype(o_ref.dtype)


def conv_relu_pool(x_nhwc, w_mat, b_row):
    N, H, W, Cin = x_nhwc.shape
    Cout = w_mat.shape[1]
    Hp, Wp = H // 2, W // 2
    return pl.pallas_call(
        conv_relu_pool_kernel,
        out_shape=jax.ShapeDtypeStruct((N, Hp * Wp, Cout), x_nhwc.dtype),
        grid=(N,),
        in_specs=[
            pl.BlockSpec((1, H, W, Cin), lambda n: (n, 0, 0, 0)),
            pl.BlockSpec((9 * Cin, Cout), lambda n: (0, 0)),
            pl.BlockSpec((1, Cout), lambda n: (0, 0)),
        ],
        out_specs=pl.BlockSpec((1, Hp * Wp, Cout), lambda n: (n, 0, 0)),
        scratch_shapes=[
            pltpu.VMEM((H + 2, W + 2, Cin), jnp.float32),
            pltpu.VMEM((H * W, 9 * Cin), jnp.float32),
        ],
        compiler_params=pltpu.CompilerParams(
            dimension_semantics=("parallel",)),   # shards batch across TCs on v7x
    )(x_nhwc, w_mat, b_row)


# ---------------------------------------------------------------------------
# Kernel 2: classifier head  out = relu(x @ W1 + b1) @ W2 + b2
# Everything fits in VMEM -> one grid step, full blocks (no splitting over N).
# ---------------------------------------------------------------------------
def mlp_kernel(x_ref, w1_ref, b1_ref, w2_ref, b2_ref, o_ref):
    h = jnp.dot(x_ref[...], w1_ref[...],
                preferred_element_type=jnp.float32) + b1_ref[...]
    h = jnp.maximum(h, 0.0)
    out = jnp.dot(h, w2_ref[...],
                  preferred_element_type=jnp.float32) + b2_ref[...]
    o_ref[...] = out.astype(o_ref.dtype)


def mlp(x, w1, b1, w2, b2):
    N, F = x.shape
    Hd = w1.shape[1]
    O = w2.shape[1]
    return pl.pallas_call(
        mlp_kernel,
        out_shape=jax.ShapeDtypeStruct((N, O), x.dtype),
        grid=(1,),
        in_specs=[
            pl.BlockSpec((N, F), lambda i: (0, 0)),
            pl.BlockSpec((F, Hd), lambda i: (0, 0)),
            pl.BlockSpec((1, Hd), lambda i: (0, 0)),
            pl.BlockSpec((Hd, O), lambda i: (0, 0)),
            pl.BlockSpec((1, O), lambda i: (0, 0)),
        ],
        out_specs=pl.BlockSpec((N, O), lambda i: (0, 0)),
    )(x, w1, b1, w2, b2)


# ---------------------------------------------------------------------------
# Full forward, mirroring Base_Network.get_feature_output(x, layer='fc8')
# ---------------------------------------------------------------------------
def base_network_forward(x_nchw, kp):
    # features: NCHW -> NHWC once (channels on the lane dim), then fused
    # conv + bias + pool + relu.
    x_nhwc = jnp.transpose(x_nchw, (0, 2, 3, 1))
    feat = conv_relu_pool(x_nhwc, kp["conv_w_mat"], kp["conv_b"])  # (N, Hp*Wp, Cout)
    # x = x.view(N, -1): the NHWC flatten is a free contiguous reshape; the
    # (C,H,W)->(H,W,C) permutation was folded into fc1_w at prepare_params time.
    flat = feat.reshape(feat.shape[0], -1)
    return mlp(flat, kp["fc1_w"], kp["fc1_b"], kp["fc2_w"], kp["fc2_b"])


# ---------------------------------------------------------------------------
# Parameters: generated in PyTorch's native layouts, then re-laid-out once
# for the kernels (one-time host/XLA work, zero runtime cost).
# ---------------------------------------------------------------------------
def init_params_pytorch_layout(key, cin, cout, h, w, hidden, num_classes,
                               dtype=jnp.float32):
    hp, wp = h // 2, w // 2
    feat = cout * hp * wp
    k = jax.random.split(key, 6)
    return {
        "conv_w": 0.05 * jax.random.normal(k[0], (cout, cin, 3, 3), dtype),  # OIHW
        "conv_b": 0.05 * jax.random.normal(k[1], (cout,), dtype),
        "fc1_w": 0.05 * jax.random.normal(k[2], (hidden, feat), dtype),      # (out,in)
        "fc1_b": 0.05 * jax.random.normal(k[3], (hidden,), dtype),
        "fc2_w": 0.05 * jax.random.normal(k[4], (num_classes, hidden), dtype),
        "fc2_b": 0.05 * jax.random.normal(k[5], (num_classes,), dtype),
    }


def prepare_params(p, h, w):
    cout, cin = p["conv_w"].shape[0], p["conv_w"].shape[1]
    hp, wp = h // 2, w // 2
    hidden = p["fc1_w"].shape[0]
    # conv weight -> (9*Cin, Cout) im2col matrix, rows in (kh, kw, ci) order
    conv_w_mat = jnp.transpose(p["conv_w"], (2, 3, 1, 0)).reshape(9 * cin, cout)
    # fc1 weight -> (feat, hidden) with rows permuted from PyTorch's (c, hp, wp)
    # flatten order to the kernel's NHWC (hp, wp, c) order.
    fc1_w = p["fc1_w"].reshape(hidden, cout, hp, wp)
    fc1_w = jnp.transpose(fc1_w, (2, 3, 1, 0)).reshape(hp * wp * cout, hidden)
    return {
        "conv_w_mat": conv_w_mat,
        "conv_b": p["conv_b"][None, :],
        "fc1_w": fc1_w,
        "fc1_b": p["fc1_b"][None, :],
        "fc2_w": jnp.transpose(p["fc2_w"]),
        "fc2_b": p["fc2_b"][None, :],
    }


# ---------------------------------------------------------------------------
# Pure-JAX reference in PyTorch layouts / semantics (for correctness check)
# ---------------------------------------------------------------------------
def reference_forward(x_nchw, p):
    y = jax.lax.conv_general_dilated(
        x_nchw, p["conv_w"], window_strides=(1, 1), padding=((1, 1), (1, 1)),
        dimension_numbers=("NCHW", "OIHW", "NCHW"))
    y = y + p["conv_b"][None, :, None, None]
    y = jnp.maximum(y, 0.0)
    y = jax.lax.reduce_window(y, -jnp.inf, jax.lax.max,
                              (1, 1, 2, 2), (1, 1, 2, 2), "VALID")
    flat = y.reshape(y.shape[0], -1)                    # PyTorch (C,H,W) order
    h = jnp.maximum(flat @ p["fc1_w"].T + p["fc1_b"], 0.0)
    return h @ p["fc2_w"].T + p["fc2_b"]


if __name__ == "__main__":
    N, Cin, H, W = 2, 4, 16, 16
    Cout, HIDDEN, NUM_CLASSES = 8, 32, 10

    key = jax.random.PRNGKey(0)
    kx, kparam = jax.random.split(key)
    x = jax.random.normal(kx, (N, Cin, H, W), jnp.float32)     # NCHW like PyTorch
    params_pt = init_params_pytorch_layout(kparam, Cin, Cout, H, W,
                                           HIDDEN, NUM_CLASSES)
    params_k = prepare_params(params_pt, H, W)

    fwd = jax.jit(base_network_forward)
    out = jax.block_until_ready(fwd(x, params_k))
    assert out.shape == (N, NUM_CLASSES)

    ref = jax.block_until_ready(reference_forward(x, params_pt))
    max_err = float(jnp.max(jnp.abs(out - ref)))
    assert jnp.allclose(out, ref, atol=2e-2, rtol=2e-2), max_err

    print("KERNEL_OK")
</pallas_src>

<mosaic_0001>
module attributes {stable_mosaic.version = 11 : i64} {
  func.func @conv_relu_pool_kernel(%arg0: i32, %arg1: memref<1x16x16x4xf32, #tpu.memory_space<vmem>>, %arg2: memref<36x8xf32, #tpu.memory_space<vmem>>, %arg3: memref<1x8xf32, #tpu.memory_space<vmem>>, %arg4: memref<1x64x8xf32, #tpu.memory_space<vmem>>, %arg5: memref<18x18x4xf32, #tpu.memory_space<vmem>>, %arg6: memref<256x36xf32, #tpu.memory_space<vmem>>) attributes {dimension_semantics = [#tpu.dimension_semantics<parallel>], iteration_bounds = array<i64: 2>, scalar_prefetch = 0 : i64, scratch_operands = 2 : i64, tpu.core_type = #tpu.core_type<tc>, window_params = [{transform_indices = @transform_0, window_bounds = array<i64: 1, 16, 16, 4>}, {pipeline_mode = #tpu.pipeline_mode<synchronous>, transform_indices = @transform_1, window_bounds = array<i64: 36, 8>}, {pipeline_mode = #tpu.pipeline_mode<synchronous>, transform_indices = @transform_2, window_bounds = array<i64: 1, 8>}, {transform_indices = @transform_3, window_bounds = array<i64: 1, 64, 8>}]} {
    %cst = arith.constant 0.000000e+00 : f32
    %0 = vector.broadcast %cst : f32 to vector<18x18x4xf32>
    %c0 = arith.constant 0 : index
    %c0_0 = arith.constant 0 : index
    %c0_1 = arith.constant 0 : index
    %1 = vector.load %arg5[%c0, %c0_0, %c0_1] : memref<18x18x4xf32, #tpu.memory_space<vmem>>, vector<18x18x4xf32>
    tpu.vector_store %arg5[%c0, %c0_0, %c0_1], %0 {strides = array<i32>} : memref<18x18x4xf32, #tpu.memory_space<vmem>>, vector<18x18x4xf32>,
    %c0_2 = arith.constant 0 : index
    %c0_3 = arith.constant 0 : index
    %c0_4 = arith.constant 0 : index
    %c0_5 = arith.constant 0 : index
    %2 = vector.load %arg1[%c0_2, %c0_3, %c0_4, %c0_5] : memref<1x16x16x4xf32, #tpu.memory_space<vmem>>, vector<1x16x16x4xf32>
    %3 = vector.shape_cast %2 : vector<1x16x16x4xf32> to vector<16x16x4xf32>
    %c1 = arith.constant 1 : index
    %c1_6 = arith.constant 1 : index
    %c0_7 = arith.constant 0 : index
    %4 = vector.load %arg5[%c1, %c1_6, %c0_7] : memref<18x18x4xf32, #tpu.memory_space<vmem>>, vector<16x16x4xf32>
    tpu.vector_store %arg5[%c1, %c1_6, %c0_7], %3 {strides = array<i32>} : memref<18x18x4xf32, #tpu.memory_space<vmem>>, vector<16x16x4xf32>,
    %c0_8 = arith.constant 0 : index
    %c0_9 = arith.constant 0 : index
    %c0_10 = arith.constant 0 : index
    %5 = vector.load %arg5[%c0_8, %c0_9, %c0_10] : memref<18x18x4xf32, #tpu.memory_space<vmem>>, vector<16x16x4xf32>
    %6 = vector.shape_cast %5 : vector<16x16x4xf32> to vector<256x4xf32>
    %c0_11 = arith.constant 0 : index
    %c0_12 = arith.constant 0 : index
    %7 = vector.load %arg6[%c0_11, %c0_12] : memref<256x36xf32, #tpu.memory_space<vmem>>, vector<256x4xf32>
    tpu.vector_store %arg6[%c0_11, %c0_12], %6 {strides = array<i32>} : memref<256x36xf32, #tpu.memory_space<vmem>>, vector<256x4xf32>,
    %c0_13 = arith.constant 0 : index
    %c1_14 = arith.constant 1 : index
    %c0_15 = arith.constant 0 : index
    %8 = vector.load %arg5[%c0_13, %c1_14, %c0_15] : memref<18x18x4xf32, #tpu.memory_space<vmem>>, vector<16x16x4xf32>
    %9 = vector.shape_cast %8 : vector<16x16x4xf32> to vector<256x4xf32>
    %c0_16 = arith.constant 0 : index
    %c4 = arith.constant 4 : index
    %10 = vector.load %arg6[%c0_16, %c4] : memref<256x36xf32, #tpu.memory_space<vmem>>, vector<256x4xf32>
    tpu.vector_store %arg6[%c0_16, %c4], %9 {strides = array<i32>} : memref<256x36xf32, #tpu.memory_space<vmem>>, vector<256x4xf32>,
    %c0_17 = arith.constant 0 : index
    %c2 = arith.constant 2 : index
    %c0_18 = arith.constant 0 : index
    %11 = vector.load %arg5[%c0_17, %c2, %c0_18] : memref<18x18x4xf32, #tpu.memory_space<vmem>>, vector<16x16x4xf32>
    %12 = vector.shape_cast %11 : vector<16x16x4xf32> to vector<256x4xf32>
    %c0_19 = arith.constant 0 : index
    %c8 = arith.constant 8 : index
    %13 = vector.load %arg6[%c0_19, %c8] : memref<256x36xf32, #tpu.memory_space<vmem>>, vector<256x4xf32>
    tpu.vector_store %arg6[%c0_19, %c8], %12 {strides = array<i32>} : memref<256x36xf32, #tpu.memory_space<vmem>>, vector<256x4xf32>,
    %c1_20 = arith.constant 1 : index
    %c0_21 = arith.constant 0 : index
    %c0_22 = arith.constant 0 : index
    %14 = vector.load %arg5[%c1_20, %c0_21, %c0_22] : memref<18x18x4xf32, #tpu.memory_space<vmem>>, vector<16x16x4xf32>
    %15 = vector.shape_cast %14 : vector<16x16x4xf32> to vector<256x4xf32>
    %c0_23 = arith.constant 0 : index
    %c12 = arith.constant 12 : index
    %16 = vector.load %arg6[%c0_23, %c12] : memref<256x36xf32, #tpu.memory_space<vmem>>, vector<256x4xf32>
    tpu.vector_store %arg6[%c0_23, %c12], %15 {strides = array<i32>} : memref<256x36xf32, #tpu.memory_space<vmem>>, vector<256x4xf32>,
    %c1_24 = arith.constant 1 : index
    %c1_25 = arith.constant 1 : index
    %c0_26 = arith.constant 0 : index
    %17 = vector.load %arg5[%c1_24, %c1_25, %c0_26] : memref<18x18x4xf32, #tpu.memory_space<vmem>>, vector<16x16x4xf32>
    %18 = vector.shape_cast %17 : vector<16x16x4xf32> to vector<256x4xf32>
    %c0_27 = arith.constant 0 : index
    %c16 = arith.constant 16 : index
    %19 = vector.load %arg6[%c0_27, %c16] : memref<256x36xf32, #tpu.memory_space<vmem>>, vector<256x4xf32>
    tpu.vector_store %arg6[%c0_27, %c16], %18 {strides = array<i32>} : memref<256x36xf32, #tpu.memory_space<vmem>>, vector<256x4xf32>,
    %c1_28 = arith.constant 1 : index
    %c2_29 = arith.constant 2 : index
    %c0_30 = arith.constant 0 : index
    %20 = vector.load %arg5[%c1_28, %c2_29, %c0_30] : memref<18x18x4xf32, #tpu.memory_space<vmem>>, vector<16x16x4xf32>
    %21 = vector.shape_cast %20 : vector<16x16x4xf32> to vector<256x4xf32>
    %c0_31 = arith.constant 0 : index
    %c20 = arith.constant 20 : index
    %22 = vector.load %arg6[%c0_31, %c20] : memref<256x36xf32, #tpu.memory_space<vmem>>, vector<256x4xf32>
    tpu.vector_store %arg6[%c0_31, %c20], %21 {strides = array<i32>} : memref<256x36xf32, #tpu.memory_space<vmem>>, vector<256x4xf32>,
    %c2_32 = arith.constant 2 : index
    %c0_33 = arith.constant 0 : index
    %c0_34 = arith.constant 0 : index
    %23 = vector.load %arg5[%c2_32, %c0_33, %c0_34] : memref<18x18x4xf32, #tpu.memory_space<vmem>>, vector<16x16x4xf32>
    %24 = vector.shape_cast %23 : vector<16x16x4xf32> to vector<256x4xf32>
    %c0_35 = arith.constant 0 : index
    %c24 = arith.constant 24 : index
    %25 = vector.load %arg6[%c0_35, %c24] : memref<256x36xf32, #tpu.memory_space<vmem>>, vector<256x4xf32>
    tpu.vector_store %arg6[%c0_35, %c24], %24 {strides = array<i32>} : memref<256x36xf32, #tpu.memory_space<vmem>>, vector<256x4xf32>,
    %c2_36 = arith.constant 2 : index
    %c1_37 = arith.constant 1 : index
    %c0_38 = arith.constant 0 : index
    %26 = vector.load %arg5[%c2_36, %c1_37, %c0_38] : memref<18x18x4xf32, #tpu.memory_space<vmem>>, vector<16x16x4xf32>
    %27 = vector.shape_cast %26 : vector<16x16x4xf32> to vector<256x4xf32>
    %c0_39 = arith.constant 0 : index
    %c28 = arith.constant 28 : index
    %28 = vector.load %arg6[%c0_39, %c28] : memref<256x36xf32, #tpu.memory_space<vmem>>, vector<256x4xf32>
    tpu.vector_store %arg6[%c0_39, %c28], %27 {strides = array<i32>} : memref<256x36xf32, #tpu.memory_space<vmem>>, vector<256x4xf32>,
    %c2_40 = arith.constant 2 : index
    %c2_41 = arith.constant 2 : index
    %c0_42 = arith.constant 0 : index
    %29 = vector.load %arg5[%c2_40, %c2_41, %c0_42] : memref<18x18x4xf32, #tpu.memory_space<vmem>>, vector<16x16x4xf32>
    %30 = vector.shape_cast %29 : vector<16x16x4xf32> to vector<256x4xf32>
    %c0_43 = arith.constant 0 : index
    %c32 = arith.constant 32 : index
    %31 = vector.load %arg6[%c0_43, %c32] : memref<256x36xf32, #tpu.memory_space<vmem>>, vector<256x4xf32>
    tpu.vector_store %arg6[%c0_43, %c32], %30 {strides = array<i32>} : memref<256x36xf32, #tpu.memory_space<vmem>>, vector<256x4xf32>,
    %c0_44 = arith.constant 0 : index
    %c0_45 = arith.constant 0 : index
    %32 = vector.load %arg6[%c0_44, %c0_45] : memref<256x36xf32, #tpu.memory_space<vmem>>, vector<256x36xf32>
    %c0_46 = arith.constant 0 : index
    %c0_47 = arith.constant 0 : index
    %33 = vector.load %arg2[%c0_46, %c0_47] : memref<36x8xf32, #tpu.memory_space<vmem>>, vector<36x8xf32>
    %cst_48 = arith.constant dense<0.000000e+00> : vector<256x8xf32>
    %34 = tpu.matmul %32, %33, %cst_48 {dimension_numbers = #tpu.dot_dimension_numbers<[1], [0], [0], [1], [0, 0, 1, 1], [], []>} : vector<256x36xf32>, vector<36x8xf32>, vector<256x8xf32> -> vector<256x8xf32>
    %c0_49 = arith.constant 0 : index
    %c0_50 = arith.constant 0 : index
    %35 = vector.load %arg3[%c0_49, %c0_50] : memref<1x8xf32, #tpu.memory_space<vmem>>, vector<1x8xf32>
    %36 = vector.broadcast %35 : vector<1x8xf32> to vector<256x8xf32>
    %37 = arith.addf %34, %36 : vector<256x8xf32>
    %38 = vector.shape_cast %37 : vector<256x8xf32> to vector<16x16x8xf32>
    %39 = vector.shape_cast %38 : vector<16x16x8xf32> to vector<8x2x16x8xf32>
    %cst_51 = arith.constant dense<0xFF800000> : vector<8x16x8xf32>
    %40 = vector.multi_reduction <maximumf>, %39, %cst_51 [1] : vector<8x2x16x8xf32> to vector<8x16x8xf32>
    %41 = vector.shape_cast %40 : vector<8x16x8xf32> to vector<8x8x2x8xf32>
    %cst_52 = arith.constant dense<0xFF800000> : vector<8x8x8xf32>
    %42 = vector.multi_reduction <maximumf>, %41, %cst_52 [2] : vector<8x8x2x8xf32> to vector<8x8x8xf32>
    %cst_53 = arith.constant 0.000000e+00 : f32
    %43 = vector.broadcast %cst_53 : f32 to vector<8x8x8xf32>
    %44 = arith.maximumf %42, %43 : vector<8x8x8xf32>
    %45 = vector.shape_cast %44 : vector<8x8x8xf32> to vector<64x8xf32>
    %c0_54 = arith.constant 0 : index
    %c0_55 = arith.constant 0 : index
    %c0_56 = arith.constant 0 : index
    %46 = vector.load %arg4[%c0_54, %c0_55, %c0_56] : memref<1x64x8xf32, #tpu.memory_space<vmem>>, vector<1x64x8xf32>
    %47 = vector.shape_cast %46 : vector<1x64x8xf32> to vector<64x8xf32>
    %48 = vector.shape_cast %45 : vector<64x8xf32> to vector<1x64x8xf32>
    tpu.vector_store %arg4[%c0_54, %c0_55, %c0_56], %48 {strides = array<i32>} : memref<1x64x8xf32, #tpu.memory_space<vmem>>, vector<1x64x8xf32>,
    return
  }
  func.func @transform_0(%arg0: i32) -> (i32, i32, i32, i32) {
    %c0_i32 = arith.constant 0 : i32
    %c0_i32_0 = arith.constant 0 : i32
    %c0_i32_1 = arith.constant 0 : i32
    %c0_i32_2 = arith.constant 0 : i32
    return %arg0, %c0_i32, %c0_i32_0, %c0_i32_1 : i32, i32, i32, i32
  }
  func.func @transform_1(%arg0: i32) -> (i32, i32) {
    %c0_i32 = arith.constant 0 : i32
    %c0_i32_0 = arith.constant 0 : i32
    %c0_i32_1 = arith.constant 0 : i32
    return %c0_i32, %c0_i32_0 : i32, i32
  }
  func.func @transform_2(%arg0: i32) -> (i32, i32) {
    %c0_i32 = arith.constant 0 : i32
    %c0_i32_0 = arith.constant 0 : i32
    %c0_i32_1 = arith.constant 0 : i32
    return %c0_i32, %c0_i32_0 : i32, i32
  }
  func.func @transform_3(%arg0: i32) -> (i32, i32, i32) {
    %c0_i32 = arith.constant 0 : i32
    %c0_i32_0 = arith.constant 0 : i32
    %c0_i32_1 = arith.constant 0 : i32
    return %arg0, %c0_i32, %c0_i32_0 : i32, i32, i32
  }
}

module attributes {stable_mosaic.version = 11 : i64} {
  func.func @mlp_kernel(%arg0: i32, %arg1: memref<2x512xf32, #tpu.memory_space<vmem>>, %arg2: memref<512x32xf32, #tpu.memory_space<vmem>>, %arg3: memref<1x32xf32, #tpu.memory_space<vmem>>, %arg4: memref<32x10xf32, #tpu.memory_space<vmem>>, %arg5: memref<1x10xf32, #tpu.memory_space<vmem>>, %arg6: memref<2x10xf32, #tpu.memory_space<vmem>>) attributes {dimension_semantics = [#tpu.dimension_semantics<arbitrary>], iteration_bounds = array<i64: 1>, scalar_prefetch = 0 : i64, scratch_operands = 0 : i64, tpu.core_type = #tpu.core_type<tc>, window_params = [{pipeline_mode = #tpu.pipeline_mode<synchronous>, transform_indices = @transform_0, window_bounds = array<i64: 2, 512>}, {pipeline_mode = #tpu.pipeline_mode<synchronous>, transform_indices = @transform_1, window_bounds = array<i64: 512, 32>}, {pipeline_mode = #tpu.pipeline_mode<synchronous>, transform_indices = @transform_2, window_bounds = array<i64: 1, 32>}, {pipeline_mode = #tpu.pipeline_mode<synchronous>, transform_indices = @transform_3, window_bounds = array<i64: 32, 10>}, {pipeline_mode = #tpu.pipeline_mode<synchronous>, transform_indices = @transform_4, window_bounds = array<i64: 1, 10>}, {pipeline_mode = #tpu.pipeline_mode<synchronous>, transform_indices = @transform_5, window_bounds = array<i64: 2, 10>}]} {
    %c0 = arith.constant 0 : index
    %c0_0 = arith.constant 0 : index
    %0 = vector.load %arg1[%c0, %c0_0] : memref<2x512xf32, #tpu.memory_space<vmem>>, vector<2x512xf32>
    %c0_1 = arith.constant 0 : index
    %c0_2 = arith.constant 0 : index
    %1 = vector.load %arg2[%c0_1, %c0_2] : memref<512x32xf32, #tpu.memory_space<vmem>>, vector<512x32xf32>
    %cst = arith.constant dense<0.000000e+00> : vector<2x32xf32>
    %2 = tpu.matmul %0, %1, %cst {dimension_numbers = #tpu.dot_dimension_numbers<[1], [0], [0], [1], [0, 0, 1, 1], [], []>} : vector<2x512xf32>, vector<512x32xf32>, vector<2x32xf32> -> vector<2x32xf32>
    %c0_3 = arith.constant 0 : index
    %c0_4 = arith.constant 0 : index
    %3 = vector.load %arg3[%c0_3, %c0_4] : memref<1x32xf32, #tpu.memory_space<vmem>>, vector<1x32xf32>
    %4 = vector.broadcast %3 : vector<1x32xf32> to vector<2x32xf32>
    %5 = arith.addf %2, %4 : vector<2x32xf32>
    %cst_5 = arith.constant 0.000000e+00 : f32
    %6 = vector.broadcast %cst_5 : f32 to vector<2x32xf32>
    %7 = arith.maximumf %5, %6 : vector<2x32xf32>
    %c0_6 = arith.constant 0 : index
    %c0_7 = arith.constant 0 : index
    %8 = vector.load %arg4[%c0_6, %c0_7] : memref<32x10xf32, #tpu.memory_space<vmem>>, vector<32x10xf32>
    %cst_8 = arith.constant dense<0.000000e+00> : vector<2x10xf32>
    %9 = tpu.matmul %7, %8, %cst_8 {dimension_numbers = #tpu.dot_dimension_numbers<[1], [0], [0], [1], [0, 0, 1, 1], [], []>} : vector<2x32xf32>, vector<32x10xf32>, vector<2x10xf32> -> vector<2x10xf32>
    %c0_9 = arith.constant 0 : index
    %c0_10 = arith.constant 0 : index
    %10 = vector.load %arg5[%c0_9, %c0_10] : memref<1x10xf32, #tpu.memory_space<vmem>>, vector<1x10xf32>
    %11 = vector.broadcast %10 : vector<1x10xf32> to vector<2x10xf32>
    %12 = arith.addf %9, %11 : vector<2x10xf32>
    %c0_11 = arith.constant 0 : index
    %c0_12 = arith.constant 0 : index
    %13 = vector.load %arg6[%c0_11, %c0_12] : memref<2x10xf32, #tpu.memory_space<vmem>>, vector<2x10xf32>
    tpu.vector_store %arg6[%c0_11, %c0_12], %12 {strides = array<i32>} : memref<2x10xf32, #tpu.memory_space<vmem>>, vector<2x10xf32>,
    return
  }
  func.func @transform_0(%arg0: i32) -> (i32, i32) {
    %c0_i32 = arith.constant 0 : i32
    %c0_i32_0 = arith.constant 0 : i32
    %c0_i32_1 = arith.constant 0 : i32
    return %c0_i32, %c0_i32_0 : i32, i32
  }
  func.func @transform_1(%arg0: i32) -> (i32, i32) {
    %c0_i32 = arith.constant 0 : i32
    %c0_i32_0 = arith.constant 0 : i32
    %c0_i32_1 = arith.constant 0 : i32
    return %c0_i32, %c0_i32_0 : i32, i32
  }
  func.func @transform_2(%arg0: i32) -> (i32, i32) {
    %c0_i32 = arith.constant 0 : i32
    %c0_i32_0 = arith.constant 0 : i32
    %c0_i32_1 = arith.constant 0 : i32
    return %c0_i32, %c0_i32_0 : i32, i32
  }
  func.func @transform_3(%arg0: i32) -> (i32, i32) {
    %c0_i32 = arith.constant 0 : i32
    %c0_i32_0 = arith.constant 0 : i32
    %c0_i32_1 = arith.constant 0 : i32
    return %c0_i32, %c0_i32_0 : i32, i32
  }
  func.func @transform_4(%arg0: i32) -> (i32, i32) {
    %c0_i32 = arith.constant 0 : i32
    %c0_i32_0 = arith.constant 0 : i32
    %c0_i32_1 = arith.constant 0 : i32
    return %c0_i32, %c0_i32_0 : i32, i32
  }
  func.func @transform_5(%arg0: i32) -> (i32, i32) {
    %c0_i32 = arith.constant 0 : i32
    %c0_i32_0 = arith.constant 0 : i32
    %c0_i32_1 = arith.constant 0 : i32
    return %c0_i32, %c0_i32_0 : i32, i32
  }
}

</mosaic_0001>

<llo_original>
// kernel: base_network_forward.3
$region0: #{base_network_forward.3}
  #allocation0 [shape = 'u32[]', space=smem, size = 0x4, offset = 0x4, fixed_abs, tag = 'smem constant byte address 0x4 - core index']
  #allocation1 [shape = 'u32[144,128]{1,0:T(1,128)}', space=vmem, size = 0x12000, scoped, tag = 'internal scratch']
  %s0 = inlined_call_operand.vmem [shape: f32[2,512], index: 0, kind: input, shape index: {}]
  %s1 = inlined_call_operand.vmem [shape: f32[512,32], index: 1, kind: input, shape index: {}]
  %s2 = inlined_call_operand.vmem [shape: f32[1,32], index: 2, kind: input, shape index: {}]
  %s3 = inlined_call_operand.vmem [shape: f32[32,10], index: 3, kind: input, shape index: {}]
  %s4 = inlined_call_operand.vmem [shape: f32[1,10], index: 4, kind: input, shape index: {}]
  %s5 = inlined_call_operand.hbm [shape: f32[2,10], index: 5, kind: output, shape index: {}]
  %s6 = sld [smem:[#allocation0]]
  $region30: #{base_network_forward.3} parent=0
    _
  %s8 = ssub.s32 1, %s6
  %s9 = scalar_select 0, %s8, %s6
  $region1: #{base_network_forward.3} parent=0
    #allocation2 [shape = 'u8[1024]{0}', space=vmem, size = 0x400, scoped, tag = 'output window, operand 0, single buffered']
    #allocation3 [shape = 's32[1]{0}', space=sflag, size = 0x4, scoped, tag = 'scoped memory for base_network_forward.3']
    %10 = vsyncpa [#allocation3], 0
    // Predicated region
    $region2: #{base_network_forward.3} parent=1 // pred_check
      _
    $region3: #{base_network_forward.3} parent=1 // pred_check_branch
      %12 = sbr.rel (0) target = $region5
    $region4: #{base_network_forward.3} parent=1 // pred_region
      _
    $region5: #{base_network_forward.3} parent=1 // pred_fallthru
      _
    // Predicated region
    $region6: #{base_network_forward.3} parent=1 // pred_check
      _
    $region7: #{base_network_forward.3} parent=1 // pred_check_branch
      %14 = sbr.rel (0) target = $region9
    $region8: #{base_network_forward.3} parent=1 // pred_region
      _
    $region9: #{base_network_forward.3} parent=1 // pred_fallthru
      _
    // Predicated region
    $region10: #{base_network_forward.3} parent=1 // pred_check
      _
    $region11: #{base_network_forward.3} parent=1 // pred_check_branch
      %16 = sbr.rel (0) target = $region13
    $region12: #{base_network_forward.3} parent=1 // pred_region
      _
    $region13: #{base_network_forward.3} parent=1 // pred_fallthru
      _
    // Predicated region
    $region14: #{base_network_forward.3} parent=1 // pred_check
      _
    $region15: #{base_network_forward.3} parent=1 // pred_check_branch
      %18 = sbr.rel (0) target = $region17
    $region16: #{base_network_forward.3} parent=1 // pred_region
      _
    $region17: #{base_network_forward.3} parent=1 // pred_fallthru
      _
    // Predicated region
    $region18: #{base_network_forward.3} parent=1 // pred_check
      _
    $region19: #{base_network_forward.3} parent=1 // pred_check_branch
      %20 = sbr.rel (0) target = $region21
    $region20: #{base_network_forward.3} parent=1 // pred_region
      _
    $region21: #{base_network_forward.3} parent=1 // pred_fallthru
      _
    %v21 = vld [vmem:[%s0] sm:$0xff]
    %v22 = vld [vmem:[%s1] sm:$0xff]
    %v23 = vld [vmem:[%s1 + $0x8] sm:$0xff]
    %v24 = vld [vmem:[%s1 + $0x10] sm:$0xff]
    %v25 = vld [vmem:[%s1 + $0x18] sm:$0xff]
    %v26 = vld [vmem:[%s1 + $0x20] sm:$0xff]
    %v27 = vld [vmem:[%s1 + $0x28] sm:$0xff]
    %v28 = vld [vmem:[%s1 + $0x30] sm:$0xff]
    %v29 = vld [vmem:[%s1 + $0x38] sm:$0xff]
    %v30 = vld [vmem:[%s1 + $0x40] sm:$0xff]
    %v31 = vld [vmem:[%s1 + $0x48] sm:$0xff]
    %v32 = vld [vmem:[%s1 + $0x50] sm:$0xff]
    %v33 = vld [vmem:[%s1 + $0x58] sm:$0xff]
    %v34 = vld [vmem:[%s1 + $0x60] sm:$0xff]
    %v35 = vld [vmem:[%s1 + $0x68] sm:$0xff]
    %v36 = vld [vmem:[%s1 + $0x70] sm:$0xff]
    %v37 = vld [vmem:[%s1 + $0x78] sm:$0xff]
    %v38 = vld [vmem:[%s1 + $0x80] sm:$0xff]
    %v39 = vld [vmem:[%s1 + $0x88] sm:$0xff]
    %v40 = vld [vmem:[%s1 + $0x90] sm:$0xff]
    %v41 = vld [vmem:[%s1 + $0x98] sm:$0xff]
    %v42 = vld [vmem:[%s1 + $0xa0] sm:$0xff]
    %v43 = vld [vmem:[%s1 + $0xa8] sm:$0xff]
    %v44 = vld [vmem:[%s1 + $0xb0] sm:$0xff]
    %v45 = vld [vmem:[%s1 + $0xb8] sm:$0xff]
    %v46 = vld [vmem:[%s1 + $0xc0] sm:$0xff]
    %v47 = vld [vmem:[%s1 + $0xc8] sm:$0xff]
    %v48 = vld [vmem:[%s1 + $0xd0] sm:$0xff]
    %v49 = vld [vmem:[%s1 + $0xd8] sm:$0xff]
    %v50 = vld [vmem:[%s1 + $0xe0] sm:$0xff]
    %v51 = vld [vmem:[%s1 + $0xe8] sm:$0xff]
    %v52 = vld [vmem:[%s1 + $0xf0] sm:$0xff]
    %v53 = vld [vmem:[%s1 + $0xf8] sm:$0xff]
    %v54 = vld [vmem:[%s1 + $0x100] sm:$0xff]
    %v55 = vld [vmem:[%s1 + $0x108] sm:$0xff]
    %v56 = vld [vmem:[%s1 + $0x110] sm:$0xff]
    %v57 = vld [vmem:[%s1 + $0x118] sm:$0xff]
    %v58 = vld [vmem:[%s1 + $0x120] sm:$0xff]
    %v59 = vld [vmem:[%s1 + $0x128] sm:$0xff]
    %v60 = vld [vmem:[%s1 + $0x130] sm:$0xff]
    %v61 = vld [vmem:[%s1 + $0x138] sm:$0xff]
    %v62 = vld [vmem:[%s1 + $0x140] sm:$0xff]
    %v63 = vld [vmem:[%s1 + $0x148] sm:$0xff]
    %v64 = vld [vmem:[%s1 + $0x150] sm:$0xff]
    %v65 = vld [vmem:[%s1 + $0x158] sm:$0xff]
    %v66 = vld [vmem:[%s1 + $0x160] sm:$0xff]
    %v67 = vld [vmem:[%s1 + $0x168] sm:$0xff]
    %v68 = vld [vmem:[%s1 + $0x170] sm:$0xff]
    %v69 = vld [vmem:[%s1 + $0x178] sm:$0xff]
    %v70 = vld [vmem:[%s1 + $0x180] sm:$0xff]
    %v71 = vld [vmem:[%s1 + $0x188] sm:$0xff]
    %v72 = vld [vmem:[%s1 + $0x190] sm:$0xff]
    %v73 = vld [vmem:[%s1 + $0x198] sm:$0xff]
    %v74 = vld [vmem:[%s1 + $0x1a0] sm:$0xff]
    %v75 = vld [vmem:[%s1 + $0x1a8] sm:$0xff]
    %v76 = vld [vmem:[%s1 + $0x1b0] sm:$0xff]
    %v77 = vld [vmem:[%s1 + $0x1b8] sm:$0xff]
    %v78 = vld [vmem:[%s1 + $0x1c0] sm:$0xff]
    %v79 = vld [vmem:[%s1 + $0x1c8] sm:$0xff]
    %v80 = vld [vmem:[%s1 + $0x1d0] sm:$0xff]
    %v81 = vld [vmem:[%s1 + $0x1d8] sm:$0xff]
    %v82 = vld [vmem:[%s1 + $0x1e0] sm:$0xff]
    %v83 = vld [vmem:[%s1 + $0x1e8] sm:$0xff]
    %v84 = vld [vmem:[%s1 + $0x1f0] sm:$0xff]
    %v85 = vld [vmem:[%s1 + $0x1f8] sm:$0xff]
    %v86 = vld [vmem:[%s2] sm:$0x1]
    %v88 = vlaneseq
    %v89 = vshrl.u32 %v88, 7
    %v90 = vsub.s32 0, %v89
    %v91 = vrot.slane %v86, %v90
    %v94 = vcombine.high %v21, %v21
    %v96 = vunpack.c.l.s4 1983009808
    %v97 = vunpack.c.0.s8 %v96
    %v98 = vlaneseq
    %v99 = vshrl.u32 %v98, 7
    %v100 = vsub.s32 %v97, %v99
    %v101 = vrot.slane %v21, %v100
    %v103 = vunpack.c.l.s4 1983009808
    %v104 = vunpack.c.0.s8 %v103
    %v105 = vlaneseq
    %v106 = vshrl.u32 %v105, 7
    %v107 = vsub.s32 %v104, %v106
    %v108 = vrot.slane %v94, %v107
    %v109 = vcombine.high %v101, %v101
    %v110 = vcombine.high %v108, %v108
    %115 = vmatprep.subr.mxu0 0.0
    %116 = vmatpush1.msra.mxu0 %v37
    %117 = vmatprep.subr.mxu0 0.0
    %118 = vmatpush1.msra.mxu0 %v36
    %119 = vmatprep.subr.mxu0 0.0
    %120 = vmatpush1.msra.mxu0 %v35
    %121 = vmatprep.subr.mxu0 0.0
    %122 = vmatpush1.msra.mxu0 %v34
    %123 = vmatprep.subr.mxu0 0.0
    %124 = vmatpush1.msra.mxu0 %v33
    %125 = vmatprep.subr.mxu0 0.0
    %126 = vmatpush1.msra.mxu0 %v32
    %127 = vmatprep.subr.mxu0 0.0
    %128 = vmatpush1.msra.mxu0 %v31
    %129 = vmatprep.subr.mxu0 0.0
    %130 = vmatpush1.msra.mxu0 %v30
    %131 = vmatprep.subr.mxu0 0.0
    %132 = vmatpush1.msra.mxu0 %v29
    %133 = vmatprep.subr.mxu0 0.0
    %134 = vmatpush1.msra.mxu0 %v28
    %135 = vmatprep.subr.mxu0 0.0
    %136 = vmatpush1.msra.mxu0 %v27
    %137 = vmatprep.subr.mxu0 0.0
    %138 = vmatpush1.msra.mxu0 %v26
    %139 = vmatprep.subr.mxu0 0.0
    %140 = vmatpush1.msra.mxu0 %v25
    %141 = vmatprep.subr.mxu0 0.0
    %142 = vmatpush1.msra.mxu0 %v24
    %143 = vmatprep.subr.mxu0 0.0
    %144 = vmatpush1.msra.mxu0 %v23
    %145 = vmatprep.subr.mxu0 0.0
    %146 = vmatpush1.msra.mxu0 %v22
    %147 = vmatprep.subr.mxu0 0.0
    %148 = vmatpush2.msra.mxu0 %v53
    %149 = vmatprep.subr.mxu0 0.0
    %150 = vmatpush2.msra.mxu0 %v52
    %151 = vmatprep.subr.mxu0 0.0
    %152 = vmatpush2.msra.mxu0 %v51
    %153 = vmatprep.subr.mxu0 0.0
    %154 = vmatpush2.msra.mxu0 %v50
    %155 = vmatprep.subr.mxu0 0.0
    %156 = vmatpush2.msra.mxu0 %v49
    %157 = vmatprep.subr.mxu0 0.0
    %158 = vmatpush2.msra.mxu0 %v48
    %159 = vmatprep.subr.mxu0 0.0
    %160 = vmatpush2.msra.mxu0 %v47
    %161 = vmatprep.subr.mxu0 0.0
    %162 = vmatpush2.msra.mxu0 %v46
    %163 = vmatprep.subr.mxu0 0.0
    %164 = vmatpush2.msra.mxu0 %v45
    %165 = vmatprep.subr.mxu0 0.0
    %166 = vmatpush2.msra.mxu0 %v44
    %167 = vmatprep.subr.mxu0 0.0
    %168 = vmatpush2.msra.mxu0 %v43
    %169 = vmatprep.subr.mxu0 0.0
    %170 = vmatpush2.msra.mxu0 %v42
    %171 = vmatprep.subr.mxu0 0.0
    %172 = vmatpush2.msra.mxu0 %v41
    %173 = vmatprep.subr.mxu0 0.0
    %174 = vmatpush2.msra.mxu0 %v40
    %175 = vmatprep.subr.mxu0 0.0
    %176 = vmatpush2.msra.mxu0 %v39
    %177 = vmatprep.subr.mxu0 0.0
    %178 = vmatpush2.msra.mxu0 %v38
    %179 = vmatprep.mubr.f32.mxu0 %v109
    %180 = vmatmul.mubr.f32.gmra.mxu0 %v101
    %v181 = vpop.f32.mrf.mxu0
    %v182 = vadd.f32 %v91, %v181
    %v183 = vpop.f32.mrf.mxu0
    %184 = vdwg.mxu0
    %185 = vmatprep.subr.mxu0 0.0
    %186 = vmatpush1.msra.mxu0 %v69
    %187 = vmatprep.subr.mxu0 0.0
    %188 = vmatpush1.msra.mxu0 %v68
    %189 = vmatprep.subr.mxu0 0.0
    %190 = vmatpush1.msra.mxu0 %v67
    %191 = vmatprep.subr.mxu0 0.0
    %192 = vmatpush1.msra.mxu0 %v66
    %193 = vmatprep.subr.mxu0 0.0
    %194 = vmatpush1.msra.mxu0 %v65
    %195 = vmatprep.subr.mxu0 0.0
    %196 = vmatpush1.msra.mxu0 %v64
    %197 = vmatprep.subr.mxu0 0.0
    %198 = vmatpush1.msra.mxu0 %v63
    %199 = vmatprep.subr.mxu0 0.0
    %200 = vmatpush1.msra.mxu0 %v62
    %201 = vmatprep.subr.mxu0 0.0
    %202 = vmatpush1.msra.mxu0 %v61
    %203 = vmatprep.subr.mxu0 0.0
    %204 = vmatpush1.msra.mxu0 %v60
    %205 = vmatprep.subr.mxu0 0.0
    %206 = vmatpush1.msra.mxu0 %v59
    %207 = vmatprep.subr.mxu0 0.0
    %208 = vmatpush1.msra.mxu0 %v58
    %209 = vmatprep.subr.mxu0 0.0
    %210 = vmatpush1.msra.mxu0 %v57
    %211 = vmatprep.subr.mxu0 0.0
    %212 = vmatpush1.msra.mxu0 %v56
    %213 = vmatprep.subr.mxu0 0.0
    %214 = vmatpush1.msra.mxu0 %v55
    %215 = vmatprep.subr.mxu0 0.0
    %216 = vmatpush1.msra.mxu0 %v54
    %217 = vmatprep.subr.mxu0 0.0
    %218 = vmatpush2.msra.mxu0 %v85
    %219 = vmatprep.subr.mxu0 0.0
    %220 = vmatpush2.msra.mxu0 %v84
    %221 = vmatprep.subr.mxu0 0.0
    %222 = vmatpush2.msra.mxu0 %v83
    %223 = vmatprep.subr.mxu0 0.0
    %224 = vmatpush2.msra.mxu0 %v82
    %225 = vmatprep.subr.mxu0 0.0
    %226 = vmatpush2.msra.mxu0 %v81
    %227 = vmatprep.subr.mxu0 0.0
    %228 = vmatpush2.msra.mxu0 %v80
    %229 = vmatprep.subr.mxu0 0.0
    %230 = vmatpush2.msra.mxu0 %v79
    %231 = vmatprep.subr.mxu0 0.0
    %232 = vmatpush2.msra.mxu0 %v78
    %233 = vmatprep.subr.mxu0 0.0
    %234 = vmatpush2.msra.mxu0 %v77
    %235 = vmatprep.subr.mxu0 0.0
    %236 = vmatpush2.msra.mxu0 %v76
    %237 = vmatprep.subr.mxu0 0.0
    %238 = vmatpush2.msra.mxu0 %v75
    %239 = vmatprep.subr.mxu0 0.0
    %240 = vmatpush2.msra.mxu0 %v74
    %241 = vmatprep.subr.mxu0 0.0
    %242 = vmatpush2.msra.mxu0 %v73
    %243 = vmatprep.subr.mxu0 0.0
    %244 = vmatpush2.msra.mxu0 %v72
    %245 = vmatprep.subr.mxu0 0.0
    %246 = vmatpush2.msra.mxu0 %v71
    %247 = vmatprep.subr.mxu0 0.0
    %248 = vmatpush2.msra.mxu0 %v70
    %249 = vmatprep.mubr.f32.mxu0 %v110
    %250 = vmatmul.mubr.f32.gmra.mxu0 %v108
    %v251 = vpop.f32.mrf.mxu0
    %v252 = vadd.f32 %v182, %v251
    %v253 = vpop.f32.mrf.mxu0
    %254 = vdwg.mxu0
    %v255 = vmax.f32 %v252, 0.0
    %v256 = vld [vmem:[%s3] sm:$0xff]
    %v257 = vld [vmem:[%s3 + $0x8] sm:$0xff]
    %v258 = vld [vmem:[%s3 + $0x10] sm:$0xff]
    %v259 = vld [vmem:[%s3 + $0x18] sm:$0xff]
    %v260 = vld [vmem:[%s4] sm:$0x1]
    %v262 = vlaneseq
    %v263 = vshrl.u32 %v262, 7
    %v264 = vsub.s32 0, %v263
    %v265 = vrot.slane %v260, %v264
    %vm267 = vcmask 261120
    %v269 = vsel %vm267, %v255, 0
    %271 = vmatprep.subr.mxu0 0.0
    %272 = vmatpush1.msra.mxu0 0.0
    %273 = vmatprep.subr.mxu0 0.0
    %274 = vmatpush1.msra.mxu0 0.0
    %275 = vmatprep.subr.mxu0 0.0
    %276 = vmatpush1.msra.mxu0 0.0
    %277 = vmatprep.subr.mxu0 0.0
    %278 = vmatpush1.msra.mxu0 0.0
    %279 = vmatprep.subr.mxu0 0.0
    %280 = vmatpush1.msra.mxu0 0.0
    %281 = vmatprep.subr.mxu0 0.0
    %282 = vmatpush1.msra.mxu0 0.0
    %283 = vmatprep.subr.mxu0 0.0
    %284 = vmatpush1.msra.mxu0 0.0
    %285 = vmatprep.subr.mxu0 0.0
    %286 = vmatpush1.msra.mxu0 0.0
    %287 = vmatprep.subr.mxu0 0.0
    %288 = vmatpush1.msra.mxu0 0.0
    %289 = vmatprep.subr.mxu0 0.0
    %290 = vmatpush1.msra.mxu0 0.0
    %291 = vmatprep.subr.mxu0 0.0
    %292 = vmatpush1.msra.mxu0 0.0
    %293 = vmatprep.subr.mxu0 0.0
    %294 = vmatpush1.msra.mxu0 0.0
    %295 = vmatprep.subr.mxu0 0.0
    %296 = vmatpush1.msra.mxu0 %v259
    %297 = vmatprep.subr.mxu0 0.0
    %298 = vmatpush1.msra.mxu0 %v258
    %299 = vmatprep.subr.mxu0 0.0
    %300 = vmatpush1.msra.mxu0 %v257
    %301 = vmatprep.subr.mxu0 0.0
    %302 = vmatpush1.msra.mxu0 %v256
    %303 = vmatprep.subr.mxu0 0.0
    %304 = vmatpush2.msra.mxu0 0.0
    %305 = vmatprep.subr.mxu0 0.0
    %306 = vmatpush2.msra.mxu0 0.0
    %307 = vmatprep.subr.mxu0 0.0
    %308 = vmatpush2.msra.mxu0 0.0
    %309 = vmatprep.subr.mxu0 0.0
    %310 = vmatpush2.msra.mxu0 0.0
    %311 = vmatprep.subr.mxu0 0.0
    %312 = vmatpush2.msra.mxu0 0.0
    %313 = vmatprep.subr.mxu0 0.0
    %314 = vmatpush2.msra.mxu0 0.0
    %315 = vmatprep.subr.mxu0 0.0
    %316 = vmatpush2.msra.mxu0 0.0
    %317 = vmatprep.subr.mxu0 0.0
    %318 = vmatpush2.msra.mxu0 0.0
    %319 = vmatprep.subr.mxu0 0.0
    %320 = vmatpush2.msra.mxu0 0.0
    %321 = vmatprep.subr.mxu0 0.0
    %322 = vmatpush2.msra.mxu0 0.0
    %323 = vmatprep.subr.mxu0 0.0
    %324 = vmatpush2.msra.mxu0 0.0
    %325 = vmatprep.subr.mxu0 0.0
    %326 = vmatpush2.msra.mxu0 0.0
    %327 = vmatprep.subr.mxu0 0.0
    %328 = vmatpush2.msra.mxu0 0.0
    %329 = vmatprep.subr.mxu0 0.0
    %330 = vmatpush2.msra.mxu0 0.0
    %331 = vmatprep.subr.mxu0 0.0
    %332 = vmatpush2.msra.mxu0 0.0
    %333 = vmatprep.subr.mxu0 0.0
    %334 = vmatpush2.msra.mxu0 0.0
    %335 = vmatprep.mubr.f32.mxu0 0.0
    %336 = vmatmul.mubr.f32.gmra.mxu0 %v269
    %v337 = vpop.f32.mrf.mxu0
    %v338 = vadd.f32 %v265, %v337
    %v339 = vpop.f32.mrf.mxu0
    %340 = vdwg.mxu0
    %vm341 = vcmask 74752
    %342 = vst.msk [vmem:[#allocation2] sm:$0x3] %vm341, %v338
    // Predicated region
    $region22: #{base_network_forward.3} parent=1 // pred_check
      _
    $region23: #{base_network_forward.3} parent=1 // pred_check_branch
      %344 = sbr.rel (0) target = $region25
    $region24: #{base_network_forward.3} parent=1 // pred_region
      %s346 = ssub.s32 32, 32
      %347 = vsyncadd [#allocation3], %s346
      %s349 = sshll.u32 [#allocation2], 4
      %s350 = int_to_ptr.vmem [resolvable:$true] %s349
      %352 = dma.vmem_to_hbm [thread:$0]  %s350, 32, %s5, [#allocation3]
    $region25: #{base_network_forward.3} parent=1 // pred_fallthru
      _
    // Predicated region
    $region26: #{base_network_forward.3} parent=1 // pred_check
      _
    $region27: #{base_network_forward.3} parent=1 // pred_check_branch
      %354 = sbr.rel (0) target = $region29
    $region28: #{base_network_forward.3} parent=1 // pred_region
      %355 = dma.done [#allocation3], 32
    $region29: #{base_network_forward.3} parent=1 // pred_fallthru
      _
    %356 = vsyncpa [#allocation3], 1

// kernel: base_network_forward.2
$region0: #{base_network_forward.2}
  #allocation0 [shape = 'u32[]', space=smem, size = 0x4, offset = 0x4, fixed_abs, tag = 'smem constant byte address 0x4 - core index']
  #allocation1 [shape = 'u32[144,128]{1,0:T(1,128)}', space=vmem, size = 0x12000, scoped, tag = 'internal scratch']
  #allocation2 [shape = 'f32[18,18,4]{2,1,0:T(8,128)}', space=vmem, size = 0x36000, scoped, tag = 'scratch operand']
  #allocation3 [shape = 'f32[256,36]{1,0:T(8,128)}', space=vmem, size = 0x20000, scoped, tag = 'scratch operand']
  %s0 = inlined_call_operand.vmem [shape: f32[2,16,16,4], index: 0, kind: input, shape index: {}]
  %s1 = inlined_call_operand.vmem [shape: f32[36,8], index: 1, kind: input, shape index: {}]
  %s2 = inlined_call_operand.vmem [shape: f32[1,8], index: 2, kind: input, shape index: {}]
  %s3 = inlined_call_operand.vmem [shape: f32[2,64,8], index: 3, kind: output, shape index: {}]
  %s4 = sld [smem:[#allocation0]]
  $region45: #{base_network_forward.2} parent=0
    _
  %s6 = ssub.s32 1, %s4
  %s7 = scalar_select 0, %s6, %s4
  loop: start=0, step=1, limit=4
  $region2: #{base_network_forward.2} parent=0 // loop_pre_header
    _
  $region3: #{base_network_forward.2} parent=0 // loop_header
    %s9 = sphi 0, %s13
    %p10 = scmp.ge.s32.totalorder %s9, 4
    %s19 = sphi 0, %s21
    %s22 = sphi 0, %s19
    %s23 = sphi 0, %s22
    %s39 = sphi 0, %s23
    %s43 = sphi 0, %s43
    %s45 = sphi 0, %s43
    %s46 = sphi 0, %s45
    %s60 = sphi 0, %s46
    %s64 = sphi 0, %s64
    %s66 = sphi 0, %s64
    %s67 = sphi 0, %s66
    %s81 = sphi 0, %s67
    %s87 = sphi 0, %s89
    %s90 = sphi 0, %s87
    %s91 = sphi 0, %s90
    %s107 = sphi 0, %s91
  $region4: #{base_network_forward.2} parent=0 // loop_header_branch
    %12 = sbr.rel (%p10) target = $region8
  $region5: #{base_network_forward.2} parent=0 // loop_body
    %s14 = ssub.s32 %s9, 1
    %s15 = ssub.s32 %s9, 2
    %s16 = sadd.s32 %s9, 1
    %s17 = ssub.s32 %s9, %s16
    %p18 = scmp.eq.s32.totalorder %s17, 0
    %s20 = sadd.s32 %s19, 1
    %s21 = scalar_select %p18, %s19, %s20
    %p24 = pneg %p18
    %p25 = scmp.eq.s32.totalorder %s9, 1
    %p26 = por %p24, %p25
    %p27 = scmp.ne.s32.totalorder %s19, %s22
    %p28 = scmp.eq.s32.totalorder %s9, 0
    %p29 = por %p27, %p28
    %p30 = scmp.ne.s32.totalorder %s19, %s22
    %p31 = scmp.eq.s32.totalorder %s14, 1
    %p32 = por %p30, %p31
    %p33 = scmp.ne.s32.totalorder %s22, %s23
    %p34 = scmp.eq.s32.totalorder %s14, 0
    %p35 = por %p33, %p34
    %p36 = scmp.ne.s32.totalorder %s22, %s23
    %p37 = scmp.eq.s32.totalorder %s15, 1
    %p38 = por %p36, %p37
    %p40 = scmp.ne.s32.totalorder %s23, %s39
    %p41 = scmp.eq.s32.totalorder %s15, 0
    %p42 = por %p40, %p41
    %s44 = sadd.s32 %s43, 1
    %p47 = scmp.eq.s32.totalorder %s9, 1
    %p48 = scmp.ne.s32.totalorder %s43, %s45
    %p49 = scmp.eq.s32.totalorder %s9, 0
    %p50 = por %p48, %p49
    %p51 = scmp.ne.s32.totalorder %s43, %s45
    %p52 = scmp.eq.s32.totalorder %s14, 1
    %p53 = por %p51, %p52
    %p54 = scmp.ne.s32.totalorder %s45, %s46
    %p55 = scmp.eq.s32.totalorder %s14, 0
    %p56 = por %p54, %p55
    %p57 = scmp.ne.s32.totalorder %s45, %s46
    %p58 = scmp.eq.s32.totalorder %s15, 1
    %p59 = por %p57, %p58
    %p61 = scmp.ne.s32.totalorder %s46, %s60
    %p62 = scmp.eq.s32.totalorder %s15, 0
    %p63 = por %p61, %p62
    %s65 = sadd.s32 %s64, 1
    %p68 = scmp.eq.s32.totalorder %s9, 1
    %p69 = scmp.ne.s32.totalorder %s64, %s66
    %p70 = scmp.eq.s32.totalorder %s9, 0
    %p71 = por %p69, %p70
    %p72 = scmp.ne.s32.totalorder %s64, %s66
    %p73 = scmp.eq.s32.totalorder %s14, 1
    %p74 = por %p72, %p73
    %p75 = scmp.ne.s32.totalorder %s66, %s67
    %p76 = scmp.eq.s32.totalorder %s14, 0
    %p77 = por %p75, %p76
    %p78 = scmp.ne.s32.totalorder %s66, %s67
    %p79 = scmp.eq.s32.totalorder %s15, 1
    %p80 = por %p78, %p79
    %p82 = scmp.ne.s32.totalorder %s67, %s81
    %p83 = scmp.eq.s32.totalorder %s15, 0
    %p84 = por %p82, %p83
    %s85 = ssub.s32 %s9, %s16
    %p86 = scmp.eq.s32.totalorder %s85, 0
    %s88 = sadd.s32 %s87, 1
    %s89 = scalar_select %p86, %s87, %s88
    %p92 = pneg %p86
    %p93 = scmp.eq.s32.totalorder %s9, 1
    %p94 = por %p92, %p93
    %p95 = scmp.ne.s32.totalorder %s87, %s90
    %p96 = scmp.eq.s32.totalorder %s9, 0
    %p97 = por %p95, %p96
    %p98 = scmp.ne.s32.totalorder %s87, %s90
    %p99 = scmp.eq.s32.totalorder %s14, 1
    %p100 = por %p98, %p99
    %p101 = scmp.ne.s32.totalorder %s90, %s91
    %p102 = scmp.eq.s32.totalorder %s14, 0
    %p103 = por %p101, %p102
    %p104 = scmp.ne.s32.totalorder %s90, %s91
    %p105 = scmp.eq.s32.totalorder %s15, 1
    %p106 = por %p104, %p105
    %p108 = scmp.ne.s32.totalorder %s91, %s107
    %p109 = scmp.eq.s32.totalorder %s15, 0
    %p110 = por %p108, %p109
    %p111 = scmp.le.s32.totalorder 1, %s9
    %p112 = scmp.lt.s32.totalorder %s9, 3
    %p113 = pnand %p111, %p112
    %p114 = pneg %p113
    // Predicated region
    $region9: #{base_network_forward.2} parent=5 // pred_check
      _
    $region10: #{base_network_forward.2} parent=5 // pred_check_branch
      %116 = sbr.rel (%p113) target = $region12
    $region11: #{base_network_forward.2} parent=5 // pred_region
      %s117 = ssub.s32 %s9, 1
      // Predicated region
      $region13: #{base_network_forward.2} parent=11 // pred_check
        %p118 = pneg %p56
      $region14: #{base_network_forward.2} parent=11 // pred_check_branch
        %120 = sbr.rel (%p118) target = $region16
      $region15: #{base_network_forward.2} parent=11 // pred_region
        _
      $region16: #{base_network_forward.2} parent=11 // pred_fallthru
        _
      // Predicated region
      $region17: #{base_network_forward.2} parent=11 // pred_check
        %p121 = pneg %p77
      $region18: #{base_network_forward.2} parent=11 // pred_check_branch
        %123 = sbr.rel (%p121) target = $region20
      $region19: #{base_network_forward.2} parent=11 // pred_region
        _
      $region20: #{base_network_forward.2} parent=11 // pred_fallthru
        _
    $region12: #{base_network_forward.2} parent=5 // pred_fallthru
      _
    %p124 = scmp.lt.s32.totalorder %s9, 2
    // Predicated region
    $region21: #{base_network_forward.2} parent=5 // pred_check
      %p125 = pneg %p124
    $region22: #{base_network_forward.2} parent=5 // pred_check_branch
      %127 = sbr.rel (%p125) target = $region24
    $region23: #{base_network_forward.2} parent=5 // pred_region
      // Predicated region
      $region25: #{base_network_forward.2} parent=23 // pred_check
        %p128 = pneg %p29
      $region26: #{base_network_forward.2} parent=23 // pred_check_branch
        %130 = sbr.rel (%p128) target = $region28
      $region27: #{base_network_forward.2} parent=23 // pred_region
        %p131 = scmp.lt.s32.totalorder %s9, 1
        %s132 = scalar_select %p131, %s9, 1
        %s133 = smul.addr %s132, 32
        %s134 = smul.addr %s133, 8
        %s135 = scalar_lea.vmem %s0, %s134
      $region28: #{base_network_forward.2} parent=23 // pred_fallthru
        _
    $region24: #{base_network_forward.2} parent=5 // pred_fallthru
      _
    %p136 = scmp.le.s32.totalorder 1, %s9
    %p137 = scmp.lt.s32.totalorder %s9, 3
    %p138 = pnand %p136, %p137
    %p139 = pneg %p138
    // Predicated region
    $region29: #{base_network_forward.2} parent=5 // pred_check
      _
    $region30: #{base_network_forward.2} parent=5 // pred_check_branch
      %141 = sbr.rel (%p138) target = $region32
    $region31: #{base_network_forward.2} parent=5 // pred_region
      %s142 = ssub.s32 %s9, 1
      %p143 = scmp.lt.s32.totalorder %s14, 1
      %s144 = scalar_select %p143, %s14, 1
      %s145 = smul.addr %s144, 32
      %s146 = smul.addr %s145, 8
      %s147 = scalar_lea.vmem %s0, %s146
      %p148 = pneg %p35
      %p149 = pneg %p32
      %p150 = pneg %p56
      %p151 = pneg %p53
      %p152 = pneg %p77
      %p153 = pneg %p74
      %p154 = pneg %p103
      %p155 = pneg %p100
      %p156 = scmp.lt.s32.totalorder %s14, 1
      %s157 = scalar_select %p156, %s14, 1
      %s158 = smul.addr %s157, 8
      %s159 = smul.addr %s158, 8
      %s160 = scalar_lea.vmem %s3, %s159
      %p161 = scmp.lt.s32.totalorder %s14, 1
      %s162 = scalar_select %p161, %s14, 1
      %s163 = smul.addr %s162, 32
      %s164 = smul.addr %s163, 8
      %s165 = scalar_lea.vmem %s0, %s164
      %p166 = scmp.lt.s32.totalorder %s14, 1
      %s167 = scalar_select %p166, %s14, 1
      %s168 = smul.addr %s167, 8
      %s169 = smul.addr %s168, 8
      %s170 = scalar_lea.vmem %s3, %s169
      %vm171 = vcmask 31744
      %172 = vst.msk [vmem:[#allocation2] sm:$0xff] %vm171, 0.0
      %173 = vst.msk [vmem:[#allocation2 + $0x8] sm:$0xff] %vm171, 0.0
      %vm174 = vcmask 25600
      %175 = vst.msk [vmem:[#allocation2 + $0x10] sm:$0x3] %vm174, 0.0
      %176 = vst.msk [vmem:[#allocation2 + $0x18] sm:$0xff] %vm171, 0.0
      %177 = vst.msk [vmem:[#allocation2 + $0x20] sm:$0xff] %vm171, 0.0
      %178 = vst.msk [vmem:[#allocation2 + $0x28] sm:$0x3] %vm174, 0.0
      %179 = vst.msk [vmem:[#allocation2 + $0x30] sm:$0xff] %vm171, 0.0
      %180 = vst.msk [vmem:[#allocation2 + $0x38] sm:$0xff] %vm171, 0.0
      %181 = vst.msk [vmem:[#allocation2 + $0x40] sm:$0x3] %vm174, 0.0
      %182 = vst.msk [vmem:[#allocation2 + $0x48] sm:$0xff] %vm171, 0.0
      %183 = vst.msk [vmem:[#allocation2 + $0x50] sm:$0xff] %vm171, 0.0
      %184 = vst.msk [vmem:[#allocation2 + $0x58] sm:$0x3] %vm174, 0.0
      %185 = vst.msk [vmem:[#allocation2 + $0x60] sm:$0xff] %vm171, 0.0
      %186 = vst.msk [vmem:[#allocation2 + $0x68] sm:$0xff] %vm171, 0.0
      %187 = vst.msk [vmem:[#allocation2 + $0x70] sm:$0x3] %vm174, 0.0
      %188 = vst.msk [vmem:[#allocation2 + $0x78] sm:$0xff] %vm171, 0.0
      %189 = vst.msk [vmem:[#allocation2 + $0x80] sm:$0xff] %vm171, 0.0
      %190 = vst.msk [vmem:[#allocation2 + $0x88] sm:$0x3] %vm174, 0.0
      %191 = vst.msk [vmem:[#allocation2 + $0x90] sm:$0xff] %vm171, 0.0
      %192 = vst.msk [vmem:[#allocation2 + $0x98] sm:$0xff] %vm171, 0.0
      %193 = vst.msk [vmem:[#allocation2 + $0xa0] sm:$0x3] %vm174, 0.0
      %194 = vst.msk [vmem:[#allocation2 + $0xa8] sm:$0xff] %vm171, 0.0
      %195 = vst.msk [vmem:[#allocation2 + $0xb0] sm:$0xff] %vm171, 0.0
      %196 = vst.msk [vmem:[#allocation2 + $0xb8] sm:$0x3] %vm174, 0.0
      %197 = vst.msk [vmem:[#allocation2 + $0xc0] sm:$0xff] %vm171, 0.0
      %198 = vst.msk [vmem:[#allocation2 + $0xc8] sm:$0xff] %vm171, 0.0
      %199 = vst.msk [vmem:[#allocation2 + $0xd0] sm:$0x3] %vm174, 0.0
      %200 = vst.msk [vmem:[#allocation2 + $0xd8] sm:$0xff] %vm171, 0.0
      %201 = vst.msk [vmem:[#allocation2 + $0xe0] sm:$0xff] %vm171, 0.0
      %202 = vst.msk [vmem:[#allocation2 + $0xe8] sm:$0x3] %vm174, 0.0
      %203 = vst.msk [vmem:[#allocation2 + $0xf0] sm:$0xff] %vm171, 0.0
      %204 = vst.msk [vmem:[#allocation2 + $0xf8] sm:$0xff] %vm171, 0.0
      %205 = vst.msk [vmem:[#allocation2 + $0x100] sm:$0x3] %vm174, 0.0
      %206 = vst.msk [vmem:[#allocation2 + $0x108] sm:$0xff] %vm171, 0.0
      %207 = vst.msk [vmem:[#allocation2 + $0x110] sm:$0xff] %vm171, 0.0
      %208 = vst.msk [vmem:[#allocation2 + $0x118] sm:$0x3] %vm174, 0.0
      %209 = vst.msk [vmem:[#allocation2 + $0x120] sm:$0xff] %vm171, 0.0
      %210 = vst.msk [vmem:[#allocation2 + $0x128] sm:$0xff] %vm171, 0.0
      %211 = vst.msk [vmem:[#allocation2 + $0x130] sm:$0x3] %vm174, 0.0
      %212 = vst.msk [vmem:[#allocation2 + $0x138] sm:$0xff] %vm171, 0.0
      %213 = vst.msk [vmem:[#allocation2 + $0x140] sm:$0xff] %vm171, 0.0
      %214 = vst.msk [vmem:[#allocation2 + $0x148] sm:$0x3] %vm174, 0.0
      %215 = vst.msk [vmem:[#allocation2 + $0x150] sm:$0xff] %vm171, 0.0
      %216 = vst.msk [vmem:[#allocation2 + $0x158] sm:$0xff] %vm171, 0.0
      %217 = vst.msk [vmem:[#allocation2 + $0x160] sm:$0x3] %vm174, 0.0
      %218 = vst.msk [vmem:[#allocation2 + $0x168] sm:$0xff] %vm171, 0.0
      %219 = vst.msk [vmem:[#allocation2 + $0x170] sm:$0xff] %vm171, 0.0
      %220 = vst.msk [vmem:[#allocation2 + $0x178] sm:$0x3] %vm174, 0.0
      %221 = vst.msk [vmem:[#allocation2 + $0x180] sm:$0xff] %vm171, 0.0
      %222 = vst.msk [vmem:[#allocation2 + $0x188] sm:$0xff] %vm171, 0.0
      %223 = vst.msk [vmem:[#allocation2 + $0x190] sm:$0x3] %vm174, 0.0
      %224 = vst.msk [vmem:[#allocation2 + $0x198] sm:$0xff] %vm171, 0.0
      %225 = vst.msk [vmem:[#allocation2 + $0x1a0] sm:$0xff] %vm171, 0.0
      %226 = vst.msk [vmem:[#allocation2 + $0x1a8] sm:$0x3] %vm174, 0.0
      %v227 = vld [vmem:[%s165] sm:$0xff]
      %v228 = vld [vmem:[%s165 + $0x8] sm:$0xff]
      %v229 = vld [vmem:[%s165 + $0x10] sm:$0xff]
      %v230 = vld [vmem:[%s165 + $0x18] sm:$0xff]
      %v231 = vld [vmem:[%s165 + $0x20] sm:$0xff]
      %v232 = vld [vmem:[%s165 + $0x28] sm:$0xff]
      %v233 = vld [vmem:[%s165 + $0x30] sm:$0xff]
      %v234 = vld [vmem:[%s165 + $0x38] sm:$0xff]
      %v235 = vld [vmem:[%s165 + $0x40] sm:$0xff]
      %v236 = vld [vmem:[%s165 + $0x48] sm:$0xff]
      %v237 = vld [vmem:[%s165 + $0x50] sm:$0xff]
      %v238 = vld [vmem:[%s165 + $0x58] sm:$0xff]
      %v239 = vld [vmem:[%s165 + $0x60] sm:$0xff]
      %v240 = vld [vmem:[%s165 + $0x68] sm:$0xff]
      %v241 = vld [vmem:[%s165 + $0x70] sm:$0xff]
      %v242 = vld [vmem:[%s165 + $0x78] sm:$0xff]
      %v243 = vld [vmem:[%s165 + $0x80] sm:$0xff]
      %v244 = vld [vmem:[%s165 + $0x88] sm:$0xff]
      %v245 = vld [vmem:[%s165 + $0x90] sm:$0xff]
      %v246 = vld [vmem:[%s165 + $0x98] sm:$0xff]
      %v247 = vld [vmem:[%s165 + $0xa0] sm:$0xff]
      %v248 = vld [vmem:[%s165 + $0xa8] sm:$0xff]
      %v249 = vld [vmem:[%s165 + $0xb0] sm:$0xff]
      %v250 = vld [vmem:[%s165 + $0xb8] sm:$0xff]
      %v251 = vld [vmem:[%s165 + $0xc0] sm:$0xff]
      %v252 = vld [vmem:[%s165 + $0xc8] sm:$0xff]
      %v253 = vld [vmem:[%s165 + $0xd0] sm:$0xff]
      %v254 = vld [vmem:[%s165 + $0xd8] sm:$0xff]
      %v255 = vld [vmem:[%s165 + $0xe0] sm:$0xff]
      %v256 = vld [vmem:[%s165 + $0xe8] sm:$0xff]
      %v257 = vld [vmem:[%s165 + $0xf0] sm:$0xff]
      %v258 = vld [vmem:[%s165 + $0xf8] sm:$0xff]
      %s259 = scalar_lea.vmem [#allocation2], 24
      %260 = vst.msk [vmem:[%s259 + $0x1] sm:$0xff] %vm171, %v227
      %261 = vst.msk [vmem:[%s259 + $0x9] sm:$0xff] %vm171, %v228
      %262 = vst.msk [vmem:[%s259 + $0x19] sm:$0xff] %vm171, %v229
      %263 = vst.msk [vmem:[%s259 + $0x21] sm:$0xff] %vm171, %v230
      %264 = vst.msk [vmem:[%s259 + $0x31] sm:$0xff] %vm171, %v231
      %265 = vst.msk [vmem:[%s259 + $0x39] sm:$0xff] %vm171, %v232
      %266 = vst.msk [vmem:[%s259 + $0x49] sm:$0xff] %vm171, %v233
      %267 = vst.msk [vmem:[%s259 + $0x51] sm:$0xff] %vm171, %v234
      %268 = vst.msk [vmem:[%s259 + $0x61] sm:$0xff] %vm171, %v235
      %269 = vst.msk [vmem:[%s259 + $0x69] sm:$0xff] %vm171, %v236
      %270 = vst.msk [vmem:[%s259 + $0x79] sm:$0xff] %vm171, %v237
      %271 = vst.msk [vmem:[%s259 + $0x81] sm:$0xff] %vm171, %v238
      %272 = vst.msk [vmem:[%s259 + $0x91] sm:$0xff] %vm171, %v239
      %273 = vst.msk [vmem:[%s259 + $0x99] sm:$0xff] %vm171, %v240
      %274 = vst.msk [vmem:[%s259 + $0xa9] sm:$0xff] %vm171, %v241
      %275 = vst.msk [vmem:[%s259 + $0xb1] sm:$0xff] %vm171, %v242
      %276 = vst.msk [vmem:[%s259 + $0xc1] sm:$0xff] %vm171, %v243
      %277 = vst.msk [vmem:[%s259 + $0xc9] sm:$0xff] %vm171, %v244
      %278 = vst.msk [vmem:[%s259 + $0xd9] sm:$0xff] %vm171, %v245
      %279 = vst.msk [vmem:[%s259 + $0xe1] sm:$0xff] %vm171, %v246
      %280 = vst.msk [vmem:[%s259 + $0xf1] sm:$0xff] %vm171, %v247
      %281 = vst.msk [vmem:[%s259 + $0xf9] sm:$0xff] %vm171, %v248
      %282 = vst.msk [vmem:[%s259 + $0x109] sm:$0xff] %vm171, %v249
      %283 = vst.msk [vmem:[%s259 + $0x111] sm:$0xff] %vm171, %v250
      %284 = vst.msk [vmem:[%s259 + $0x121] sm:$0xff] %vm171, %v251
      %285 = vst.msk [vmem:[%s259 + $0x129] sm:$0xff] %vm171, %v252
      %286 = vst.msk [vmem:[%s259 + $0x139] sm:$0xff] %vm171, %v253
      %287 = vst.msk [vmem:[%s259 + $0x141] sm:$0xff] %vm171, %v254
      %288 = vst.msk [vmem:[%s259 + $0x151] sm:$0xff] %vm171, %v255
      %289 = vst.msk [vmem:[%s259 + $0x159] sm:$0xff] %vm171, %v256
      %290 = vst.msk [vmem:[%s259 + $0x169] sm:$0xff] %vm171, %v257
      %291 = vst.msk [vmem:[%s259 + $0x171] sm:$0xff] %vm171, %v258
      %v292 = vld [vmem:[#allocation2] sm:$0xff]
      %v293 = vld [vmem:[#allocation2 + $0x8] sm:$0xff]
      %v294 = vld [vmem:[#allocation2 + $0x18] sm:$0xff]
      %v295 = vld [vmem:[#allocation2 + $0x20] sm:$0xff]
      %v296 = vld [vmem:[#allocation2 + $0x30] sm:$0xff]
      %v297 = vld [vmem:[#allocation2 + $0x38] sm:$0xff]
      %v298 = vld [vmem:[#allocation2 + $0x48] sm:$0xff]
      %v299 = vld [vmem:[#allocation2 + $0x50] sm:$0xff]
      %v300 = vld [vmem:[#allocation2 + $0x60] sm:$0xff]
      %v301 = vld [vmem:[#allocation2 + $0x68] sm:$0xff]
      %v302 = vld [vmem:[#allocation2 + $0x78] sm:$0xff]
      %v303 = vld [vmem:[#allocation2 + $0x80] sm:$0xff]
      %v304 = vld [vmem:[#allocation2 + $0x90] sm:$0xff]
      %v305 = vld [vmem:[#allocation2 + $0x98] sm:$0xff]
      %v306 = vld [vmem:[#allocation2 + $0xa8] sm:$0xff]
      %v307 = vld [vmem:[#allocation2 + $0xb0] sm:$0xff]
      %v308 = vld [vmem:[#allocation2 + $0xc0] sm:$0xff]
      %v309 = vld [vmem:[#allocation2 + $0xc8] sm:$0xff]
      %v310 = vld [vmem:[#allocation2 + $0xd8] sm:$0xff]
      %v311 = vld [vmem:[#allocation2 + $0xe0] sm:$0xff]
      %v312 = vld [vmem:[#allocation2 + $0xf0] sm:$0xff]
      %v313 = vld [vmem:[#allocation2 + $0xf8] sm:$0xff]
      %v314 = vld [vmem:[#allocation2 + $0x108] sm:$0xff]
      %v315 = vld [vmem:[#allocation2 + $0x110] sm:$0xff]
      %v316 = vld [vmem:[#allocation2 + $0x120] sm:$0xff]
      %v317 = vld [vmem:[#allocation2 + $0x128] sm:$0xff]
      %v318 = vld [vmem:[#allocation2 + $0x138] sm:$0xff]
      %v319 = vld [vmem:[#allocation2 + $0x140] sm:$0xff]
      %v320 = vld [vmem:[#allocation2 + $0x150] sm:$0xff]
      %v321 = vld [vmem:[#allocation2 + $0x158] sm:$0xff]
      %v322 = vld [vmem:[#allocation2 + $0x168] sm:$0xff]
      %v323 = vld [vmem:[#allocation2 + $0x170] sm:$0xff]
      %324 = vst.msk [vmem:[#allocation3] sm:$0xff] %vm171, %v292
      %325 = vst.msk [vmem:[#allocation3 + $0x8] sm:$0xff] %vm171, %v293
      %326 = vst.msk [vmem:[#allocation3 + $0x10] sm:$0xff] %vm171, %v294
      %327 = vst.msk [vmem:[#allocation3 + $0x18] sm:$0xff] %vm171, %v295
      %328 = vst.msk [vmem:[#allocation3 + $0x20] sm:$0xff] %vm171, %v296
      %329 = vst.msk [vmem:[#allocation3 + $0x28] sm:$0xff] %vm171, %v297
      %330 = vst.msk [vmem:[#allocation3 + $0x30] sm:$0xff] %vm171, %v298
      %331 = vst.msk [vmem:[#allocation3 + $0x38] sm:$0xff] %vm171, %v299
      %332 = vst.msk [vmem:[#allocation3 + $0x40] sm:$0xff] %vm171, %v300
      %333 = vst.msk [vmem:[#allocation3 + $0x48] sm:$0xff] %vm171, %v301
      %334 = vst.msk [vmem:[#allocation3 + $0x50] sm:$0xff] %vm171, %v302
      %335 = vst.msk [vmem:[#allocation3 + $0x58] sm:$0xff] %vm171, %v303
      %336 = vst.msk [vmem:[#allocation3 + $0x60] sm:$0xff] %vm171, %v304
      %337 = vst.msk [vmem:[#allocation3 + $0x68] sm:$0xff] %vm171, %v305
      %338 = vst.msk [vmem:[#allocation3 + $0x70] sm:$0xff] %vm171, %v306
      %339 = vst.msk [vmem:[#allocation3 + $0x78] sm:$0xff] %vm171, %v307
      %340 = vst.msk [vmem:[#allocation3 + $0x80] sm:$0xff] %vm171, %v308
      %341 = vst.msk [vmem:[#allocation3 + $0x88] sm:$0xff] %vm171, %v309
      %342 = vst.msk [vmem:[#allocation3 + $0x90] sm:$0xff] %vm171, %v310
      %343 = vst.msk [vmem:[#allocation3 + $0x98] sm:$0xff] %vm171, %v311
      %344 = vst.msk [vmem:[#allocation3 + $0xa0] sm:$0xff] %vm171, %v312
      %345 = vst.msk [vmem:[#allocation3 + $0xa8] sm:$0xff] %vm171, %v313
      %346 = vst.msk [vmem:[#allocation3 + $0xb0] sm:$0xff] %vm171, %v314
      %347 = vst.msk [vmem:[#allocation3 + $0xb8] sm:$0xff] %vm171, %v315
      %348 = vst.msk [vmem:[#allocation3 + $0xc0] sm:$0xff] %vm171, %v316
      %349 = vst.msk [vmem:[#allocation3 + $0xc8] sm:$0xff] %vm171, %v317
      %350 = vst.msk [vmem:[#allocation3 + $0xd0] sm:$0xff] %vm171, %v318
      %351 = vst.msk [vmem:[#allocation3 + $0xd8] sm:$0xff] %vm171, %v319
      %352 = vst.msk [vmem:[#allocation3 + $0xe0] sm:$0xff] %vm171, %v320
      %353 = vst.msk [vmem:[#allocation3 + $0xe8] sm:$0xff] %vm171, %v321
      %354 = vst.msk [vmem:[#allocation3 + $0xf0] sm:$0xff] %vm171, %v322
      %355 = vst.msk [vmem:[#allocation3 + $0xf8] sm:$0xff] %vm171, %v323
      %v356 = vld [vmem:[#allocation2 + $0x1] sm:$0xff]
      %v357 = vld [vmem:[#allocation2 + $0x9] sm:$0xff]
      %v358 = vld [vmem:[#allocation2 + $0x19] sm:$0xff]
      %v359 = vld [vmem:[#allocation2 + $0x21] sm:$0xff]
      %v360 = vld [vmem:[#allocation2 + $0x31] sm:$0xff]
      %v361 = vld [vmem:[#allocation2 + $0x39] sm:$0xff]
      %v362 = vld [vmem:[#allocation2 + $0x49] sm:$0xff]
      %v363 = vld [vmem:[#allocation2 + $0x51] sm:$0xff]
      %v364 = vld [vmem:[#allocation2 + $0x61] sm:$0xff]
      %v365 = vld [vmem:[#allocation2 + $0x69] sm:$0xff]
      %v366 = vld [vmem:[#allocation2 + $0x79] sm:$0xff]
      %v367 = vld [vmem:[#allocation2 + $0x81] sm:$0xff]
      %v368 = vld [vmem:[#allocation2 + $0x91] sm:$0xff]
      %v369 = vld [vmem:[#allocation2 + $0x99] sm:$0xff]
      %v370 = vld [vmem:[#allocation2 + $0xa9] sm:$0xff]
      %v371 = vld [vmem:[#allocation2 + $0xb1] sm:$0xff]
      %v372 = vld [vmem:[#allocation2 + $0xc1] sm:$0xff]
      %v373 = vld [vmem:[#allocation2 + $0xc9] sm:$0xff]
      %v374 = vld [vmem:[#allocation2 + $0xd9] sm:$0xff]
      %v375 = vld [vmem:[#allocation2 + $0xe1] sm:$0xff]
      %v376 = vld [vmem:[#allocation2 + $0xf1] sm:$0xff]
      %v377 = vld [vmem:[#allocation2 + $0xf9] sm:$0xff]
      %v378 = vld [vmem:[#allocation2 + $0x109] sm:$0xff]
      %v379 = vld [vmem:[#allocation2 + $0x111] sm:$0xff]
      %v380 = vld [vmem:[#allocation2 + $0x121] sm:$0xff]
      %v381 = vld [vmem:[#allocation2 + $0x129] sm:$0xff]
      %v382 = vld [vmem:[#allocation2 + $0x139] sm:$0xff]
      %v383 = vld [vmem:[#allocation2 + $0x141] sm:$0xff]
      %v384 = vld [vmem:[#allocation2 + $0x151] sm:$0xff]
      %v385 = vld [vmem:[#allocation2 + $0x159] sm:$0xff]
      %v386 = vld [vmem:[#allocation2 + $0x169] sm:$0xff]
      %v387 = vld [vmem:[#allocation2 + $0x171] sm:$0xff]
      %420 = vrot.lane.b32.xlu0 %v356, 4
      %v421 = vpop.permute.xlu0 %420
      %422 = vrot.lane.b32.xlu0 %v357, 4
      %v423 = vpop.permute.xlu0 %422
      %424 = vrot.lane.b32.xlu0 %v358, 4
      %v425 = vpop.permute.xlu0 %424
      %426 = vrot.lane.b32.xlu0 %v359, 4
      %v427 = vpop.permute.xlu0 %426
      %428 = vrot.lane.b32.xlu0 %v360, 4
      %v429 = vpop.permute.xlu0 %428
      %430 = vrot.lane.b32.xlu0 %v361, 4
      %v431 = vpop.permute.xlu0 %430
      %432 = vrot.lane.b32.xlu0 %v362, 4
      %v433 = vpop.permute.xlu0 %432
      %434 = vrot.lane.b32.xlu0 %v363, 4
      %v435 = vpop.permute.xlu0 %434
      %436 = vrot.lane.b32.xlu0 %v364, 4
      %v437 = vpop.permute.xlu0 %436
      %438 = vrot.lane.b32.xlu0 %v365, 4
      %v439 = vpop.permute.xlu0 %438
      %440 = vrot.lane.b32.xlu0 %v366, 4
      %v441 = vpop.permute.xlu0 %440
      %442 = vrot.lane.b32.xlu0 %v367, 4
      %v443 = vpop.permute.xlu0 %442
      %444 = vrot.lane.b32.xlu0 %v368, 4
      %v445 = vpop.permute.xlu0 %444
      %446 = vrot.lane.b32.xlu0 %v369, 4
      %v447 = vpop.permute.xlu0 %446
      %448 = vrot.lane.b32.xlu0 %v370, 4
      %v449 = vpop.permute.xlu0 %448
      %450 = vrot.lane.b32.xlu0 %v371, 4
      %v451 = vpop.permute.xlu0 %450
      %452 = vrot.lane.b32.xlu0 %v372, 4
      %v453 = vpop.permute.xlu0 %452
      %454 = vrot.lane.b32.xlu0 %v373, 4
      %v455 = vpop.permute.xlu0 %454
      %456 = vrot.lane.b32.xlu0 %v374, 4
      %v457 = vpop.permute.xlu0 %456
      %458 = vrot.lane.b32.xlu0 %v375, 4
      %v459 = vpop.permute.xlu0 %458
      %460 = vrot.lane.b32.xlu0 %v376, 4
      %v461 = vpop.permute.xlu0 %460
      %462 = vrot.lane.b32.xlu0 %v377, 4
      %v463 = vpop.permute.xlu0 %462
      %464 = vrot.lane.b32.xlu0 %v378, 4
      %v465 = vpop.permute.xlu0 %464
      %466 = vrot.lane.b32.xlu0 %v379, 4
      %v467 = vpop.permute.xlu0 %466
      %468 = vrot.lane.b32.xlu0 %v380, 4
      %v469 = vpop.permute.xlu0 %468
      %470 = vrot.lane.b32.xlu0 %v381, 4
      %v471 = vpop.permute.xlu0 %470
      %472 = vrot.lane.b32.xlu0 %v382, 4
      %v473 = vpop.permute.xlu0 %472
      %474 = vrot.lane.b32.xlu0 %v383, 4
      %v475 = vpop.permute.xlu0 %474
      %476 = vrot.lane.b32.xlu0 %v384, 4
      %v477 = vpop.permute.xlu0 %476
      %478 = vrot.lane.b32.xlu0 %v385, 4
      %v479 = vpop.permute.xlu0 %478
      %480 = vrot.lane.b32.xlu0 %v386, 4
      %v481 = vpop.permute.xlu0 %480
      %482 = vrot.lane.b32.xlu0 %v387, 4
      %v483 = vpop.permute.xlu0 %482
      %vm516 = vcmask 64544
      %517 = vst.msk [vmem:[#allocation3] sm:$0xff] %vm516, %v421
      %518 = vst.msk [vmem:[#allocation3 + $0x8] sm:$0xff] %vm516, %v423
      %519 = vst.msk [vmem:[#allocation3 + $0x10] sm:$0xff] %vm516, %v425
      %520 = vst.msk [vmem:[#allocation3 + $0x18] sm:$0xff] %vm516, %v427
      %521 = vst.msk [vmem:[#allocation3 + $0x20] sm:$0xff] %vm516, %v429
      %522 = vst.msk [vmem:[#allocation3 + $0x28] sm:$0xff] %vm516, %v431
      %523 = vst.msk [vmem:[#allocation3 + $0x30] sm:$0xff] %vm516, %v433
      %524 = vst.msk [vmem:[#allocation3 + $0x38] sm:$0xff] %vm516, %v435
      %525 = vst.msk [vmem:[#allocation3 + $0x40] sm:$0xff] %vm516, %v437
      %526 = vst.msk [vmem:[#allocation3 + $0x48] sm:$0xff] %vm516, %v439
      %527 = vst.msk [vmem:[#allocation3 + $0x50] sm:$0xff] %vm516, %v441
      %528 = vst.msk [vmem:[#allocation3 + $0x58] sm:$0xff] %vm516, %v443
      %529 = vst.msk [vmem:[#allocation3 + $0x60] sm:$0xff] %vm516, %v445
      %530 = vst.msk [vmem:[#allocation3 + $0x68] sm:$0xff] %vm516, %v447
      %531 = vst.msk [vmem:[#allocation3 + $0x70] sm:$0xff] %vm516, %v449
      %532 = vst.msk [vmem:[#allocation3 + $0x78] sm:$0xff] %vm516, %v451
      %533 = vst.msk [vmem:[#allocation3 + $0x80] sm:$0xff] %vm516, %v453
      %534 = vst.msk [vmem:[#allocation3 + $0x88] sm:$0xff] %vm516, %v455
      %535 = vst.msk [vmem:[#allocation3 + $0x90] sm:$0xff] %vm516, %v457
      %536 = vst.msk [vmem:[#allocation3 + $0x98] sm:$0xff] %vm516, %v459
      %537 = vst.msk [vmem:[#allocation3 + $0xa0] sm:$0xff] %vm516, %v461
      %538 = vst.msk [vmem:[#allocation3 + $0xa8] sm:$0xff] %vm516, %v463
      %539 = vst.msk [vmem:[#allocation3 + $0xb0] sm:$0xff] %vm516, %v465
      %540 = vst.msk [vmem:[#allocation3 + $0xb8] sm:$0xff] %vm516, %v467
      %541 = vst.msk [vmem:[#allocation3 + $0xc0] sm:$0xff] %vm516, %v469
      %542 = vst.msk [vmem:[#allocation3 + $0xc8] sm:$0xff] %vm516, %v471
      %543 = vst.msk [vmem:[#allocation3 + $0xd0] sm:$0xff] %vm516, %v473
      %544 = vst.msk [vmem:[#allocation3 + $0xd8] sm:$0xff] %vm516, %v475
      %545 = vst.msk [vmem:[#allocation3 + $0xe0] sm:$0xff] %vm516, %v477
      %546 = vst.msk [vmem:[#allocation3 + $0xe8] sm:$0xff] %vm516, %v479
      %547 = vst.msk [vmem:[#allocation3 + $0xf0] sm:$0xff] %vm516, %v481
      %548 = vst.msk [vmem:[#allocation3 + $0xf8] sm:$0xff] %vm516, %v483
      %v549 = vld [vmem:[#allocation2 + $0x2] sm:$0xff]
      %v550 = vld [vmem:[#allocation2 + $0xa] sm:$0xff]
      %v551 = vld [vmem:[#allocation2 + $0x1a] sm:$0xff]
      %v552 = vld [vmem:[#allocation2 + $0x22] sm:$0xff]
      %v553 = vld [vmem:[#allocation2 + $0x32] sm:$0xff]
      %v554 = vld [vmem:[#allocation2 + $0x3a] sm:$0xff]
      %v555 = vld [vmem:[#allocation2 + $0x4a] sm:$0xff]
      %v556 = vld [vmem:[#allocation2 + $0x52] sm:$0xff]
      %v557 = vld [vmem:[#allocation2 + $0x62] sm:$0xff]
      %v558 = vld [vmem:[#allocation2 + $0x6a] sm:$0xff]
      %v559 = vld [vmem:[#allocation2 + $0x7a] sm:$0xff]
      %v560 = vld [vmem:[#allocation2 + $0x82] sm:$0xff]
      %v561 = vld [vmem:[#allocation2 + $0x92] sm:$0xff]
      %v562 = vld [vmem:[#allocation2 + $0x9a] sm:$0xff]
      %v563 = vld [vmem:[#allocation2 + $0xaa] sm:$0xff]
      %v564 = vld [vmem:[#allocation2 + $0xb2] sm:$0xff]
      %v565 = vld [vmem:[#allocation2 + $0xc2] sm:$0xff]
      %v566 = vld [vmem:[#allocation2 + $0xca] sm:$0xff]
      %v567 = vld [vmem:[#allocation2 + $0xda] sm:$0xff]
      %v568 = vld [vmem:[#allocation2 + $0xe2] sm:$0xff]
      %v569 = vld [vmem:[#allocation2 + $0xf2] sm:$0xff]
      %v570 = vld [vmem:[#allocation2 + $0xfa] sm:$0xff]
      %v571 = vld [vmem:[#allocation2 + $0x10a] sm:$0xff]
      %v572 = vld [vmem:[#allocation2 + $0x112] sm:$0xff]
      %v573 = vld [vmem:[#allocation2 + $0x122] sm:$0xff]
      %v574 = vld [vmem:[#allocation2 + $0x12a] sm:$0xff]
      %v575 = vld [vmem:[#allocation2 + $0x13a] sm:$0xff]
      %v576 = vld [vmem:[#allocation2 + $0x142] sm:$0xff]
      %v577 = vld [vmem:[#allocation2 + $0x152] sm:$0xff]
      %v578 = vld [vmem:[#allocation2 + $0x15a] sm:$0xff]
      %v579 = vld [vmem:[#allocation2 + $0x16a] sm:$0xff]
      %v580 = vld [vmem:[#allocation2 + $0x172] sm:$0xff]
      %613 = vrot.lane.b32.xlu0 %v549, 8
      %v614 = vpop.permute.xlu0 %613
      %615 = vrot.lane.b32.xlu0 %v550, 8
      %v616 = vpop.permute.xlu0 %615
      %617 = vrot.lane.b32.xlu0 %v551, 8
      %v618 = vpop.permute.xlu0 %617
      %619 = vrot.lane.b32.xlu0 %v552, 8
      %v620 = vpop.permute.xlu0 %619
      %621 = vrot.lane.b32.xlu0 %v553, 8
      %v622 = vpop.permute.xlu0 %621
      %623 = vrot.lane.b32.xlu0 %v554, 8
      %v624 = vpop.permute.xlu0 %623
      %625 = vrot.lane.b32.xlu0 %v555, 8
      %v626 = vpop.permute.xlu0 %625
      %627 = vrot.lane.b32.xlu0 %v556, 8
      %v628 = vpop.permute.xlu0 %627
      %629 = vrot.lane.b32.xlu0 %v557, 8
      %v630 = vpop.permute.xlu0 %629
      %631 = vrot.lane.b32.xlu0 %v558, 8
      %v632 = vpop.permute.xlu0 %631
      %633 = vrot.lane.b32.xlu0 %v559, 8
      %v634 = vpop.permute.xlu0 %633
      %635 = vrot.lane.b32.xlu0 %v560, 8
      %v636 = vpop.permute.xlu0 %635
      %637 = vrot.lane.b32.xlu0 %v561, 8
      %v638 = vpop.permute.xlu0 %637
      %639 = vrot.lane.b32.xlu0 %v562, 8
      %v640 = vpop.permute.xlu0 %639
      %641 = vrot.lane.b32.xlu0 %v563, 8
      %v642 = vpop.permute.xlu0 %641
      %643 = vrot.lane.b32.xlu0 %v564, 8
      %v644 = vpop.permute.xlu0 %643
      %645 = vrot.lane.b32.xlu0 %v565, 8
      %v646 = vpop.permute.xlu0 %645
      %647 = vrot.lane.b32.xlu0 %v566, 8
      %v648 = vpop.permute.xlu0 %647
      %649 = vrot.lane.b32.xlu0 %v567, 8
      %v650 = vpop.permute.xlu0 %649
      %651 = vrot.lane.b32.xlu0 %v568, 8
      %v652 = vpop.permute.xlu0 %651
      %653 = vrot.lane.b32.xlu0 %v569, 8
      %v654 = vpop.permute.xlu0 %653
      %655 = vrot.lane.b32.xlu0 %v570, 8
      %v656 = vpop.permute.xlu0 %655
      %657 = vrot.lane.b32.xlu0 %v571, 8
      %v658 = vpop.permute.xlu0 %657
      %659 = vrot.lane.b32.xlu0 %v572, 8
      %v660 = vpop.permute.xlu0 %659
      %661 = vrot.lane.b32.xlu0 %v573, 8
      %v662 = vpop.permute.xlu0 %661
      %663 = vrot.lane.b32.xlu0 %v574, 8
      %v664 = vpop.permute.xlu0 %663
      %665 = vrot.lane.b32.xlu0 %v575, 8
      %v666 = vpop.permute.xlu0 %665
      %667 = vrot.lane.b32.xlu0 %v576, 8
      %v668 = vpop.permute.xlu0 %667
      %669 = vrot.lane.b32.xlu0 %v577, 8
      %v670 = vpop.permute.xlu0 %669
      %671 = vrot.lane.b32.xlu0 %v578, 8
      %v672 = vpop.permute.xlu0 %671
      %673 = vrot.lane.b32.xlu0 %v579, 8
      %v674 = vpop.permute.xlu0 %673
      %675 = vrot.lane.b32.xlu0 %v580, 8
      %v676 = vpop.permute.xlu0 %675
      %vm709 = vcmask 97344
      %710 = vst.msk [vmem:[#allocation3] sm:$0xff] %vm709, %v614
      %711 = vst.msk [vmem:[#allocation3 + $0x8] sm:$0xff] %vm709, %v616
      %712 = vst.msk [vmem:[#allocation3 + $0x10] sm:$0xff] %vm709, %v618
      %713 = vst.msk [vmem:[#allocation3 + $0x18] sm:$0xff] %vm709, %v620
      %714 = vst.msk [vmem:[#allocation3 + $0x20] sm:$0xff] %vm709, %v622
      %715 = vst.msk [vmem:[#allocation3 + $0x28] sm:$0xff] %vm709, %v624
      %716 = vst.msk [vmem:[#allocation3 + $0x30] sm:$0xff] %vm709, %v626
      %717 = vst.msk [vmem:[#allocation3 + $0x38] sm:$0xff] %vm709, %v628
      %718 = vst.msk [vmem:[#allocation3 + $0x40] sm:$0xff] %vm709, %v630
      %719 = vst.msk [vmem:[#allocation3 + $0x48] sm:$0xff] %vm709, %v632
      %720 = vst.msk [vmem:[#allocation3 + $0x50] sm:$0xff] %vm709, %v634
      %721 = vst.msk [vmem:[#allocation3 + $0x58] sm:$0xff] %vm709, %v636
      %722 = vst.msk [vmem:[#allocation3 + $0x60] sm:$0xff] %vm709, %v638
      %723 = vst.msk [vmem:[#allocation3 + $0x68] sm:$0xff] %vm709, %v640
      %724 = vst.msk [vmem:[#allocation3 + $0x70] sm:$0xff] %vm709, %v642
      %725 = vst.msk [vmem:[#allocation3 + $0x78] sm:$0xff] %vm709, %v644
      %726 = vst.msk [vmem:[#allocation3 + $0x80] sm:$0xff] %vm709, %v646
      %727 = vst.msk [vmem:[#allocation3 + $0x88] sm:$0xff] %vm709, %v648
      %728 = vst.msk [vmem:[#allocation3 + $0x90] sm:$0xff] %vm709, %v650
      %729 = vst.msk [vmem:[#allocation3 + $0x98] sm:$0xff] %vm709, %v652
      %730 = vst.msk [vmem:[#allocation3 + $0xa0] sm:$0xff] %vm709, %v654
      %731 = vst.msk [vmem:[#allocation3 + $0xa8] sm:$0xff] %vm709, %v656
      %732 = vst.msk [vmem:[#allocation3 + $0xb0] sm:$0xff] %vm709, %v658
      %733 = vst.msk [vmem:[#allocation3 + $0xb8] sm:$0xff] %vm709, %v660
      %734 = vst.msk [vmem:[#allocation3 + $0xc0] sm:$0xff] %vm709, %v662
      %735 = vst.msk [vmem:[#allocation3 + $0xc8] sm:$0xff] %vm709, %v664
      %736 = vst.msk [vmem:[#allocation3 + $0xd0] sm:$0xff] %vm709, %v666
      %737 = vst.msk [vmem:[#allocation3 + $0xd8] sm:$0xff] %vm709, %v668
      %738 = vst.msk [vmem:[#allocation3 + $0xe0] sm:$0xff] %vm709, %v670
      %739 = vst.msk [vmem:[#allocation3 + $0xe8] sm:$0xff] %vm709, %v672
      %740 = vst.msk [vmem:[#allocation3 + $0xf0] sm:$0xff] %vm709, %v674
      %741 = vst.msk [vmem:[#allocation3 + $0xf8] sm:$0xff] %vm709, %v676
      %v742 = vld [vmem:[%s259] sm:$0xff]
      %v743 = vld [vmem:[%s259 + $0x8] sm:$0xff]
      %v744 = vld [vmem:[%s259 + $0x18] sm:$0xff]
      %v745 = vld [vmem:[%s259 + $0x20] sm:$0xff]
      %v746 = vld [vmem:[%s259 + $0x30] sm:$0xff]
      %v747 = vld [vmem:[%s259 + $0x38] sm:$0xff]
      %v748 = vld [vmem:[%s259 + $0x48] sm:$0xff]
      %v749 = vld [vmem:[%s259 + $0x50] sm:$0xff]
      %v750 = vld [vmem:[%s259 + $0x60] sm:$0xff]
      %v751 = vld [vmem:[%s259 + $0x68] sm:$0xff]
      %v752 = vld [vmem:[%s259 + $0x78] sm:$0xff]
      %v753 = vld [vmem:[%s259 + $0x80] sm:$0xff]
      %v754 = vld [vmem:[%s259 + $0x90] sm:$0xff]
      %v755 = vld [vmem:[%s259 + $0x98] sm:$0xff]
      %v756 = vld [vmem:[%s259 + $0xa8] sm:$0xff]
      %v757 = vld [vmem:[%s259 + $0xb0] sm:$0xff]
      %v758 = vld [vmem:[%s259 + $0xc0] sm:$0xff]
      %v759 = vld [vmem:[%s259 + $0xc8] sm:$0xff]
      %v760 = vld [vmem:[%s259 + $0xd8] sm:$0xff]
      %v761 = vld [vmem:[%s259 + $0xe0] sm:$0xff]
      %v762 = vld [vmem:[%s259 + $0xf0] sm:$0xff]
      %v763 = vld [vmem:[%s259 + $0xf8] sm:$0xff]
      %v764 = vld [vmem:[%s259 + $0x108] sm:$0xff]
      %v765 = vld [vmem:[%s259 + $0x110] sm:$0xff]
      %v766 = vld [vmem:[%s259 + $0x120] sm:$0xff]
      %v767 = vld [vmem:[%s259 + $0x128] sm:$0xff]
      %v768 = vld [vmem:[%s259 + $0x138] sm:$0xff]
      %v769 = vld [vmem:[%s259 + $0x140] sm:$0xff]
      %v770 = vld [vmem:[%s259 + $0x150] sm:$0xff]
      %v771 = vld [vmem:[%s259 + $0x158] sm:$0xff]
      %v772 = vld [vmem:[%s259 + $0x168] sm:$0xff]
      %v773 = vld [vmem:[%s259 + $0x170] sm:$0xff]
      %806 = vrot.lane.b32.xlu0 %v742, 12
      %v807 = vpop.permute.xlu0 %806
      %808 = vrot.lane.b32.xlu0 %v743, 12
      %v809 = vpop.permute.xlu0 %808
      %810 = vrot.lane.b32.xlu0 %v744, 12
      %v811 = vpop.permute.xlu0 %810
      %812 = vrot.lane.b32.xlu0 %v745, 12
      %v813 = vpop.permute.xlu0 %812
      %814 = vrot.lane.b32.xlu0 %v746, 12
      %v815 = vpop.permute.xlu0 %814
      %816 = vrot.lane.b32.xlu0 %v747, 12
      %v817 = vpop.permute.xlu0 %816
      %818 = vrot.lane.b32.xlu0 %v748, 12
      %v819 = vpop.permute.xlu0 %818
      %820 = vrot.lane.b32.xlu0 %v749, 12
      %v821 = vpop.permute.xlu0 %820
      %822 = vrot.lane.b32.xlu0 %v750, 12
      %v823 = vpop.permute.xlu0 %822
      %824 = vrot.lane.b32.xlu0 %v751, 12
      %v825 = vpop.permute.xlu0 %824
      %826 = vrot.lane.b32.xlu0 %v752, 12
      %v827 = vpop.permute.xlu0 %826
      %828 = vrot.lane.b32.xlu0 %v753, 12
      %v829 = vpop.permute.xlu0 %828
      %830 = vrot.lane.b32.xlu0 %v754, 12
      %v831 = vpop.permute.xlu0 %830
      %832 = vrot.lane.b32.xlu0 %v755, 12
      %v833 = vpop.permute.xlu0 %832
      %834 = vrot.lane.b32.xlu0 %v756, 12
      %v835 = vpop.permute.xlu0 %834
      %836 = vrot.lane.b32.xlu0 %v757, 12
      %v837 = vpop.permute.xlu0 %836
      %838 = vrot.lane.b32.xlu0 %v758, 12
      %v839 = vpop.permute.xlu0 %838
      %840 = vrot.lane.b32.xlu0 %v759, 12
      %v841 = vpop.permute.xlu0 %840
      %842 = vrot.lane.b32.xlu0 %v760, 12
      %v843 = vpop.permute.xlu0 %842
      %844 = vrot.lane.b32.xlu0 %v761, 12
      %v845 = vpop.permute.xlu0 %844
      %846 = vrot.lane.b32.xlu0 %v762, 12
      %v847 = vpop.permute.xlu0 %846
      %848 = vrot.lane.b32.xlu0 %v763, 12
      %v849 = vpop.permute.xlu0 %848
      %850 = vrot.lane.b32.xlu0 %v764, 12
      %v851 = vpop.permute.xlu0 %850
      %852 = vrot.lane.b32.xlu0 %v765, 12
      %v853 = vpop.permute.xlu0 %852
      %854 = vrot.lane.b32.xlu0 %v766, 12
      %v855 = vpop.permute.xlu0 %854
      %856 = vrot.lane.b32.xlu0 %v767, 12
      %v857 = vpop.permute.xlu0 %856
      %858 = vrot.lane.b32.xlu0 %v768, 12
      %v859 = vpop.permute.xlu0 %858
      %860 = vrot.lane.b32.xlu0 %v769, 12
      %v861 = vpop.permute.xlu0 %860
      %862 = vrot.lane.b32.xlu0 %v770, 12
      %v863 = vpop.permute.xlu0 %862
      %864 = vrot.lane.b32.xlu0 %v771, 12
      %v865 = vpop.permute.xlu0 %864
      %866 = vrot.lane.b32.xlu0 %v772, 12
      %v867 = vpop.permute.xlu0 %866
      %868 = vrot.lane.b32.xlu0 %v773, 12
      %v869 = vpop.permute.xlu0 %868
      %vm902 = vcmask 130144
      %903 = vst.msk [vmem:[#allocation3] sm:$0xff] %vm902, %v807
      %904 = vst.msk [vmem:[#allocation3 + $0x8] sm:$0xff] %vm902, %v809
      %905 = vst.msk [vmem:[#allocation3 + $0x10] sm:$0xff] %vm902, %v811
      %906 = vst.msk [vmem:[#allocation3 + $0x18] sm:$0xff] %vm902, %v813
      %907 = vst.msk [vmem:[#allocation3 + $0x20] sm:$0xff] %vm902, %v815
      %908 = vst.msk [vmem:[#allocation3 + $0x28] sm:$0xff] %vm902, %v817
      %909 = vst.msk [vmem:[#allocation3 + $0x30] sm:$0xff] %vm902, %v819
      %910 = vst.msk [vmem:[#allocation3 + $0x38] sm:$0xff] %vm902, %v821
      %911 = vst.msk [vmem:[#allocation3 + $0x40] sm:$0xff] %vm902, %v823
      %912 = vst.msk [vmem:[#allocation3 + $0x48] sm:$0xff] %vm902, %v825
      %913 = vst.msk [vmem:[#allocation3 + $0x50] sm:$0xff] %vm902, %v827
      %914 = vst.msk [vmem:[#allocation3 + $0x58] sm:$0xff] %vm902, %v829
      %915 = vst.msk [vmem:[#allocation3 + $0x60] sm:$0xff] %vm902, %v831
      %916 = vst.msk [vmem:[#allocation3 + $0x68] sm:$0xff] %vm902, %v833
      %917 = vst.msk [vmem:[#allocation3 + $0x70] sm:$0xff] %vm902, %v835
      %918 = vst.msk [vmem:[#allocation3 + $0x78] sm:$0xff] %vm902, %v837
      %919 = vst.msk [vmem:[#allocation3 + $0x80] sm:$0xff] %vm902, %v839
      %920 = vst.msk [vmem:[#allocation3 + $0x88] sm:$0xff] %vm902, %v841
      %921 = vst.msk [vmem:[#allocation3 + $0x90] sm:$0xff] %vm902, %v843
      %922 = vst.msk [vmem:[#allocation3 + $0x98] sm:$0xff] %vm902, %v845
      %923 = vst.msk [vmem:[#allocation3 + $0xa0] sm:$0xff] %vm902, %v847
      %924 = vst.msk [vmem:[#allocation3 + $0xa8] sm:$0xff] %vm902, %v849
      %925 = vst.msk [vmem:[#allocation3 + $0xb0] sm:$0xff] %vm902, %v851
      %926 = vst.msk [vmem:[#allocation3 + $0xb8] sm:$0xff] %vm902, %v853
      %927 = vst.msk [vmem:[#allocation3 + $0xc0] sm:$0xff] %vm902, %v855
      %928 = vst.msk [vmem:[#allocation3 + $0xc8] sm:$0xff] %vm902, %v857
      %929 = vst.msk [vmem:[#allocation3 + $0xd0] sm:$0xff] %vm902, %v859
      %930 = vst.msk [vmem:[#allocation3 + $0xd8] sm:$0xff] %vm902, %v861
      %931 = vst.msk [vmem:[#allocation3 + $0xe0] sm:$0xff] %vm902, %v863
      %932 = vst.msk [vmem:[#allocation3 + $0xe8] sm:$0xff] %vm902, %v865
      %933 = vst.msk [vmem:[#allocation3 + $0xf0] sm:$0xff] %vm902, %v867
      %934 = vst.msk [vmem:[#allocation3 + $0xf8] sm:$0xff] %vm902, %v869
      %v935 = vld [vmem:[%s259 + $0x1] sm:$0xff]
      %v936 = vld [vmem:[%s259 + $0x9] sm:$0xff]
      %v937 = vld [vmem:[%s259 + $0x19] sm:$0xff]
      %v938 = vld [vmem:[%s259 + $0x21] sm:$0xff]
      %v939 = vld [vmem:[%s259 + $0x31] sm:$0xff]
      %v940 = vld [vmem:[%s259 + $0x39] sm:$0xff]
      %v941 = vld [vmem:[%s259 + $0x49] sm:$0xff]
      %v942 = vld [vmem:[%s259 + $0x51] sm:$0xff]
      %v943 = vld [vmem:[%s259 + $0x61] sm:$0xff]
      %v944 = vld [vmem:[%s259 + $0x69] sm:$0xff]
      %v945 = vld [vmem:[%s259 + $0x79] sm:$0xff]
      %v946 = vld [vmem:[%s259 + $0x81] sm:$0xff]
      %v947 = vld [vmem:[%s259 + $0x91] sm:$0xff]
      %v948 = vld [vmem:[%s259 + $0x99] sm:$0xff]
      %v949 = vld [vmem:[%s259 + $0xa9] sm:$0xff]
      %v950 = vld [vmem:[%s259 + $0xb1] sm:$0xff]
      %v951 = vld [vmem:[%s259 + $0xc1] sm:$0xff]
      %v952 = vld [vmem:[%s259 + $0xc9] sm:$0xff]
      %v953 = vld [vmem:[%s259 + $0xd9] sm:$0xff]
      %v954 = vld [vmem:[%s259 + $0xe1] sm:$0xff]
      %v955 = vld [vmem:[%s259 + $0xf1] sm:$0xff]
      %v956 = vld [vmem:[%s259 + $0xf9] sm:$0xff]
      %v957 = vld [vmem:[%s259 + $0x109] sm:$0xff]
      %v958 = vld [vmem:[%s259 + $0x111] sm:$0xff]
      %v959 = vld [vmem:[%s259 + $0x121] sm:$0xff]
      %v960 = vld [vmem:[%s259 + $0x129] sm:$0xff]
      %v961 = vld [vmem:[%s259 + $0x139] sm:$0xff]
      %v962 = vld [vmem:[%s259 + $0x141] sm:$0xff]
      %v963 = vld [vmem:[%s259 + $0x151] sm:$0xff]
      %v964 = vld [vmem:[%s259 + $0x159] sm:$0xff]
      %v965 = vld [vmem:[%s259 + $0x169] sm:$0xff]
      %v966 = vld [vmem:[%s259 + $0x171] sm:$0xff]
      %999 = vrot.lane.b32.xlu0 %v935, 16
      %v1000 = vpop.permute.xlu0 %999
      %1001 = vrot.lane.b32.xlu0 %v936, 16
      %v1002 = vpop.permute.xlu0 %1001
      %1003 = vrot.lane.b32.xlu0 %v937, 16
      %v1004 = vpop.permute.xlu0 %1003
      %1005 = vrot.lane.b32.xlu0 %v938, 16
      %v1006 = vpop.permute.xlu0 %1005
      %1007 = vrot.lane.b32.xlu0 %v939, 16
      %v1008 = vpop.permute.xlu0 %1007
      %1009 = vrot.lane.b32.xlu0 %v940, 16
      %v1010 = vpop.permute.xlu0 %1009
      %1011 = vrot.lane.b32.xlu0 %v941, 16
      %v1012 = vpop.permute.xlu0 %1011
      %1013 = vrot.lane.b32.xlu0 %v942, 16
      %v1014 = vpop.permute.xlu0 %1013
      %1015 = vrot.lane.b32.xlu0 %v943, 16
      %v1016 = vpop.permute.xlu0 %1015
      %1017 = vrot.lane.b32.xlu0 %v944, 16
      %v1018 = vpop.permute.xlu0 %1017
      %1019 = vrot.lane.b32.xlu0 %v945, 16
      %v1020 = vpop.permute.xlu0 %1019
      %1021 = vrot.lane.b32.xlu0 %v946, 16
      %v1022 = vpop.permute.xlu0 %1021
      %1023 = vrot.lane.b32.xlu0 %v947, 16
      %v1024 = vpop.permute.xlu0 %1023
      %1025 = vrot.lane.b32.xlu0 %v948, 16
      %v1026 = vpop.permute.xlu0 %1025
      %1027 = vrot.lane.b32.xlu0 %v949, 16
      %v1028 = vpop.permute.xlu0 %1027
      %1029 = vrot.lane.b32.xlu0 %v950, 16
      %v1030 = vpop.permute.xlu0 %1029
      %1031 = vrot.lane.b32.xlu0 %v951, 16
      %v1032 = vpop.permute.xlu0 %1031
      %1033 = vrot.lane.b32.xlu0 %v952, 16
      %v1034 = vpop.permute.xlu0 %1033
      %1035 = vrot.lane.b32.xlu0 %v953, 16
      %v1036 = vpop.permute.xlu0 %1035
      %1037 = vrot.lane.b32.xlu0 %v954, 16
      %v1038 = vpop.permute.xlu0 %1037
      %1039 = vrot.lane.b32.xlu0 %v955, 16
      %v1040 = vpop.permute.xlu0 %1039
      %1041 = vrot.lane.b32.xlu0 %v956, 16
      %v1042 = vpop.permute.xlu0 %1041
      %1043 = vrot.lane.b32.xlu0 %v957, 16
      %v1044 = vpop.permute.xlu0 %1043
      %1045 = vrot.lane.b32.xlu0 %v958, 16
      %v1046 = vpop.permute.xlu0 %1045
      %1047 = vrot.lane.b32.xlu0 %v959, 16
      %v1048 = vpop.permute.xlu0 %1047
      %1049 = vrot.lane.b32.xlu0 %v960, 16
      %v1050 = vpop.permute.xlu0 %1049
      %1051 = vrot.lane.b32.xlu0 %v961, 16
      %v1052 = vpop.permute.xlu0 %1051
      %1053 = vrot.lane.b32.xlu0 %v962, 16
      %v1054 = vpop.permute.xlu0 %1053
      %1055 = vrot.lane.b32.xlu0 %v963, 16
      %v1056 = vpop.permute.xlu0 %1055
      %1057 = vrot.lane.b32.xlu0 %v964, 16
      %v1058 = vpop.permute.xlu0 %1057
      %1059 = vrot.lane.b32.xlu0 %v965, 16
      %v1060 = vpop.permute.xlu0 %1059
      %1061 = vrot.lane.b32.xlu0 %v966, 16
      %v1062 = vpop.permute.xlu0 %1061
      %vm1095 = vcmask 162944
      %1096 = vst.msk [vmem:[#allocation3] sm:$0xff] %vm1095, %v1000
      %1097 = vst.msk [vmem:[#allocation3 + $0x8] sm:$0xff] %vm1095, %v1002
      %1098 = vst.msk [vmem:[#allocation3 + $0x10] sm:$0xff] %vm1095, %v1004
      %1099 = vst.msk [vmem:[#allocation3 + $0x18] sm:$0xff] %vm1095, %v1006
      %1100 = vst.msk [vmem:[#allocation3 + $0x20] sm:$0xff] %vm1095, %v1008
      %1101 = vst.msk [vmem:[#allocation3 + $0x28] sm:$0xff] %vm1095, %v1010
      %1102 = vst.msk [vmem:[#allocation3 + $0x30] sm:$0xff] %vm1095, %v1012
      %1103 = vst.msk [vmem:[#allocation3 + $0x38] sm:$0xff] %vm1095, %v1014
      %1104 = vst.msk [vmem:[#allocation3 + $0x40] sm:$0xff] %vm1095, %v1016
      %1105 = vst.msk [vmem:[#allocation3 + $0x48] sm:$0xff] %vm1095, %v1018
      %1106 = vst.msk [vmem:[#allocation3 + $0x50] sm:$0xff] %vm1095, %v1020
      %1107 = vst.msk [vmem:[#allocation3 + $0x58] sm:$0xff] %vm1095, %v1022
      %1108 = vst.msk [vmem:[#allocation3 + $0x60] sm:$0xff] %vm1095, %v1024
      %1109 = vst.msk [vmem:[#allocation3 + $0x68] sm:$0xff] %vm1095, %v1026
      %1110 = vst.msk [vmem:[#allocation3 + $0x70] sm:$0xff] %vm1095, %v1028
      %1111 = vst.msk [vmem:[#allocation3 + $0x78] sm:$0xff] %vm1095, %v1030
      %1112 = vst.msk [vmem:[#allocation3 + $0x80] sm:$0xff] %vm1095, %v1032
      %1113 = vst.msk [vmem:[#allocation3 + $0x88] sm:$0xff] %vm1095, %v1034
      %1114 = vst.msk [vmem:[#allocation3 + $0x90] sm:$0xff] %vm1095, %v1036
      %1115 = vst.msk [vmem:[#allocation3 + $0x98] sm:$0xff] %vm1095, %v1038
      %1116 = vst.msk [vmem:[#allocation3 + $0xa0] sm:$0xff] %vm1095, %v1040
      %1117 = vst.msk [vmem:[#allocation3 + $0xa8] sm:$0xff] %vm1095, %v1042
      %1118 = vst.msk [vmem:[#allocation3 + $0xb0] sm:$0xff] %vm1095, %v1044
      %1119 = vst.msk [vmem:[#allocation3 + $0xb8] sm:$0xff] %vm1095, %v1046
      %1120 = vst.msk [vmem:[#allocation3 + $0xc0] sm:$0xff] %vm1095, %v1048
      %1121 = vst.msk [vmem:[#allocation3 + $0xc8] sm:$0xff] %vm1095, %v1050
      %1122 = vst.msk [vmem:[#allocation3 + $0xd0] sm:$0xff] %vm1095, %v1052
      %1123 = vst.msk [vmem:[#allocation3 + $0xd8] sm:$0xff] %vm1095, %v1054
      %1124 = vst.msk [vmem:[#allocation3 + $0xe0] sm:$0xff] %vm1095, %v1056
      %1125 = vst.msk [vmem:[#allocation3 + $0xe8] sm:$0xff] %vm1095, %v1058
      %1126 = vst.msk [vmem:[#allocation3 + $0xf0] sm:$0xff] %vm1095, %v1060
      %1127 = vst.msk [vmem:[#allocation3 + $0xf8] sm:$0xff] %vm1095, %v1062
      %v1128 = vld [vmem:[%s259 + $0x2] sm:$0xff]
      %v1129 = vld [vmem:[%s259 + $0xa] sm:$0xff]
      %v1130 = vld [vmem:[%s259 + $0x1a] sm:$0xff]
      %v1131 = vld [vmem:[%s259 + $0x22] sm:$0xff]
      %v1132 = vld [vmem:[%s259 + $0x32] sm:$0xff]
      %v1133 = vld [vmem:[%s259 + $0x3a] sm:$0xff]
      %v1134 = vld [vmem:[%s259 + $0x4a] sm:$0xff]
      %v1135 = vld [vmem:[%s259 + $0x52] sm:$0xff]
      %v1136 = vld [vmem:[%s259 + $0x62] sm:$0xff]
      %v1137 = vld [vmem:[%s259 + $0x6a] sm:$0xff]
      %v1138 = vld [vmem:[%s259 + $0x7a] sm:$0xff]
      %v1139 = vld [vmem:[%s259 + $0x82] sm:$0xff]
      %v1140 = vld [vmem:[%s259 + $0x92] sm:$0xff]
      %v1141 = vld [vmem:[%s259 + $0x9a] sm:$0xff]
      %v1142 = vld [vmem:[%s259 + $0xaa] sm:$0xff]
      %v1143 = vld [vmem:[%s259 + $0xb2] sm:$0xff]
      %v1144 = vld [vmem:[%s259 + $0xc2] sm:$0xff]
      %v1145 = vld [vmem:[%s259 + $0xca] sm:$0xff]
      %v1146 = vld [vmem:[%s259 + $0xda] sm:$0xff]
      %v1147 = vld [vmem:[%s259 + $0xe2] sm:$0xff]
      %v1148 = vld [vmem:[%s259 + $0xf2] sm:$0xff]
      %v1149 = vld [vmem:[%s259 + $0xfa] sm:$0xff]
      %v1150 = vld [vmem:[%s259 + $0x10a] sm:$0xff]
      %v1151 = vld [vmem:[%s259 + $0x112] sm:$0xff]
      %v1152 = vld [vmem:[%s259 + $0x122] sm:$0xff]
      %v1153 = vld [vmem:[%s259 + $0x12a] sm:$0xff]
      %v1154 = vld [vmem:[%s259 + $0x13a] sm:$0xff]
      %v1155 = vld [vmem:[%s259 + $0x142] sm:$0xff]
      %v1156 = vld [vmem:[%s259 + $0x152] sm:$0xff]
      %v1157 = vld [vmem:[%s259 + $0x15a] sm:$0xff]
      %v1158 = vld [vmem:[%s259 + $0x16a] sm:$0xff]
      %v1159 = vld [vmem:[%s259 + $0x172] sm:$0xff]
      %1192 = vrot.lane.b32.xlu0 %v1128, 20
      %v1193 = vpop.permute.xlu0 %1192
      %1194 = vrot.lane.b32.xlu0 %v1129, 20
      %v1195 = vpop.permute.xlu0 %1194
      %1196 = vrot.lane.b32.xlu0 %v1130, 20
      %v1197 = vpop.permute.xlu0 %1196
      %1198 = vrot.lane.b32.xlu0 %v1131, 20
      %v1199 = vpop.permute.xlu0 %1198
      %1200 = vrot.lane.b32.xlu0 %v1132, 20
      %v1201 = vpop.permute.xlu0 %1200
      %1202 = vrot.lane.b32.xlu0 %v1133, 20
      %v1203 = vpop.permute.xlu0 %1202
      %1204 = vrot.lane.b32.xlu0 %v1134, 20
      %v1205 = vpop.permute.xlu0 %1204
      %1206 = vrot.lane.b32.xlu0 %v1135, 20
      %v1207 = vpop.permute.xlu0 %1206
      %1208 = vrot.lane.b32.xlu0 %v1136, 20
      %v1209 = vpop.permute.xlu0 %1208
      %1210 = vrot.lane.b32.xlu0 %v1137, 20
      %v1211 = vpop.permute.xlu0 %1210
      %1212 = vrot.lane.b32.xlu0 %v1138, 20
      %v1213 = vpop.permute.xlu0 %1212
      %1214 = vrot.lane.b32.xlu0 %v1139, 20
      %v1215 = vpop.permute.xlu0 %1214
      %1216 = vrot.lane.b32.xlu0 %v1140, 20
      %v1217 = vpop.permute.xlu0 %1216
      %1218 = vrot.lane.b32.xlu0 %v1141, 20
      %v1219 = vpop.permute.xlu0 %1218
      %1220 = vrot.lane.b32.xlu0 %v1142, 20
      %v1221 = vpop.permute.xlu0 %1220
      %1222 = vrot.lane.b32.xlu0 %v1143, 20
      %v1223 = vpop.permute.xlu0 %1222
      %1224 = vrot.lane.b32.xlu0 %v1144, 20
      %v1225 = vpop.permute.xlu0 %1224
      %1226 = vrot.lane.b32.xlu0 %v1145, 20
      %v1227 = vpop.permute.xlu0 %1226
      %1228 = vrot.lane.b32.xlu0 %v1146, 20
      %v1229 = vpop.permute.xlu0 %1228
      %1230 = vrot.lane.b32.xlu0 %v1147, 20
      %v1231 = vpop.permute.xlu0 %1230
      %1232 = vrot.lane.b32.xlu0 %v1148, 20
      %v1233 = vpop.permute.xlu0 %1232
      %1234 = vrot.lane.b32.xlu0 %v1149, 20
      %v1235 = vpop.permute.xlu0 %1234
      %1236 = vrot.lane.b32.xlu0 %v1150, 20
      %v1237 = vpop.permute.xlu0 %1236
      %1238 = vrot.lane.b32.xlu0 %v1151, 20
      %v1239 = vpop.permute.xlu0 %1238
      %1240 = vrot.lane.b32.xlu0 %v1152, 20
      %v1241 = vpop.permute.xlu0 %1240
      %1242 = vrot.lane.b32.xlu0 %v1153, 20
      %v1243 = vpop.permute.xlu0 %1242
      %1244 = vrot.lane.b32.xlu0 %v1154, 20
      %v1245 = vpop.permute.xlu0 %1244
      %1246 = vrot.lane.b32.xlu0 %v1155, 20
      %v1247 = vpop.permute.xlu0 %1246
      %1248 = vrot.lane.b32.xlu0 %v1156, 20
      %v1249 = vpop.permute.xlu0 %1248
      %1250 = vrot.lane.b32.xlu0 %v1157, 20
      %v1251 = vpop.permute.xlu0 %1250
      %1252 = vrot.lane.b32.xlu0 %v1158, 20
      %v1253 = vpop.permute.xlu0 %1252
      %1254 = vrot.lane.b32.xlu0 %v1159, 20
      %v1255 = vpop.permute.xlu0 %1254
      %vm1288 = vcmask 195744
      %1289 = vst.msk [vmem:[#allocation3] sm:$0xff] %vm1288, %v1193
      %1290 = vst.msk [vmem:[#allocation3 + $0x8] sm:$0xff] %vm1288, %v1195
      %1291 = vst.msk [vmem:[#allocation3 + $0x10] sm:$0xff] %vm1288, %v1197
      %1292 = vst.msk [vmem:[#allocation3 + $0x18] sm:$0xff] %vm1288, %v1199
      %1293 = vst.msk [vmem:[#allocation3 + $0x20] sm:$0xff] %vm1288, %v1201
      %1294 = vst.msk [vmem:[#allocation3 + $0x28] sm:$0xff] %vm1288, %v1203
      %1295 = vst.msk [vmem:[#allocation3 + $0x30] sm:$0xff] %vm1288, %v1205
      %1296 = vst.msk [vmem:[#allocation3 + $0x38] sm:$0xff] %vm1288, %v1207
      %1297 = vst.msk [vmem:[#allocation3 + $0x40] sm:$0xff] %vm1288, %v1209
      %1298 = vst.msk [vmem:[#allocation3 + $0x48] sm:$0xff] %vm1288, %v1211
      %1299 = vst.msk [vmem:[#allocation3 + $0x50] sm:$0xff] %vm1288, %v1213
      %1300 = vst.msk [vmem:[#allocation3 + $0x58] sm:$0xff] %vm1288, %v1215
      %1301 = vst.msk [vmem:[#allocation3 + $0x60] sm:$0xff] %vm1288, %v1217
      %1302 = vst.msk [vmem:[#allocation3 + $0x68] sm:$0xff] %vm1288, %v1219
      %1303 = vst.msk [vmem:[#allocation3 + $0x70] sm:$0xff] %vm1288, %v1221
      %1304 = vst.msk [vmem:[#allocation3 + $0x78] sm:$0xff] %vm1288, %v1223
      %1305 = vst.msk [vmem:[#allocation3 + $0x80] sm:$0xff] %vm1288, %v1225
      %1306 = vst.msk [vmem:[#allocation3 + $0x88] sm:$0xff] %vm1288, %v1227
      %1307 = vst.msk [vmem:[#allocation3 + $0x90] sm:$0xff] %vm1288, %v1229
      %1308 = vst.msk [vmem:[#allocation3 + $0x98] sm:$0xff] %vm1288, %v1231
      %1309 = vst.msk [vmem:[#allocation3 + $0xa0] sm:$0xff] %vm1288, %v1233
      %1310 = vst.msk [vmem:[#allocation3 + $0xa8] sm:$0xff] %vm1288, %v1235
      %1311 = vst.msk [vmem:[#allocation3 + $0xb0] sm:$0xff] %vm1288, %v1237
      %1312 = vst.msk [vmem:[#allocation3 + $0xb8] sm:$0xff] %vm1288, %v1239
      %1313 = vst.msk [vmem:[#allocation3 + $0xc0] sm:$0xff] %vm1288, %v1241
      %1314 = vst.msk [vmem:[#allocation3 + $0xc8] sm:$0xff] %vm1288, %v1243
      %1315 = vst.msk [vmem:[#allocation3 + $0xd0] sm:$0xff] %vm1288, %v1245
      %1316 = vst.msk [vmem:[#allocation3 + $0xd8] sm:$0xff] %vm1288, %v1247
      %1317 = vst.msk [vmem:[#allocation3 + $0xe0] sm:$0xff] %vm1288, %v1249
      %1318 = vst.msk [vmem:[#allocation3 + $0xe8] sm:$0xff] %vm1288, %v1251
      %1319 = vst.msk [vmem:[#allocation3 + $0xf0] sm:$0xff] %vm1288, %v1253
      %1320 = vst.msk [vmem:[#allocation3 + $0xf8] sm:$0xff] %vm1288, %v1255
      %s1321 = scalar_lea.vmem [#allocation2], 48
      %v1322 = vld [vmem:[%s1321] sm:$0xff]
      %v1323 = vld [vmem:[%s1321 + $0x8] sm:$0xff]
      %v1324 = vld [vmem:[%s1321 + $0x18] sm:$0xff]
      %v1325 = vld [vmem:[%s1321 + $0x20] sm:$0xff]
      %v1326 = vld [vmem:[%s1321 + $0x30] sm:$0xff]
      %v1327 = vld [vmem:[%s1321 + $0x38] sm:$0xff]
      %v1328 = vld [vmem:[%s1321 + $0x48] sm:$0xff]
      %v1329 = vld [vmem:[%s1321 + $0x50] sm:$0xff]
      %v1330 = vld [vmem:[%s1321 + $0x60] sm:$0xff]
      %v1331 = vld [vmem:[%s1321 + $0x68] sm:$0xff]
      %v1332 = vld [vmem:[%s1321 + $0x78] sm:$0xff]
      %v1333 = vld [vmem:[%s1321 + $0x80] sm:$0xff]
      %v1334 = vld [vmem:[%s1321 + $0x90] sm:$0xff]
      %v1335 = vld [vmem:[%s1321 + $0x98] sm:$0xff]
      %v1336 = vld [vmem:[%s1321 + $0xa8] sm:$0xff]
      %v1337 = vld [vmem:[%s1321 + $0xb0] sm:$0xff]
      %v1338 = vld [vmem:[%s1321 + $0xc0] sm:$0xff]
      %v1339 = vld [vmem:[%s1321 + $0xc8] sm:$0xff]
      %v1340 = vld [vmem:[%s1321 + $0xd8] sm:$0xff]
      %v1341 = vld [vmem:[%s1321 + $0xe0] sm:$0xff]
      %v1342 = vld [vmem:[%s1321 + $0xf0] sm:$0xff]
      %v1343 = vld [vmem:[%s1321 + $0xf8] sm:$0xff]
      %v1344 = vld [vmem:[%s1321 + $0x108] sm:$0xff]
      %v1345 = vld [vmem:[%s1321 + $0x110] sm:$0xff]
      %v1346 = vld [vmem:[%s1321 + $0x120] sm:$0xff]
      %v1347 = vld [vmem:[%s1321 + $0x128] sm:$0xff]
      %v1348 = vld [vmem:[%s1321 + $0x138] sm:$0xff]
      %v1349 = vld [vmem:[%s1321 + $0x140] sm:$0xff]
      %v1350 = vld [vmem:[%s1321 + $0x150] sm:$0xff]
      %v1351 = vld [vmem:[%s1321 + $0x158] sm:$0xff]
      %v1352 = vld [vmem:[%s1321 + $0x168] sm:$0xff]
      %v1353 = vld [vmem:[%s1321 + $0x170] sm:$0xff]
      %1386 = vrot.lane.b32.xlu0 %v1322, 24
      %v1387 = vpop.permute.xlu0 %1386
      %1388 = vrot.lane.b32.xlu0 %v1323, 24
      %v1389 = vpop.permute.xlu0 %1388
      %1390 = vrot.lane.b32.xlu0 %v1324, 24
      %v1391 = vpop.permute.xlu0 %1390
      %1392 = vrot.lane.b32.xlu0 %v1325, 24
      %v1393 = vpop.permute.xlu0 %1392
      %1394 = vrot.lane.b32.xlu0 %v1326, 24
      %v1395 = vpop.permute.xlu0 %1394
      %1396 = vrot.lane.b32.xlu0 %v1327, 24
      %v1397 = vpop.permute.xlu0 %1396
      %1398 = vrot.lane.b32.xlu0 %v1328, 24
      %v1399 = vpop.permute.xlu0 %1398
      %1400 = vrot.lane.b32.xlu0 %v1329, 24
      %v1401 = vpop.permute.xlu0 %1400
      %1402 = vrot.lane.b32.xlu0 %v1330, 24
      %v1403 = vpop.permute.xlu0 %1402
      %1404 = vrot.lane.b32.xlu0 %v1331, 24
      %v1405 = vpop.permute.xlu0 %1404
      %1406 = vrot.lane.b32.xlu0 %v1332, 24
      %v1407 = vpop.permute.xlu0 %1406
      %1408 = vrot.lane.b32.xlu0 %v1333, 24
      %v1409 = vpop.permute.xlu0 %1408
      %1410 = vrot.lane.b32.xlu0 %v1334, 24
      %v1411 = vpop.permute.xlu0 %1410
      %1412 = vrot.lane.b32.xlu0 %v1335, 24
      %v1413 = vpop.permute.xlu0 %1412
      %1414 = vrot.lane.b32.xlu0 %v1336, 24
      %v1415 = vpop.permute.xlu0 %1414
      %1416 = vrot.lane.b32.xlu0 %v1337, 24
      %v1417 = vpop.permute.xlu0 %1416
      %1418 = vrot.lane.b32.xlu0 %v1338, 24
      %v1419 = vpop.permute.xlu0 %1418
      %1420 = vrot.lane.b32.xlu0 %v1339, 24
      %v1421 = vpop.permute.xlu0 %1420
      %1422 = vrot.lane.b32.xlu0 %v1340, 24
      %v1423 = vpop.permute.xlu0 %1422
      %1424 = vrot.lane.b32.xlu0 %v1341, 24
      %v1425 = vpop.permute.xlu0 %1424
      %1426 = vrot.lane.b32.xlu0 %v1342, 24
      %v1427 = vpop.permute.xlu0 %1426
      %1428 = vrot.lane.b32.xlu0 %v1343, 24
      %v1429 = vpop.permute.xlu0 %1428
      %1430 = vrot.lane.b32.xlu0 %v1344, 24
      %v1431 = vpop.permute.xlu0 %1430
      %1432 = vrot.lane.b32.xlu0 %v1345, 24
      %v1433 = vpop.permute.xlu0 %1432
      %1434 = vrot.lane.b32.xlu0 %v1346, 24
      %v1435 = vpop.permute.xlu0 %1434
      %1436 = vrot.lane.b32.xlu0 %v1347, 24
      %v1437 = vpop.permute.xlu0 %1436
      %1438 = vrot.lane.b32.xlu0 %v1348, 24
      %v1439 = vpop.permute.xlu0 %1438
      %1440 = vrot.lane.b32.xlu0 %v1349, 24
      %v1441 = vpop.permute.xlu0 %1440
      %1442 = vrot.lane.b32.xlu0 %v1350, 24
      %v1443 = vpop.permute.xlu0 %1442
      %1444 = vrot.lane.b32.xlu0 %v1351, 24
      %v1445 = vpop.permute.xlu0 %1444
      %1446 = vrot.lane.b32.xlu0 %v1352, 24
      %v1447 = vpop.permute.xlu0 %1446
      %1448 = vrot.lane.b32.xlu0 %v1353, 24
      %v1449 = vpop.permute.xlu0 %1448
      %vm1482 = vcmask 228544
      %1483 = vst.msk [vmem:[#allocation3] sm:$0xff] %vm1482, %v1387
      %1484 = vst.msk [vmem:[#allocation3 + $0x8] sm:$0xff] %vm1482, %v1389
      %1485 = vst.msk [vmem:[#allocation3 + $0x10] sm:$0xff] %vm1482, %v1391
      %1486 = vst.msk [vmem:[#allocation3 + $0x18] sm:$0xff] %vm1482, %v1393
      %1487 = vst.msk [vmem:[#allocation3 + $0x20] sm:$0xff] %vm1482, %v1395
      %1488 = vst.msk [vmem:[#allocation3 + $0x28] sm:$0xff] %vm1482, %v1397
      %1489 = vst.msk [vmem:[#allocation3 + $0x30] sm:$0xff] %vm1482, %v1399
      %1490 = vst.msk [vmem:[#allocation3 + $0x38] sm:$0xff] %vm1482, %v1401
      %1491 = vst.msk [vmem:[#allocation3 + $0x40] sm:$0xff] %vm1482, %v1403
      %1492 = vst.msk [vmem:[#allocation3 + $0x48] sm:$0xff] %vm1482, %v1405
      %1493 = vst.msk [vmem:[#allocation3 + $0x50] sm:$0xff] %vm1482, %v1407
      %1494 = vst.msk [vmem:[#allocation3 + $0x58] sm:$0xff] %vm1482, %v1409
      %1495 = vst.msk [vmem:[#allocation3 + $0x60] sm:$0xff] %vm1482, %v1411
      %1496 = vst.msk [vmem:[#allocation3 + $0x68] sm:$0xff] %vm1482, %v1413
      %1497 = vst.msk [vmem:[#allocation3 + $0x70] sm:$0xff] %vm1482, %v1415
      %1498 = vst.msk [vmem:[#allocation3 + $0x78] sm:$0xff] %vm1482, %v1417
      %1499 = vst.msk [vmem:[#allocation3 + $0x80] sm:$0xff] %vm1482, %v1419
      %1500 = vst.msk [vmem:[#allocation3 + $0x88] sm:$0xff] %vm1482, %v1421
      %1501 = vst.msk [vmem:[#allocation3 + $0x90] sm:$0xff] %vm1482, %v1423
      %1502 = vst.msk [vmem:[#allocation3 + $0x98] sm:$0xff] %vm1482, %v1425
      %1503 = vst.msk [vmem:[#allocation3 + $0xa0] sm:$0xff] %vm1482, %v1427
      %1504 = vst.msk [vmem:[#allocation3 + $0xa8] sm:$0xff] %vm1482, %v1429
      %1505 = vst.msk [vmem:[#allocation3 + $0xb0] sm:$0xff] %vm1482, %v1431
      %1506 = vst.msk [vmem:[#allocation3 + $0xb8] sm:$0xff] %vm1482, %v1433
      %1507 = vst.msk [vmem:[#allocation3 + $0xc0] sm:$0xff] %vm1482, %v1435
      %1508 = vst.msk [vmem:[#allocation3 + $0xc8] sm:$0xff] %vm1482, %v1437
      %1509 = vst.msk [vmem:[#allocation3 + $0xd0] sm:$0xff] %vm1482, %v1439
      %1510 = vst.msk [vmem:[#allocation3 + $0xd8] sm:$0xff] %vm1482, %v1441
      %1511 = vst.msk [vmem:[#allocation3 + $0xe0] sm:$0xff] %vm1482, %v1443
      %1512 = vst.msk [vmem:[#allocation3 + $0xe8] sm:$0xff] %vm1482, %v1445
      %1513 = vst.msk [vmem:[#allocation3 + $0xf0] sm:$0xff] %vm1482, %v1447
      %1514 = vst.msk [vmem:[#allocation3 + $0xf8] sm:$0xff] %vm1482, %v1449
      %v1515 = vld [vmem:[%s1321 + $0x1] sm:$0xff]
      %v1516 = vld [vmem:[%s1321 + $0x9] sm:$0xff]
      %v1517 = vld [vmem:[%s1321 + $0x19] sm:$0xff]
      %v1518 = vld [vmem:[%s1321 + $0x21] sm:$0xff]
      %v1519 = vld [vmem:[%s1321 + $0x31] sm:$0xff]
      %v1520 = vld [vmem:[%s1321 + $0x39] sm:$0xff]
      %v1521 = vld [vmem:[%s1321 + $0x49] sm:$0xff]
      %v1522 = vld [vmem:[%s1321 + $0x51] sm:$0xff]
      %v1523 = vld [vmem:[%s1321 + $0x61] sm:$0xff]
      %v1524 = vld [vmem:[%s1321 + $0x69] sm:$0xff]
      %v1525 = vld [vmem:[%s1321 + $0x79] sm:$0xff]
      %v1526 = vld [vmem:[%s1321 + $0x81] sm:$0xff]
      %v1527 = vld [vmem:[%s1321 + $0x91] sm:$0xff]
      %v1528 = vld [vmem:[%s1321 + $0x99] sm:$0xff]
      %v1529 = vld [vmem:[%s1321 + $0xa9] sm:$0xff]
      %v1530 = vld [vmem:[%s1321 + $0xb1] sm:$0xff]
      %v1531 = vld [vmem:[%s1321 + $0xc1] sm:$0xff]
      %v1532 = vld [vmem:[%s1321 + $0xc9] sm:$0xff]
      %v1533 = vld [vmem:[%s1321 + $0xd9] sm:$0xff]
      %v1534 = vld [vmem:[%s1321 + $0xe1] sm:$0xff]
      %v1535 = vld [vmem:[%s1321 + $0xf1] sm:$0xff]
      %v1536 = vld [vmem:[%s1321 + $0xf9] sm:$0xff]
      %v1537 = vld [vmem:[%s1321 + $0x109] sm:$0xff]
      %v1538 = vld [vmem:[%s1321 + $0x111] sm:$0xff]
      %v1539 = vld [vmem:[%s1321 + $0x121] sm:$0xff]
      %v1540 = vld [vmem:[%s1321 + $0x129] sm:$0xff]
      %v1541 = vld [vmem:[%s1321 + $0x139] sm:$0xff]
      %v1542 = vld [vmem:[%s1321 + $0x141] sm:$0xff]
      %v1543 = vld [vmem:[%s1321 + $0x151] sm:$0xff]
      %v1544 = vld [vmem:[%s1321 + $0x159] sm:$0xff]
      %v1545 = vld [vmem:[%s1321 + $0x169] sm:$0xff]
      %v1546 = vld [vmem:[%s1321 + $0x171] sm:$0xff]
      %1579 = vrot.lane.b32.xlu0 %v1515, 28
      %v1580 = vpop.permute.xlu0 %1579
      %1581 = vrot.lane.b32.xlu0 %v1516, 28
      %v1582 = vpop.permute.xlu0 %1581
      %1583 = vrot.lane.b32.xlu0 %v1517, 28
      %v1584 = vpop.permute.xlu0 %1583
      %1585 = vrot.lane.b32.xlu0 %v1518, 28
      %v1586 = vpop.permute.xlu0 %1585
      %1587 = vrot.lane.b32.xlu0 %v1519, 28
      %v1588 = vpop.permute.xlu0 %1587
      %1589 = vrot.lane.b32.xlu0 %v1520, 28
      %v1590 = vpop.permute.xlu0 %1589
      %1591 = vrot.lane.b32.xlu0 %v1521, 28
      %v1592 = vpop.permute.xlu0 %1591
      %1593 = vrot.lane.b32.xlu0 %v1522, 28
      %v1594 = vpop.permute.xlu0 %1593
      %1595 = vrot.lane.b32.xlu0 %v1523, 28
      %v1596 = vpop.permute.xlu0 %1595
      %1597 = vrot.lane.b32.xlu0 %v1524, 28
      %v1598 = vpop.permute.xlu0 %1597
      %1599 = vrot.lane.b32.xlu0 %v1525, 28
      %v1600 = vpop.permute.xlu0 %1599
      %1601 = vrot.lane.b32.xlu0 %v1526, 28
      %v1602 = vpop.permute.xlu0 %1601
      %1603 = vrot.lane.b32.xlu0 %v1527, 28
      %v1604 = vpop.permute.xlu0 %1603
      %1605 = vrot.lane.b32.xlu0 %v1528, 28
      %v1606 = vpop.permute.xlu0 %1605
      %1607 = vrot.lane.b32.xlu0 %v1529, 28
      %v1608 = vpop.permute.xlu0 %1607
      %1609 = vrot.lane.b32.xlu0 %v1530, 28
      %v1610 = vpop.permute.xlu0 %1609
      %1611 = vrot.lane.b32.xlu0 %v1531, 28
      %v1612 = vpop.permute.xlu0 %1611
      %1613 = vrot.lane.b32.xlu0 %v1532, 28
      %v1614 = vpop.permute.xlu0 %1613
      %1615 = vrot.lane.b32.xlu0 %v1533, 28
      %v1616 = vpop.permute.xlu0 %1615
      %1617 = vrot.lane.b32.xlu0 %v1534, 28
      %v1618 = vpop.permute.xlu0 %1617
      %1619 = vrot.lane.b32.xlu0 %v1535, 28
      %v1620 = vpop.permute.xlu0 %1619
      %1621 = vrot.lane.b32.xlu0 %v1536, 28
      %v1622 = vpop.permute.xlu0 %1621
      %1623 = vrot.lane.b32.xlu0 %v1537, 28
      %v1624 = vpop.permute.xlu0 %1623
      %1625 = vrot.lane.b32.xlu0 %v1538, 28
      %v1626 = vpop.permute.xlu0 %1625
      %1627 = vrot.lane.b32.xlu0 %v1539, 28
      %v1628 = vpop.permute.xlu0 %1627
      %1629 = vrot.lane.b32.xlu0 %v1540, 28
      %v1630 = vpop.permute.xlu0 %1629
      %1631 = vrot.lane.b32.xlu0 %v1541, 28
      %v1632 = vpop.permute.xlu0 %1631
      %1633 = vrot.lane.b32.xlu0 %v1542, 28
      %v1634 = vpop.permute.xlu0 %1633
      %1635 = vrot.lane.b32.xlu0 %v1543, 28
      %v1636 = vpop.permute.xlu0 %1635
      %1637 = vrot.lane.b32.xlu0 %v1544, 28
      %v1638 = vpop.permute.xlu0 %1637
      %1639 = vrot.lane.b32.xlu0 %v1545, 28
      %v1640 = vpop.permute.xlu0 %1639
      %1641 = vrot.lane.b32.xlu0 %v1546, 28
      %v1642 = vpop.permute.xlu0 %1641
      %vm1675 = vcmask 261344
      %1676 = vst.msk [vmem:[#allocation3] sm:$0xff] %vm1675, %v1580
      %1677 = vst.msk [vmem:[#allocation3 + $0x8] sm:$0xff] %vm1675, %v1582
      %1678 = vst.msk [vmem:[#allocation3 + $0x10] sm:$0xff] %vm1675, %v1584
      %1679 = vst.msk [vmem:[#allocation3 + $0x18] sm:$0xff] %vm1675, %v1586
      %1680 = vst.msk [vmem:[#allocation3 + $0x20] sm:$0xff] %vm1675, %v1588
      %1681 = vst.msk [vmem:[#allocation3 + $0x28] sm:$0xff] %vm1675, %v1590
      %1682 = vst.msk [vmem:[#allocation3 + $0x30] sm:$0xff] %vm1675, %v1592
      %1683 = vst.msk [vmem:[#allocation3 + $0x38] sm:$0xff] %vm1675, %v1594
      %1684 = vst.msk [vmem:[#allocation3 + $0x40] sm:$0xff] %vm1675, %v1596
      %1685 = vst.msk [vmem:[#allocation3 + $0x48] sm:$0xff] %vm1675, %v1598
      %1686 = vst.msk [vmem:[#allocation3 + $0x50] sm:$0xff] %vm1675, %v1600
      %1687 = vst.msk [vmem:[#allocation3 + $0x58] sm:$0xff] %vm1675, %v1602
      %1688 = vst.msk [vmem:[#allocation3 + $0x60] sm:$0xff] %vm1675, %v1604
      %1689 = vst.msk [vmem:[#allocation3 + $0x68] sm:$0xff] %vm1675, %v1606
      %1690 = vst.msk [vmem:[#allocation3 + $0x70] sm:$0xff] %vm1675, %v1608
      %1691 = vst.msk [vmem:[#allocation3 + $0x78] sm:$0xff] %vm1675, %v1610
      %1692 = vst.msk [vmem:[#allocation3 + $0x80] sm:$0xff] %vm1675, %v1612
      %1693 = vst.msk [vmem:[#allocation3 + $0x88] sm:$0xff] %vm1675, %v1614
      %1694 = vst.msk [vmem:[#allocation3 + $0x90] sm:$0xff] %vm1675, %v1616
      %1695 = vst.msk [vmem:[#allocation3 + $0x98] sm:$0xff] %vm1675, %v1618
      %1696 = vst.msk [vmem:[#allocation3 + $0xa0] sm:$0xff] %vm1675, %v1620
      %1697 = vst.msk [vmem:[#allocation3 + $0xa8] sm:$0xff] %vm1675, %v1622
      %1698 = vst.msk [vmem:[#allocation3 + $0xb0] sm:$0xff] %vm1675, %v1624
      %1699 = vst.msk [vmem:[#allocation3 + $0xb8] sm:$0xff] %vm1675, %v1626
      %1700 = vst.msk [vmem:[#allocation3 + $0xc0] sm:$0xff] %vm1675, %v1628
      %1701 = vst.msk [vmem:[#allocation3 + $0xc8] sm:$0xff] %vm1675, %v1630
      %1702 = vst.msk [vmem:[#allocation3 + $0xd0] sm:$0xff] %vm1675, %v1632
      %1703 = vst.msk [vmem:[#allocation3 + $0xd8] sm:$0xff] %vm1675, %v1634
      %1704 = vst.msk [vmem:[#allocation3 + $0xe0] sm:$0xff] %vm1675, %v1636
      %1705 = vst.msk [vmem:[#allocation3 + $0xe8] sm:$0xff] %vm1675, %v1638
      %1706 = vst.msk [vmem:[#allocation3 + $0xf0] sm:$0xff] %vm1675, %v1640
      %1707 = vst.msk [vmem:[#allocation3 + $0xf8] sm:$0xff] %vm1675, %v1642
      %v1708 = vld [vmem:[%s1321 + $0x2] sm:$0xff]
      %v1709 = vld [vmem:[%s1321 + $0xa] sm:$0xff]
      %v1710 = vld [vmem:[%s1321 + $0x1a] sm:$0xff]
      %v1711 = vld [vmem:[%s1321 + $0x22] sm:$0xff]
      %v1712 = vld [vmem:[%s1321 + $0x32] sm:$0xff]
      %v1713 = vld [vmem:[%s1321 + $0x3a] sm:$0xff]
      %v1714 = vld [vmem:[%s1321 + $0x4a] sm:$0xff]
      %v1715 = vld [vmem:[%s1321 + $0x52] sm:$0xff]
      %v1716 = vld [vmem:[%s1321 + $0x62] sm:$0xff]
      %v1717 = vld [vmem:[%s1321 + $0x6a] sm:$0xff]
      %v1718 = vld [vmem:[%s1321 + $0x7a] sm:$0xff]
      %v1719 = vld [vmem:[%s1321 + $0x82] sm:$0xff]
      %v1720 = vld [vmem:[%s1321 + $0x92] sm:$0xff]
      %v1721 = vld [vmem:[%s1321 + $0x9a] sm:$0xff]
      %v1722 = vld [vmem:[%s1321 + $0xaa] sm:$0xff]
      %v1723 = vld [vmem:[%s1321 + $0xb2] sm:$0xff]
      %v1724 = vld [vmem:[%s1321 + $0xc2] sm:$0xff]
      %v1725 = vld [vmem:[%s1321 + $0xca] sm:$0xff]
      %v1726 = vld [vmem:[%s1321 + $0xda] sm:$0xff]
      %v1727 = vld [vmem:[%s1321 + $0xe2] sm:$0xff]
      %v1728 = vld [vmem:[%s1321 + $0xf2] sm:$0xff]
      %v1729 = vld [vmem:[%s1321 + $0xfa] sm:$0xff]
      %v1730 = vld [vmem:[%s1321 + $0x10a] sm:$0xff]
      %v1731 = vld [vmem:[%s1321 + $0x112] sm:$0xff]
      %v1732 = vld [vmem:[%s1321 + $0x122] sm:$0xff]
      %v1733 = vld [vmem:[%s1321 + $0x12a] sm:$0xff]
      %v1734 = vld [vmem:[%s1321 + $0x13a] sm:$0xff]
      %v1735 = vld [vmem:[%s1321 + $0x142] sm:$0xff]
      %v1736 = vld [vmem:[%s1321 + $0x152] sm:$0xff]
      %v1737 = vld [vmem:[%s1321 + $0x15a] sm:$0xff]
      %v1738 = vld [vmem:[%s1321 + $0x16a] sm:$0xff]
      %v1739 = vld [vmem:[%s1321 + $0x172] sm:$0xff]
      %1772 = vrot.lane.b32.xlu0 %v1708, 32
      %v1773 = vpop.permute.xlu0 %1772
      %1774 = vrot.lane.b32.xlu0 %v1709, 32
      %v1775 = vpop.permute.xlu0 %1774
      %1776 = vrot.lane.b32.xlu0 %v1710, 32
      %v1777 = vpop.permute.xlu0 %1776
      %1778 = vrot.lane.b32.xlu0 %v1711, 32
      %v1779 = vpop.permute.xlu0 %1778
      %1780 = vrot.lane.b32.xlu0 %v1712, 32
      %v1781 = vpop.permute.xlu0 %1780
      %1782 = vrot.lane.b32.xlu0 %v1713, 32
      %v1783 = vpop.permute.xlu0 %1782
      %1784 = vrot.lane.b32.xlu0 %v1714, 32
      %v1785 = vpop.permute.xlu0 %1784
      %1786 = vrot.lane.b32.xlu0 %v1715, 32
      %v1787 = vpop.permute.xlu0 %1786
      %1788 = vrot.lane.b32.xlu0 %v1716, 32
      %v1789 = vpop.permute.xlu0 %1788
      %1790 = vrot.lane.b32.xlu0 %v1717, 32
      %v1791 = vpop.permute.xlu0 %1790
      %1792 = vrot.lane.b32.xlu0 %v1718, 32
      %v1793 = vpop.permute.xlu0 %1792
      %1794 = vrot.lane.b32.xlu0 %v1719, 32
      %v1795 = vpop.permute.xlu0 %1794
      %1796 = vrot.lane.b32.xlu0 %v1720, 32
      %v1797 = vpop.permute.xlu0 %1796
      %1798 = vrot.lane.b32.xlu0 %v1721, 32
      %v1799 = vpop.permute.xlu0 %1798
      %1800 = vrot.lane.b32.xlu0 %v1722, 32
      %v1801 = vpop.permute.xlu0 %1800
      %1802 = vrot.lane.b32.xlu0 %v1723, 32
      %v1803 = vpop.permute.xlu0 %1802
      %1804 = vrot.lane.b32.xlu0 %v1724, 32
      %v1805 = vpop.permute.xlu0 %1804
      %1806 = vrot.lane.b32.xlu0 %v1725, 32
      %v1807 = vpop.permute.xlu0 %1806
      %1808 = vrot.lane.b32.xlu0 %v1726, 32
      %v1809 = vpop.permute.xlu0 %1808
      %1810 = vrot.lane.b32.xlu0 %v1727, 32
      %v1811 = vpop.permute.xlu0 %1810
      %1812 = vrot.lane.b32.xlu0 %v1728, 32
      %v1813 = vpop.permute.xlu0 %1812
      %1814 = vrot.lane.b32.xlu0 %v1729, 32
      %v1815 = vpop.permute.xlu0 %1814
      %1816 = vrot.lane.b32.xlu0 %v1730, 32
      %v1817 = vpop.permute.xlu0 %1816
      %1818 = vrot.lane.b32.xlu0 %v1731, 32
      %v1819 = vpop.permute.xlu0 %1818
      %1820 = vrot.lane.b32.xlu0 %v1732, 32
      %v1821 = vpop.permute.xlu0 %1820
      %1822 = vrot.lane.b32.xlu0 %v1733, 32
      %v1823 = vpop.permute.xlu0 %1822
      %1824 = vrot.lane.b32.xlu0 %v1734, 32
      %v1825 = vpop.permute.xlu0 %1824
      %1826 = vrot.lane.b32.xlu0 %v1735, 32
      %v1827 = vpop.permute.xlu0 %1826
      %1828 = vrot.lane.b32.xlu0 %v1736, 32
      %v1829 = vpop.permute.xlu0 %1828
      %1830 = vrot.lane.b32.xlu0 %v1737, 32
      %v1831 = vpop.permute.xlu0 %1830
      %1832 = vrot.lane.b32.xlu0 %v1738, 32
      %v1833 = vpop.permute.xlu0 %1832
      %1834 = vrot.lane.b32.xlu0 %v1739, 32
      %v1835 = vpop.permute.xlu0 %1834
      %vm1868 = vcmask 294144
      %1869 = vst.msk [vmem:[#allocation3] sm:$0xff] %vm1868, %v1773
      %1870 = vst.msk [vmem:[#allocation3 + $0x8] sm:$0xff] %vm1868, %v1775
      %1871 = vst.msk [vmem:[#allocation3 + $0x10] sm:$0xff] %vm1868, %v1777
      %1872 = vst.msk [vmem:[#allocation3 + $0x18] sm:$0xff] %vm1868, %v1779
      %1873 = vst.msk [vmem:[#allocation3 + $0x20] sm:$0xff] %vm1868, %v1781
      %1874 = vst.msk [vmem:[#allocation3 + $0x28] sm:$0xff] %vm1868, %v1783
      %1875 = vst.msk [vmem:[#allocation3 + $0x30] sm:$0xff] %vm1868, %v1785
      %1876 = vst.msk [vmem:[#allocation3 + $0x38] sm:$0xff] %vm1868, %v1787
      %1877 = vst.msk [vmem:[#allocation3 + $0x40] sm:$0xff] %vm1868, %v1789
      %1878 = vst.msk [vmem:[#allocation3 + $0x48] sm:$0xff] %vm1868, %v1791
      %1879 = vst.msk [vmem:[#allocation3 + $0x50] sm:$0xff] %vm1868, %v1793
      %1880 = vst.msk [vmem:[#allocation3 + $0x58] sm:$0xff] %vm1868, %v1795
      %1881 = vst.msk [vmem:[#allocation3 + $0x60] sm:$0xff] %vm1868, %v1797
      %1882 = vst.msk [vmem:[#allocation3 + $0x68] sm:$0xff] %vm1868, %v1799
      %1883 = vst.msk [vmem:[#allocation3 + $0x70] sm:$0xff] %vm1868, %v1801
      %1884 = vst.msk [vmem:[#allocation3 + $0x78] sm:$0xff] %vm1868, %v1803
      %1885 = vst.msk [vmem:[#allocation3 + $0x80] sm:$0xff] %vm1868, %v1805
      %1886 = vst.msk [vmem:[#allocation3 + $0x88] sm:$0xff] %vm1868, %v1807
      %1887 = vst.msk [vmem:[#allocation3 + $0x90] sm:$0xff] %vm1868, %v1809
      %1888 = vst.msk [vmem:[#allocation3 + $0x98] sm:$0xff] %vm1868, %v1811
      %1889 = vst.msk [vmem:[#allocation3 + $0xa0] sm:$0xff] %vm1868, %v1813
      %1890 = vst.msk [vmem:[#allocation3 + $0xa8] sm:$0xff] %vm1868, %v1815
      %1891 = vst.msk [vmem:[#allocation3 + $0xb0] sm:$0xff] %vm1868, %v1817
      %1892 = vst.msk [vmem:[#allocation3 + $0xb8] sm:$0xff] %vm1868, %v1819
      %1893 = vst.msk [vmem:[#allocation3 + $0xc0] sm:$0xff] %vm1868, %v1821
      %1894 = vst.msk [vmem:[#allocation3 + $0xc8] sm:$0xff] %vm1868, %v1823
      %1895 = vst.msk [vmem:[#allocation3 + $0xd0] sm:$0xff] %vm1868, %v1825
      %1896 = vst.msk [vmem:[#allocation3 + $0xd8] sm:$0xff] %vm1868, %v1827
      %1897 = vst.msk [vmem:[#allocation3 + $0xe0] sm:$0xff] %vm1868, %v1829
      %1898 = vst.msk [vmem:[#allocation3 + $0xe8] sm:$0xff] %vm1868, %v1831
      %1899 = vst.msk [vmem:[#allocation3 + $0xf0] sm:$0xff] %vm1868, %v1833
      %1900 = vst.msk [vmem:[#allocation3 + $0xf8] sm:$0xff] %vm1868, %v1835
      %v1901 = vld [vmem:[#allocation3] sm:$0xff]
      %v1902 = vld [vmem:[#allocation3 + $0x8] sm:$0xff]
      %v1903 = vld [vmem:[#allocation3 + $0x10] sm:$0xff]
      %v1904 = vld [vmem:[#allocation3 + $0x18] sm:$0xff]
      %v1905 = vld [vmem:[#allocation3 + $0x20] sm:$0xff]
      %v1906 = vld [vmem:[#allocation3 + $0x28] sm:$0xff]
      %v1907 = vld [vmem:[#allocation3 + $0x30] sm:$0xff]
      %v1908 = vld [vmem:[#allocation3 + $0x38] sm:$0xff]
      %v1909 = vld [vmem:[#allocation3 + $0x40] sm:$0xff]
      %v1910 = vld [vmem:[#allocation3 + $0x48] sm:$0xff]
      %v1911 = vld [vmem:[#allocation3 + $0x50] sm:$0xff]
      %v1912 = vld [vmem:[#allocation3 + $0x58] sm:$0xff]
      %v1913 = vld [vmem:[#allocation3 + $0x60] sm:$0xff]
      %v1914 = vld [vmem:[#allocation3 + $0x68] sm:$0xff]
      %v1915 = vld [vmem:[#allocation3 + $0x70] sm:$0xff]
      %v1916 = vld [vmem:[#allocation3 + $0x78] sm:$0xff]
      %v1917 = vld [vmem:[#allocation3 + $0x80] sm:$0xff]
      %v1918 = vld [vmem:[#allocation3 + $0x88] sm:$0xff]
      %v1919 = vld [vmem:[#allocation3 + $0x90] sm:$0xff]
      %v1920 = vld [vmem:[#allocation3 + $0x98] sm:$0xff]
      %v1921 = vld [vmem:[#allocation3 + $0xa0] sm:$0xff]
      %v1922 = vld [vmem:[#allocation3 + $0xa8] sm:$0xff]
      %v1923 = vld [vmem:[#allocation3 + $0xb0] sm:$0xff]
      %v1924 = vld [vmem:[#allocation3 + $0xb8] sm:$0xff]
      %v1925 = vld [vmem:[#allocation3 + $0xc0] sm:$0xff]
      %v1926 = vld [vmem:[#allocation3 + $0xc8] sm:$0xff]
      %v1927 = vld [vmem:[#allocation3 + $0xd0] sm:$0xff]
      %v1928 = vld [vmem:[#allocation3 + $0xd8] sm:$0xff]
      %v1929 = vld [vmem:[#allocation3 + $0xe0] sm:$0xff]
      %v1930 = vld [vmem:[#allocation3 + $0xe8] sm:$0xff]
      %v1931 = vld [vmem:[#allocation3 + $0xf0] sm:$0xff]
      %v1932 = vld [vmem:[#allocation3 + $0xf8] sm:$0xff]
      %v1933 = vld [vmem:[%s1] sm:$0xff]
      %v1934 = vld [vmem:[%s1 + $0x8] sm:$0xff]
      %v1935 = vld [vmem:[%s1 + $0x10] sm:$0xff]
      %v1936 = vld [vmem:[%s1 + $0x18] sm:$0xff]
      %v1937 = vld [vmem:[%s1 + $0x20] sm:$0xf]
      %v1938 = vld [vmem:[%s2] sm:$0x1]
      %v1940 = vlaneseq
      %v1941 = vshrl.u32 %v1940, 7
      %v1942 = vsub.s32 0, %v1941
      %v1943 = vrot.slane %v1938, %v1942
      %vm1945 = vcmask 293888
      %v1947 = vsel %vm1945, %v1901, 0
      %v1950 = vsel %vm1945, %v1902, 0
      %v1953 = vsel %vm1945, %v1903, 0
      %v1956 = vsel %vm1945, %v1904, 0
      %v1959 = vsel %vm1945, %v1905, 0
      %v1962 = vsel %vm1945, %v1906, 0
      %v1965 = vsel %vm1945, %v1907, 0
      %v1968 = vsel %vm1945, %v1908, 0
      %v1971 = vsel %vm1945, %v1909, 0
      %v1974 = vsel %vm1945, %v1910, 0
      %v1977 = vsel %vm1945, %v1911, 0
      %v1980 = vsel %vm1945, %v1912, 0
      %v1983 = vsel %vm1945, %v1913, 0
      %v1986 = vsel %vm1945, %v1914, 0
      %v1989 = vsel %vm1945, %v1915, 0
      %v1992 = vsel %vm1945, %v1916, 0
      %v1995 = vsel %vm1945, %v1917, 0
      %v1998 = vsel %vm1945, %v1918, 0
      %v2001 = vsel %vm1945, %v1919, 0
      %v2004 = vsel %vm1945, %v1920, 0
      %v2007 = vsel %vm1945, %v1921, 0
      %v2010 = vsel %vm1945, %v1922, 0
      %v2013 = vsel %vm1945, %v1923, 0
      %v2016 = vsel %vm1945, %v1924, 0
      %v2019 = vsel %vm1945, %v1925, 0
      %v2022 = vsel %vm1945, %v1926, 0
      %v2025 = vsel %vm1945, %v1927, 0
      %v2028 = vsel %vm1945, %v1928, 0
      %v2031 = vsel %vm1945, %v1929, 0
      %v2034 = vsel %vm1945, %v1930, 0
      %v2037 = vsel %vm1945, %v1931, 0
      %v2040 = vsel %vm1945, %v1932, 0
      %vm2042 = vcmask 1043456
      %v2044 = vsel %vm2042, %v1937, 0
      %2046 = vmatprep.subr.mxu0 0.0
      %2047 = vmatpush1.msra.mxu0 0.0
      %2048 = vmatprep.subr.mxu0 0.0
      %2049 = vmatpush1.msra.mxu0 0.0
      %2050 = vmatprep.subr.mxu0 0.0
      %2051 = vmatpush1.msra.mxu0 0.0
      %2052 = vmatprep.subr.mxu0 0.0
      %2053 = vmatpush1.msra.mxu0 0.0
      %2054 = vmatprep.subr.mxu0 0.0
      %2055 = vmatpush1.msra.mxu0 0.0
      %2056 = vmatprep.subr.mxu0 0.0
      %2057 = vmatpush1.msra.mxu0 0.0
      %2058 = vmatprep.subr.mxu0 0.0
      %2059 = vmatpush1.msra.mxu0 0.0
      %2060 = vmatprep.subr.mxu0 0.0
      %2061 = vmatpush1.msra.mxu0 0.0
      %2062 = vmatprep.subr.mxu0 0.0
      %2063 = vmatpush1.msra.mxu0 0.0
      %2064 = vmatprep.subr.mxu0 0.0
      %2065 = vmatpush1.msra.mxu0 0.0
      %2066 = vmatprep.subr.mxu0 0.0
      %2067 = vmatpush1.msra.mxu0 0.0
      %2068 = vmatprep.subr.mxu0 0.0
      %2069 = vmatpush1.msra.mxu0 %v2044
      %2070 = vmatprep.subr.mxu0 0.0
      %2071 = vmatpush1.msra.mxu0 %v1936
      %2072 = vmatprep.subr.mxu0 0.0
      %2073 = vmatpush1.msra.mxu0 %v1935
      %2074 = vmatprep.subr.mxu0 0.0
      %2075 = vmatpush1.msra.mxu0 %v1934
      %2076 = vmatprep.subr.mxu0 0.0
      %2077 = vmatpush1.msra.mxu0 %v1933
      %2078 = vmatprep.subr.mxu0 0.0
      %2079 = vmatpush2.msra.mxu0 0.0
      %2080 = vmatprep.subr.mxu0 0.0
      %2081 = vmatpush2.msra.mxu0 0.0
      %2082 = vmatprep.subr.mxu0 0.0
      %2083 = vmatpush2.msra.mxu0 0.0
      %2084 = vmatprep.subr.mxu0 0.0
      %2085 = vmatpush2.msra.mxu0 0.0
      %2086 = vmatprep.subr.mxu0 0.0
      %2087 = vmatpush2.msra.mxu0 0.0
      %2088 = vmatprep.subr.mxu0 0.0
      %2089 = vmatpush2.msra.mxu0 0.0
      %2090 = vmatprep.subr.mxu0 0.0
      %2091 = vmatpush2.msra.mxu0 0.0
      %2092 = vmatprep.subr.mxu0 0.0
      %2093 = vmatpush2.msra.mxu0 0.0
      %2094 = vmatprep.subr.mxu0 0.0
      %2095 = vmatpush2.msra.mxu0 0.0
      %2096 = vmatprep.subr.mxu0 0.0
      %2097 = vmatpush2.msra.mxu0 0.0
      %2098 = vmatprep.subr.mxu0 0.0
      %2099 = vmatpush2.msra.mxu0 0.0
      %2100 = vmatprep.subr.mxu0 0.0
      %2101 = vmatpush2.msra.mxu0 0.0
      %2102 = vmatprep.subr.mxu0 0.0
      %2103 = vmatpush2.msra.mxu0 0.0
      %2104 = vmatprep.subr.mxu0 0.0
      %2105 = vmatpush2.msra.mxu0 0.0
      %2106 = vmatprep.subr.mxu0 0.0
      %2107 = vmatpush2.msra.mxu0 0.0
      %2108 = vmatprep.subr.mxu0 0.0
      %2109 = vmatpush2.msra.mxu0 0.0
      %2110 = vmatprep.mubr.f32.mxu0 0.0
      %2111 = vmatmul.mubr.f32.gmra.mxu0 %v1947
      %v2112 = vpop.f32.mrf.mxu0
      %v2113 = vadd.f32 %v1943, %v2112
      %v2114 = vpop.f32.mrf.mxu0
      %2115 = vmatprep.mubr.f32.mxu0 0.0
      %2116 = vmatmul.mubr.f32.gmra.mxu0 %v1950
      %v2117 = vpop.f32.mrf.mxu0
      %v2118 = vadd.f32 %v1943, %v2117
      %v2119 = vpop.f32.mrf.mxu0
      %2120 = vmatprep.mubr.f32.mxu0 0.0
      %2121 = vmatmul.mubr.f32.gmra.mxu0 %v1953
      %v2122 = vpop.f32.mrf.mxu0
      %v2123 = vadd.f32 %v1943, %v2122
      %v2124 = vpop.f32.mrf.mxu0
      %2125 = vmatprep.mubr.f32.mxu0 0.0
      %2126 = vmatmul.mubr.f32.gmra.mxu0 %v1956
      %v2127 = vpop.f32.mrf.mxu0
      %v2128 = vadd.f32 %v1943, %v2127
      %v2129 = vpop.f32.mrf.mxu0
      %2130 = vmatprep.mubr.f32.mxu0 0.0
      %2131 = vmatmul.mubr.f32.gmra.mxu0 %v1959
      %v2132 = vpop.f32.mrf.mxu0
      %v2133 = vadd.f32 %v1943, %v2132
      %v2134 = vpop.f32.mrf.mxu0
      %2135 = vmatprep.mubr.f32.mxu0 0.0
      %2136 = vmatmul.mubr.f32.gmra.mxu0 %v1962
      %v2137 = vpop.f32.mrf.mxu0
      %v2138 = vadd.f32 %v1943, %v2137
      %v2139 = vpop.f32.mrf.mxu0
      %2140 = vmatprep.mubr.f32.mxu0 0.0
      %2141 = vmatmul.mubr.f32.gmra.mxu0 %v1965
      %v2142 = vpop.f32.mrf.mxu0
      %v2143 = vadd.f32 %v1943, %v2142
      %v2144 = vpop.f32.mrf.mxu0
      %2145 = vmatprep.mubr.f32.mxu0 0.0
      %2146 = vmatmul.mubr.f32.gmra.mxu0 %v1968
      %v2147 = vpop.f32.mrf.mxu0
      %v2148 = vadd.f32 %v1943, %v2147
      %v2149 = vpop.f32.mrf.mxu0
      %2150 = vmatprep.mubr.f32.mxu0 0.0
      %2151 = vmatmul.mubr.f32.gmra.mxu0 %v1971
      %v2152 = vpop.f32.mrf.mxu0
      %v2153 = vadd.f32 %v1943, %v2152
      %v2154 = vpop.f32.mrf.mxu0
      %2155 = vmatprep.mubr.f32.mxu0 0.0
      %2156 = vmatmul.mubr.f32.gmra.mxu0 %v1974
      %v2157 = vpop.f32.mrf.mxu0
      %v2158 = vadd.f32 %v1943, %v2157
      %v2159 = vpop.f32.mrf.mxu0
      %2160 = vmatprep.mubr.f32.mxu0 0.0
      %2161 = vmatmul.mubr.f32.gmra.mxu0 %v1977
      %v2162 = vpop.f32.mrf.mxu0
      %v2163 = vadd.f32 %v1943, %v2162
      %v2164 = vpop.f32.mrf.mxu0
      %2165 = vmatprep.mubr.f32.mxu0 0.0
      %2166 = vmatmul.mubr.f32.gmra.mxu0 %v1980
      %v2167 = vpop.f32.mrf.mxu0
      %v2168 = vadd.f32 %v1943, %v2167
      %v2169 = vpop.f32.mrf.mxu0
      %2170 = vmatprep.mubr.f32.mxu0 0.0
      %2171 = vmatmul.mubr.f32.gmra.mxu0 %v1983
      %v2172 = vpop.f32.mrf.mxu0
      %v2173 = vadd.f32 %v1943, %v2172
      %v2174 = vpop.f32.mrf.mxu0
      %2175 = vmatprep.mubr.f32.mxu0 0.0
      %2176 = vmatmul.mubr.f32.gmra.mxu0 %v1986
      %v2177 = vpop.f32.mrf.mxu0
      %v2178 = vadd.f32 %v1943, %v2177
      %v2179 = vpop.f32.mrf.mxu0
      %2180 = vmatprep.mubr.f32.mxu0 0.0
      %2181 = vmatmul.mubr.f32.gmra.mxu0 %v1989
      %v2182 = vpop.f32.mrf.mxu0
      %v2183 = vadd.f32 %v1943, %v2182
      %v2184 = vpop.f32.mrf.mxu0
      %2185 = vmatprep.mubr.f32.mxu0 0.0
      %2186 = vmatmul.mubr.f32.gmra.mxu0 %v1992
      %v2187 = vpop.f32.mrf.mxu0
      %v2188 = vadd.f32 %v1943, %v2187
      %v2189 = vpop.f32.mrf.mxu0
      %2190 = vmatprep.mubr.f32.mxu0 0.0
      %2191 = vmatmul.mubr.f32.gmra.mxu0 %v1995
      %v2192 = vpop.f32.mrf.mxu0
      %v2193 = vadd.f32 %v1943, %v2192
      %v2194 = vpop.f32.mrf.mxu0
      %2195 = vmatprep.mubr.f32.mxu0 0.0
      %2196 = vmatmul.mubr.f32.gmra.mxu0 %v1998
      %v2197 = vpop.f32.mrf.mxu0
      %v2198 = vadd.f32 %v1943, %v2197
      %v2199 = vpop.f32.mrf.mxu0
      %2200 = vmatprep.mubr.f32.mxu0 0.0
      %2201 = vmatmul.mubr.f32.gmra.mxu0 %v2001
      %v2202 = vpop.f32.mrf.mxu0
      %v2203 = vadd.f32 %v1943, %v2202
      %v2204 = vpop.f32.mrf.mxu0
      %2205 = vmatprep.mubr.f32.mxu0 0.0
      %2206 = vmatmul.mubr.f32.gmra.mxu0 %v2004
      %v2207 = vpop.f32.mrf.mxu0
      %v2208 = vadd.f32 %v1943, %v2207
      %v2209 = vpop.f32.mrf.mxu0
      %2210 = vmatprep.mubr.f32.mxu0 0.0
      %2211 = vmatmul.mubr.f32.gmra.mxu0 %v2007
      %v2212 = vpop.f32.mrf.mxu0
      %v2213 = vadd.f32 %v1943, %v2212
      %v2214 = vpop.f32.mrf.mxu0
      %2215 = vmatprep.mubr.f32.mxu0 0.0
      %2216 = vmatmul.mubr.f32.gmra.mxu0 %v2010
      %v2217 = vpop.f32.mrf.mxu0
      %v2218 = vadd.f32 %v1943, %v2217
      %v2219 = vpop.f32.mrf.mxu0
      %2220 = vmatprep.mubr.f32.mxu0 0.0
      %2221 = vmatmul.mubr.f32.gmra.mxu0 %v2013
      %v2222 = vpop.f32.mrf.mxu0
      %v2223 = vadd.f32 %v1943, %v2222
      %v2224 = vpop.f32.mrf.mxu0
      %2225 = vmatprep.mubr.f32.mxu0 0.0
      %2226 = vmatmul.mubr.f32.gmra.mxu0 %v2016
      %v2227 = vpop.f32.mrf.mxu0
      %v2228 = vadd.f32 %v1943, %v2227
      %v2229 = vpop.f32.mrf.mxu0
      %2230 = vmatprep.mubr.f32.mxu0 0.0
      %2231 = vmatmul.mubr.f32.gmra.mxu0 %v2019
      %v2232 = vpop.f32.mrf.mxu0
      %v2233 = vadd.f32 %v1943, %v2232
      %v2234 = vpop.f32.mrf.mxu0
      %2235 = vmatprep.mubr.f32.mxu0 0.0
      %2236 = vmatmul.mubr.f32.gmra.mxu0 %v2022
      %v2237 = vpop.f32.mrf.mxu0
      %v2238 = vadd.f32 %v1943, %v2237
      %v2239 = vpop.f32.mrf.mxu0
      %2240 = vmatprep.mubr.f32.mxu0 0.0
      %2241 = vmatmul.mubr.f32.gmra.mxu0 %v2025
      %v2242 = vpop.f32.mrf.mxu0
      %v2243 = vadd.f32 %v1943, %v2242
      %v2244 = vpop.f32.mrf.mxu0
      %2245 = vmatprep.mubr.f32.mxu0 0.0
      %2246 = vmatmul.mubr.f32.gmra.mxu0 %v2028
      %v2247 = vpop.f32.mrf.mxu0
      %v2248 = vadd.f32 %v1943, %v2247
      %v2249 = vpop.f32.mrf.mxu0
      %2250 = vmatprep.mubr.f32.mxu0 0.0
      %2251 = vmatmul.mubr.f32.gmra.mxu0 %v2031
      %v2252 = vpop.f32.mrf.mxu0
      %v2253 = vadd.f32 %v1943, %v2252
      %v2254 = vpop.f32.mrf.mxu0
      %2255 = vmatprep.mubr.f32.mxu0 0.0
      %2256 = vmatmul.mubr.f32.gmra.mxu0 %v2034
      %v2257 = vpop.f32.mrf.mxu0
      %v2258 = vadd.f32 %v1943, %v2257
      %v2259 = vpop.f32.mrf.mxu0
      %2260 = vmatprep.mubr.f32.mxu0 0.0
      %2261 = vmatmul.mubr.f32.gmra.mxu0 %v2037
      %v2262 = vpop.f32.mrf.mxu0
      %v2263 = vadd.f32 %v1943, %v2262
      %v2264 = vpop.f32.mrf.mxu0
      %2265 = vmatprep.mubr.f32.mxu0 0.0
      %2266 = vmatmul.mubr.f32.gmra.mxu0 %v2040
      %v2267 = vpop.f32.mrf.mxu0
      %v2268 = vadd.f32 %v1943, %v2267
      %v2269 = vpop.f32.mrf.mxu0
      %2270 = vdwg.mxu0
      %vm2271 = vcmask 64512
      %v2272 = vsel %vm2271, %v2113, -inf
      %v2273 = vsel %vm2271, %v2123, -inf
      %v2274 = vmax.f32 %v2272, %v2273
      %v2275 = vsel %vm2271, %v2118, -inf
      %v2276 = vsel %vm2271, %v2128, -inf
      %v2277 = vmax.f32 %v2275, %v2276
      %v2278 = vsel %vm2271, %v2133, -inf
      %v2279 = vsel %vm2271, %v2143, -inf
      %v2280 = vmax.f32 %v2278, %v2279
      %v2281 = vsel %vm2271, %v2138, -inf
      %v2282 = vsel %vm2271, %v2148, -inf
      %v2283 = vmax.f32 %v2281, %v2282
      %v2284 = vsel %vm2271, %v2153, -inf
      %v2285 = vsel %vm2271, %v2163, -inf
      %v2286 = vmax.f32 %v2284, %v2285
      %v2287 = vsel %vm2271, %v2158, -inf
      %v2288 = vsel %vm2271, %v2168, -inf
      %v2289 = vmax.f32 %v2287, %v2288
      %v2290 = vsel %vm2271, %v2173, -inf
      %v2291 = vsel %vm2271, %v2183, -inf
      %v2292 = vmax.f32 %v2290, %v2291
      %v2293 = vsel %vm2271, %v2178, -inf
      %v2294 = vsel %vm2271, %v2188, -inf
      %v2295 = vmax.f32 %v2293, %v2294
      %v2296 = vsel %vm2271, %v2193, -inf
      %v2297 = vsel %vm2271, %v2203, -inf
      %v2298 = vmax.f32 %v2296, %v2297
      %v2299 = vsel %vm2271, %v2198, -inf
      %v2300 = vsel %vm2271, %v2208, -inf
      %v2301 = vmax.f32 %v2299, %v2300
      %v2302 = vsel %vm2271, %v2213, -inf
      %v2303 = vsel %vm2271, %v2223, -inf
      %v2304 = vmax.f32 %v2302, %v2303
      %v2305 = vsel %vm2271, %v2218, -inf
      %v2306 = vsel %vm2271, %v2228, -inf
      %v2307 = vmax.f32 %v2305, %v2306
      %v2308 = vsel %vm2271, %v2233, -inf
      %v2309 = vsel %vm2271, %v2243, -inf
      %v2310 = vmax.f32 %v2308, %v2309
      %v2311 = vsel %vm2271, %v2238, -inf
      %v2312 = vsel %vm2271, %v2248, -inf
      %v2313 = vmax.f32 %v2311, %v2312
      %v2314 = vsel %vm2271, %v2253, -inf
      %v2315 = vsel %vm2271, %v2263, -inf
      %v2316 = vmax.f32 %v2314, %v2315
      %v2317 = vsel %vm2271, %v2258, -inf
      %v2318 = vsel %vm2271, %v2268, -inf
      %v2319 = vmax.f32 %v2317, %v2318
      %v2336 = vcombine.high %v2274, %v2274
      %v2338 = vunpack.c.l.s4 1983009808
      %v2339 = vunpack.c.0.s8 %v2338
      %v2340 = vlaneseq
      %v2341 = vshrl.u32 %v2340, 7
      %v2342 = vsub.s32 %v2339, %v2341
      %v2343 = vrot.slane %v2274, %v2342
      %v2345 = vunpack.c.l.s4 1983009808
      %v2346 = vunpack.c.0.s8 %v2345
      %v2347 = vlaneseq
      %v2348 = vshrl.u32 %v2347, 7
      %v2349 = vsub.s32 %v2346, %v2348
      %v2350 = vrot.slane %v2336, %v2349
      %v2351 = vcombine.high %v2343, %v2343
      %v2352 = vcombine.high %v2350, %v2350
      %v2353 = vcombine.high %v2277, %v2277
      %v2355 = vunpack.c.l.s4 1983009808
      %v2356 = vunpack.c.0.s8 %v2355
      %v2357 = vlaneseq
      %v2358 = vshrl.u32 %v2357, 7
      %v2359 = vsub.s32 %v2356, %v2358
      %v2360 = vrot.slane %v2277, %v2359
      %v2362 = vunpack.c.l.s4 1983009808
      %v2363 = vunpack.c.0.s8 %v2362
      %v2364 = vlaneseq
      %v2365 = vshrl.u32 %v2364, 7
      %v2366 = vsub.s32 %v2363, %v2365
      %v2367 = vrot.slane %v2353, %v2366
      %v2368 = vcombine.high %v2360, %v2360
      %v2369 = vcombine.high %v2367, %v2367
      %v2370 = vcombine.high %v2280, %v2280
      %v2372 = vunpack.c.l.s4 1983009808
      %v2373 = vunpack.c.0.s8 %v2372
      %v2374 = vlaneseq
      %v2375 = vshrl.u32 %v2374, 7
      %v2376 = vsub.s32 %v2373, %v2375
      %v2377 = vrot.slane %v2280, %v2376
      %v2379 = vunpack.c.l.s4 1983009808
      %v2380 = vunpack.c.0.s8 %v2379
      %v2381 = vlaneseq
      %v2382 = vshrl.u32 %v2381, 7
      %v2383 = vsub.s32 %v2380, %v2382
      %v2384 = vrot.slane %v2370, %v2383
      %v2385 = vcombine.high %v2377, %v2377
      %v2386 = vcombine.high %v2384, %v2384
      %v2387 = vcombine.high %v2283, %v2283
      %v2389 = vunpack.c.l.s4 1983009808
      %v2390 = vunpack.c.0.s8 %v2389
      %v2391 = vlaneseq
      %v2392 = vshrl.u32 %v2391, 7
      %v2393 = vsub.s32 %v2390, %v2392
      %v2394 = vrot.slane %v2283, %v2393
      %v2396 = vunpack.c.l.s4 1983009808
      %v2397 = vunpack.c.0.s8 %v2396
      %v2398 = vlaneseq
      %v2399 = vshrl.u32 %v2398, 7
      %v2400 = vsub.s32 %v2397, %v2399
      %v2401 = vrot.slane %v2387, %v2400
      %v2402 = vcombine.high %v2394, %v2394
      %v2403 = vcombine.high %v2401, %v2401
      %v2404 = vcombine.high %v2286, %v2286
      %v2406 = vunpack.c.l.s4 1983009808
      %v2407 = vunpack.c.0.s8 %v2406
      %v2408 = vlaneseq
      %v2409 = vshrl.u32 %v2408, 7
      %v2410 = vsub.s32 %v2407, %v2409
      %v2411 = vrot.slane %v2286, %v2410
      %v2413 = vunpack.c.l.s4 1983009808
      %v2414 = vunpack.c.0.s8 %v2413
      %v2415 = vlaneseq
      %v2416 = vshrl.u32 %v2415, 7
      %v2417 = vsub.s32 %v2414, %v2416
      %v2418 = vrot.slane %v2404, %v2417
      %v2419 = vcombine.high %v2411, %v2411
      %v2420 = vcombine.high %v2418, %v2418
      %v2421 = vcombine.high %v2289, %v2289
      %v2423 = vunpack.c.l.s4 1983009808
      %v2424 = vunpack.c.0.s8 %v2423
      %v2425 = vlaneseq
      %v2426 = vshrl.u32 %v2425, 7
      %v2427 = vsub.s32 %v2424, %v2426
      %v2428 = vrot.slane %v2289, %v2427
      %v2430 = vunpack.c.l.s4 1983009808
      %v2431 = vunpack.c.0.s8 %v2430
      %v2432 = vlaneseq
      %v2433 = vshrl.u32 %v2432, 7
      %v2434 = vsub.s32 %v2431, %v2433
      %v2435 = vrot.slane %v2421, %v2434
      %v2436 = vcombine.high %v2428, %v2428
      %v2437 = vcombine.high %v2435, %v2435
      %v2438 = vcombine.high %v2292, %v2292
      %v2440 = vunpack.c.l.s4 1983009808
      %v2441 = vunpack.c.0.s8 %v2440
      %v2442 = vlaneseq
      %v2443 = vshrl.u32 %v2442, 7
      %v2444 = vsub.s32 %v2441, %v2443
      %v2445 = vrot.slane %v2292, %v2444
      %v2447 = vunpack.c.l.s4 1983009808
      %v2448 = vunpack.c.0.s8 %v2447
      %v2449 = vlaneseq
      %v2450 = vshrl.u32 %v2449, 7
      %v2451 = vsub.s32 %v2448, %v2450
      %v2452 = vrot.slane %v2438, %v2451
      %v2453 = vcombine.high %v2445, %v2445
      %v2454 = vcombine.high %v2452, %v2452
      %v2455 = vcombine.high %v2295, %v2295
      %v2457 = vunpack.c.l.s4 1983009808
      %v2458 = vunpack.c.0.s8 %v2457
      %v2459 = vlaneseq
      %v2460 = vshrl.u32 %v2459, 7
      %v2461 = vsub.s32 %v2458, %v2460
      %v2462 = vrot.slane %v2295, %v2461
      %v2464 = vunpack.c.l.s4 1983009808
      %v2465 = vunpack.c.0.s8 %v2464
      %v2466 = vlaneseq
      %v2467 = vshrl.u32 %v2466, 7
      %v2468 = vsub.s32 %v2465, %v2467
      %v2469 = vrot.slane %v2455, %v2468
      %v2470 = vcombine.high %v2462, %v2462
      %v2471 = vcombine.high %v2469, %v2469
      %v2472 = vcombine.high %v2298, %v2298
      %v2474 = vunpack.c.l.s4 1983009808
      %v2475 = vunpack.c.0.s8 %v2474
      %v2476 = vlaneseq
      %v2477 = vshrl.u32 %v2476, 7
      %v2478 = vsub.s32 %v2475, %v2477
      %v2479 = vrot.slane %v2298, %v2478
      %v2481 = vunpack.c.l.s4 1983009808
      %v2482 = vunpack.c.0.s8 %v2481
      %v2483 = vlaneseq
      %v2484 = vshrl.u32 %v2483, 7
      %v2485 = vsub.s32 %v2482, %v2484
      %v2486 = vrot.slane %v2472, %v2485
      %v2487 = vcombine.high %v2479, %v2479
      %v2488 = vcombine.high %v2486, %v2486
      %v2489 = vcombine.high %v2301, %v2301
      %v2491 = vunpack.c.l.s4 1983009808
      %v2492 = vunpack.c.0.s8 %v2491
      %v2493 = vlaneseq
      %v2494 = vshrl.u32 %v2493, 7
      %v2495 = vsub.s32 %v2492, %v2494
      %v2496 = vrot.slane %v2301, %v2495
      %v2498 = vunpack.c.l.s4 1983009808
      %v2499 = vunpack.c.0.s8 %v2498
      %v2500 = vlaneseq
      %v2501 = vshrl.u32 %v2500, 7
      %v2502 = vsub.s32 %v2499, %v2501
      %v2503 = vrot.slane %v2489, %v2502
      %v2504 = vcombine.high %v2496, %v2496
      %v2505 = vcombine.high %v2503, %v2503
      %v2506 = vcombine.high %v2304, %v2304
      %v2508 = vunpack.c.l.s4 1983009808
      %v2509 = vunpack.c.0.s8 %v2508
      %v2510 = vlaneseq
      %v2511 = vshrl.u32 %v2510, 7
      %v2512 = vsub.s32 %v2509, %v2511
      %v2513 = vrot.slane %v2304, %v2512
      %v2515 = vunpack.c.l.s4 1983009808
      %v2516 = vunpack.c.0.s8 %v2515
      %v2517 = vlaneseq
      %v2518 = vshrl.u32 %v2517, 7
      %v2519 = vsub.s32 %v2516, %v2518
      %v2520 = vrot.slane %v2506, %v2519
      %v2521 = vcombine.high %v2513, %v2513
      %v2522 = vcombine.high %v2520, %v2520
      %v2523 = vcombine.high %v2307, %v2307
      %v2525 = vunpack.c.l.s4 1983009808
      %v2526 = vunpack.c.0.s8 %v2525
      %v2527 = vlaneseq
      %v2528 = vshrl.u32 %v2527, 7
      %v2529 = vsub.s32 %v2526, %v2528
      %v2530 = vrot.slane %v2307, %v2529
      %v2532 = vunpack.c.l.s4 1983009808
      %v2533 = vunpack.c.0.s8 %v2532
      %v2534 = vlaneseq
      %v2535 = vshrl.u32 %v2534, 7
      %v2536 = vsub.s32 %v2533, %v2535
      %v2537 = vrot.slane %v2523, %v2536
      %v2538 = vcombine.high %v2530, %v2530
      %v2539 = vcombine.high %v2537, %v2537
      %v2540 = vcombine.high %v2310, %v2310
      %v2542 = vunpack.c.l.s4 1983009808
      %v2543 = vunpack.c.0.s8 %v2542
      %v2544 = vlaneseq
      %v2545 = vshrl.u32 %v2544, 7
      %v2546 = vsub.s32 %v2543, %v2545
      %v2547 = vrot.slane %v2310, %v2546
      %v2549 = vunpack.c.l.s4 1983009808
      %v2550 = vunpack.c.0.s8 %v2549
      %v2551 = vlaneseq
      %v2552 = vshrl.u32 %v2551, 7
      %v2553 = vsub.s32 %v2550, %v2552
      %v2554 = vrot.slane %v2540, %v2553
      %v2555 = vcombine.high %v2547, %v2547
      %v2556 = vcombine.high %v2554, %v2554
      %v2557 = vcombine.high %v2313, %v2313
      %v2559 = vunpack.c.l.s4 1983009808
      %v2560 = vunpack.c.0.s8 %v2559
      %v2561 = vlaneseq
      %v2562 = vshrl.u32 %v2561, 7
      %v2563 = vsub.s32 %v2560, %v2562
      %v2564 = vrot.slane %v2313, %v2563
      %v2566 = vunpack.c.l.s4 1983009808
      %v2567 = vunpack.c.0.s8 %v2566
      %v2568 = vlaneseq
      %v2569 = vshrl.u32 %v2568, 7
      %v2570 = vsub.s32 %v2567, %v2569
      %v2571 = vrot.slane %v2557, %v2570
      %v2572 = vcombine.high %v2564, %v2564
      %v2573 = vcombine.high %v2571, %v2571
      %v2574 = vcombine.high %v2316, %v2316
      %v2576 = vunpack.c.l.s4 1983009808
      %v2577 = vunpack.c.0.s8 %v2576
      %v2578 = vlaneseq
      %v2579 = vshrl.u32 %v2578, 7
      %v2580 = vsub.s32 %v2577, %v2579
      %v2581 = vrot.slane %v2316, %v2580
      %v2583 = vunpack.c.l.s4 1983009808
      %v2584 = vunpack.c.0.s8 %v2583
      %v2585 = vlaneseq
      %v2586 = vshrl.u32 %v2585, 7
      %v2587 = vsub.s32 %v2584, %v2586
      %v2588 = vrot.slane %v2574, %v2587
      %v2589 = vcombine.high %v2581, %v2581
      %v2590 = vcombine.high %v2588, %v2588
      %v2591 = vcombine.high %v2319, %v2319
      %v2593 = vunpack.c.l.s4 1983009808
      %v2594 = vunpack.c.0.s8 %v2593
      %v2595 = vlaneseq
      %v2596 = vshrl.u32 %v2595, 7
      %v2597 = vsub.s32 %v2594, %v2596
      %v2598 = vrot.slane %v2319, %v2597
      %v2600 = vunpack.c.l.s4 1983009808
      %v2601 = vunpack.c.0.s8 %v2600
      %v2602 = vlaneseq
      %v2603 = vshrl.u32 %v2602, 7
      %v2604 = vsub.s32 %v2601, %v2603
      %v2605 = vrot.slane %v2591, %v2604
      %v2606 = vcombine.high %v2598, %v2598
      %v2607 = vcombine.high %v2605, %v2605
      %vm2672 = vcmask 58368
      %v2673 = vsel %vm2672, %v2343, -inf
      %v2674 = vrot.slane %v2673, 4
      %v2675 = vmax.f32 %v2673, %v2674
      %v2676 = vrot.slane %v2675, 2
      %v2677 = vmax.f32 %v2675, %v2676
      %v2678 = vrot.slane %v2677, 1
      %v2679 = vmax.f32 %v2677, %v2678
      %v2680 = vsel %vm2672, %v2351, -inf
      %v2681 = vrot.slane %v2680, 4
      %v2682 = vmax.f32 %v2680, %v2681
      %v2683 = vrot.slane %v2682, 2
      %v2684 = vmax.f32 %v2682, %v2683
      %v2685 = vrot.slane %v2684, 1
      %v2686 = vmax.f32 %v2684, %v2685
      %v2687 = vsel %vm2672, %v2350, -inf
      %v2688 = vrot.slane %v2687, 4
      %v2689 = vmax.f32 %v2687, %v2688
      %v2690 = vrot.slane %v2689, 2
      %v2691 = vmax.f32 %v2689, %v2690
      %v2692 = vrot.slane %v2691, 1
      %v2693 = vmax.f32 %v2691, %v2692
      %v2694 = vsel %vm2672, %v2352, -inf
      %v2695 = vrot.slane %v2694, 4
      %v2696 = vmax.f32 %v2694, %v2695
      %v2697 = vrot.slane %v2696, 2
      %v2698 = vmax.f32 %v2696, %v2697
      %v2699 = vrot.slane %v2698, 1
      %v2700 = vmax.f32 %v2698, %v2699
      %v2701 = vsel %vm2672, %v2360, -inf
      %v2702 = vrot.slane %v2701, 4
      %v2703 = vmax.f32 %v2701, %v2702
      %v2704 = vrot.slane %v2703, 2
      %v2705 = vmax.f32 %v2703, %v2704
      %v2706 = vrot.slane %v2705, 1
      %v2707 = vmax.f32 %v2705, %v2706
      %v2708 = vsel %vm2672, %v2368, -inf
      %v2709 = vrot.slane %v2708, 4
      %v2710 = vmax.f32 %v2708, %v2709
      %v2711 = vrot.slane %v2710, 2
      %v2712 = vmax.f32 %v2710, %v2711
      %v2713 = vrot.slane %v2712, 1
      %v2714 = vmax.f32 %v2712, %v2713
      %v2715 = vsel %vm2672, %v2367, -inf
      %v2716 = vrot.slane %v2715, 4
      %v2717 = vmax.f32 %v2715, %v2716
      %v2718 = vrot.slane %v2717, 2
      %v2719 = vmax.f32 %v2717, %v2718
      %v2720 = vrot.slane %v2719, 1
      %v2721 = vmax.f32 %v2719, %v2720
      %v2722 = vsel %vm2672, %v2369, -inf
      %v2723 = vrot.slane %v2722, 4
      %v2724 = vmax.f32 %v2722, %v2723
      %v2725 = vrot.slane %v2724, 2
      %v2726 = vmax.f32 %v2724, %v2725
      %v2727 = vrot.slane %v2726, 1
      %v2728 = vmax.f32 %v2726, %v2727
      %v2729 = vsel %vm2672, %v2377, -inf
      %v2730 = vrot.slane %v2729, 4
      %v2731 = vmax.f32 %v2729, %v2730
      %v2732 = vrot.slane %v2731, 2
      %v2733 = vmax.f32 %v2731, %v2732
      %v2734 = vrot.slane %v2733, 1
      %v2735 = vmax.f32 %v2733, %v2734
      %v2736 = vsel %vm2672, %v2385, -inf
      %v2737 = vrot.slane %v2736, 4
      %v2738 = vmax.f32 %v2736, %v2737
      %v2739 = vrot.slane %v2738, 2
      %v2740 = vmax.f32 %v2738, %v2739
      %v2741 = vrot.slane %v2740, 1
      %v2742 = vmax.f32 %v2740, %v2741
      %v2743 = vsel %vm2672, %v2384, -inf
      %v2744 = vrot.slane %v2743, 4
      %v2745 = vmax.f32 %v2743, %v2744
      %v2746 = vrot.slane %v2745, 2
      %v2747 = vmax.f32 %v2745, %v2746
      %v2748 = vrot.slane %v2747, 1
      %v2749 = vmax.f32 %v2747, %v2748
      %v2750 = vsel %vm2672, %v2386, -inf
      %v2751 = vrot.slane %v2750, 4
      %v2752 = vmax.f32 %v2750, %v2751
      %v2753 = vrot.slane %v2752, 2
      %v2754 = vmax.f32 %v2752, %v2753
      %v2755 = vrot.slane %v2754, 1
      %v2756 = vmax.f32 %v2754, %v2755
      %v2757 = vsel %vm2672, %v2394, -inf
      %v2758 = vrot.slane %v2757, 4
      %v2759 = vmax.f32 %v2757, %v2758
      %v2760 = vrot.slane %v2759, 2
      %v2761 = vmax.f32 %v2759, %v2760
      %v2762 = vrot.slane %v2761, 1
      %v2763 = vmax.f32 %v2761, %v2762
      %v2764 = vsel %vm2672, %v2402, -inf
      %v2765 = vrot.slane %v2764, 4
      %v2766 = vmax.f32 %v2764, %v2765
      %v2767 = vrot.slane %v2766, 2
      %v2768 = vmax.f32 %v2766, %v2767
      %v2769 = vrot.slane %v2768, 1
      %v2770 = vmax.f32 %v2768, %v2769
      %v2771 = vsel %vm2672, %v2401, -inf
      %v2772 = vrot.slane %v2771, 4
      %v2773 = vmax.f32 %v2771, %v2772
      %v2774 = vrot.slane %v2773, 2
      %v2775 = vmax.f32 %v2773, %v2774
      %v2776 = vrot.slane %v2775, 1
      %v2777 = vmax.f32 %v2775, %v2776
      %v2778 = vsel %vm2672, %v2403, -inf
      %v2779 = vrot.slane %v2778, 4
      %v2780 = vmax.f32 %v2778, %v2779
      %v2781 = vrot.slane %v2780, 2
      %v2782 = vmax.f32 %v2780, %v2781
      %v2783 = vrot.slane %v2782, 1
      %v2784 = vmax.f32 %v2782, %v2783
      %v2785 = vsel %vm2672, %v2411, -inf
      %v2786 = vrot.slane %v2785, 4
      %v2787 = vmax.f32 %v2785, %v2786
      %v2788 = vrot.slane %v2787, 2
      %v2789 = vmax.f32 %v2787, %v2788
      %v2790 = vrot.slane %v2789, 1
      %v2791 = vmax.f32 %v2789, %v2790
      %v2792 = vsel %vm2672, %v2419, -inf
      %v2793 = vrot.slane %v2792, 4
      %v2794 = vmax.f32 %v2792, %v2793
      %v2795 = vrot.slane %v2794, 2
      %v2796 = vmax.f32 %v2794, %v2795
      %v2797 = vrot.slane %v2796, 1
      %v2798 = vmax.f32 %v2796, %v2797
      %v2799 = vsel %vm2672, %v2418, -inf
      %v2800 = vrot.slane %v2799, 4
      %v2801 = vmax.f32 %v2799, %v2800
      %v2802 = vrot.slane %v2801, 2
      %v2803 = vmax.f32 %v2801, %v2802
      %v2804 = vrot.slane %v2803, 1
      %v2805 = vmax.f32 %v2803, %v2804
      %v2806 = vsel %vm2672, %v2420, -inf
      %v2807 = vrot.slane %v2806, 4
      %v2808 = vmax.f32 %v2806, %v2807
      %v2809 = vrot.slane %v2808, 2
      %v2810 = vmax.f32 %v2808, %v2809
      %v2811 = vrot.slane %v2810, 1
      %v2812 = vmax.f32 %v2810, %v2811
      %v2813 = vsel %vm2672, %v2428, -inf
      %v2814 = vrot.slane %v2813, 4
      %v2815 = vmax.f32 %v2813, %v2814
      %v2816 = vrot.slane %v2815, 2
      %v2817 = vmax.f32 %v2815, %v2816
      %v2818 = vrot.slane %v2817, 1
      %v2819 = vmax.f32 %v2817, %v2818
      %v2820 = vsel %vm2672, %v2436, -inf
      %v2821 = vrot.slane %v2820, 4
      %v2822 = vmax.f32 %v2820, %v2821
      %v2823 = vrot.slane %v2822, 2
      %v2824 = vmax.f32 %v2822, %v2823
      %v2825 = vrot.slane %v2824, 1
      %v2826 = vmax.f32 %v2824, %v2825
      %v2827 = vsel %vm2672, %v2435, -inf
      %v2828 = vrot.slane %v2827, 4
      %v2829 = vmax.f32 %v2827, %v2828
      %v2830 = vrot.slane %v2829, 2
      %v2831 = vmax.f32 %v2829, %v2830
      %v2832 = vrot.slane %v2831, 1
      %v2833 = vmax.f32 %v2831, %v2832
      %v2834 = vsel %vm2672, %v2437, -inf
      %v2835 = vrot.slane %v2834, 4
      %v2836 = vmax.f32 %v2834, %v2835
      %v2837 = vrot.slane %v2836, 2
      %v2838 = vmax.f32 %v2836, %v2837
      %v2839 = vrot.slane %v2838, 1
      %v2840 = vmax.f32 %v2838, %v2839
      %v2841 = vsel %vm2672, %v2445, -inf
      %v2842 = vrot.slane %v2841, 4
      %v2843 = vmax.f32 %v2841, %v2842
      %v2844 = vrot.slane %v2843, 2
      %v2845 = vmax.f32 %v2843, %v2844
      %v2846 = vrot.slane %v2845, 1
      %v2847 = vmax.f32 %v2845, %v2846
      %v2848 = vsel %vm2672, %v2453, -inf
      %v2849 = vrot.slane %v2848, 4
      %v2850 = vmax.f32 %v2848, %v2849
      %v2851 = vrot.slane %v2850, 2
      %v2852 = vmax.f32 %v2850, %v2851
      %v2853 = vrot.slane %v2852, 1
      %v2854 = vmax.f32 %v2852, %v2853
      %v2855 = vsel %vm2672, %v2452, -inf
      %v2856 = vrot.slane %v2855, 4
      %v2857 = vmax.f32 %v2855, %v2856
      %v2858 = vrot.slane %v2857, 2
      %v2859 = vmax.f32 %v2857, %v2858
      %v2860 = vrot.slane %v2859, 1
      %v2861 = vmax.f32 %v2859, %v2860
      %v2862 = vsel %vm2672, %v2454, -inf
      %v2863 = vrot.slane %v2862, 4
      %v2864 = vmax.f32 %v2862, %v2863
      %v2865 = vrot.slane %v2864, 2
      %v2866 = vmax.f32 %v2864, %v2865
      %v2867 = vrot.slane %v2866, 1
      %v2868 = vmax.f32 %v2866, %v2867
      %v2869 = vsel %vm2672, %v2462, -inf
      %v2870 = vrot.slane %v2869, 4
      %v2871 = vmax.f32 %v2869, %v2870
      %v2872 = vrot.slane %v2871, 2
      %v2873 = vmax.f32 %v2871, %v2872
      %v2874 = vrot.slane %v2873, 1
      %v2875 = vmax.f32 %v2873, %v2874
      %v2876 = vsel %vm2672, %v2470, -inf
      %v2877 = vrot.slane %v2876, 4
      %v2878 = vmax.f32 %v2876, %v2877
      %v2879 = vrot.slane %v2878, 2
      %v2880 = vmax.f32 %v2878, %v2879
      %v2881 = vrot.slane %v2880, 1
      %v2882 = vmax.f32 %v2880, %v2881
      %v2883 = vsel %vm2672, %v2469, -inf
      %v2884 = vrot.slane %v2883, 4
      %v2885 = vmax.f32 %v2883, %v2884
      %v2886 = vrot.slane %v2885, 2
      %v2887 = vmax.f32 %v2885, %v2886
      %v2888 = vrot.slane %v2887, 1
      %v2889 = vmax.f32 %v2887, %v2888
      %v2890 = vsel %vm2672, %v2471, -inf
      %v2891 = vrot.slane %v2890, 4
      %v2892 = vmax.f32 %v2890, %v2891
      %v2893 = vrot.slane %v2892, 2
      %v2894 = vmax.f32 %v2892, %v2893
      %v2895 = vrot.slane %v2894, 1
      %v2896 = vmax.f32 %v2894, %v2895
      %v2897 = vsel %vm2672, %v2479, -inf
      %v2898 = vrot.slane %v2897, 4
      %v2899 = vmax.f32 %v2897, %v2898
      %v2900 = vrot.slane %v2899, 2
      %v2901 = vmax.f32 %v2899, %v2900
      %v2902 = vrot.slane %v2901, 1
      %v2903 = vmax.f32 %v2901, %v2902
      %v2904 = vsel %vm2672, %v2487, -inf
      %v2905 = vrot.slane %v2904, 4
      %v2906 = vmax.f32 %v2904, %v2905
      %v2907 = vrot.slane %v2906, 2
      %v2908 = vmax.f32 %v2906, %v2907
      %v2909 = vrot.slane %v2908, 1
      %v2910 = vmax.f32 %v2908, %v2909
      %v2911 = vsel %vm2672, %v2486, -inf
      %v2912 = vrot.slane %v2911, 4
      %v2913 = vmax.f32 %v2911, %v2912
      %v2914 = vrot.slane %v2913, 2
      %v2915 = vmax.f32 %v2913, %v2914
      %v2916 = vrot.slane %v2915, 1
      %v2917 = vmax.f32 %v2915, %v2916
      %v2918 = vsel %vm2672, %v2488, -inf
      %v2919 = vrot.slane %v2918, 4
      %v2920 = vmax.f32 %v2918, %v2919
      %v2921 = vrot.slane %v2920, 2
      %v2922 = vmax.f32 %v2920, %v2921
      %v2923 = vrot.slane %v2922, 1
      %v2924 = vmax.f32 %v2922, %v2923
      %v2925 = vsel %vm2672, %v2496, -inf
      %v2926 = vrot.slane %v2925, 4
      %v2927 = vmax.f32 %v2925, %v2926
      %v2928 = vrot.slane %v2927, 2
      %v2929 = vmax.f32 %v2927, %v2928
      %v2930 = vrot.slane %v2929, 1
      %v2931 = vmax.f32 %v2929, %v2930
      %v2932 = vsel %vm2672, %v2504, -inf
      %v2933 = vrot.slane %v2932, 4
      %v2934 = vmax.f32 %v2932, %v2933
      %v2935 = vrot.slane %v2934, 2
      %v2936 = vmax.f32 %v2934, %v2935
      %v2937 = vrot.slane %v2936, 1
      %v2938 = vmax.f32 %v2936, %v2937
      %v2939 = vsel %vm2672, %v2503, -inf
      %v2940 = vrot.slane %v2939, 4
      %v2941 = vmax.f32 %v2939, %v2940
      %v2942 = vrot.slane %v2941, 2
      %v2943 = vmax.f32 %v2941, %v2942
      %v2944 = vrot.slane %v2943, 1
      %v2945 = vmax.f32 %v2943, %v2944
      %v2946 = vsel %vm2672, %v2505, -inf
      %v2947 = vrot.slane %v2946, 4
      %v2948 = vmax.f32 %v2946, %v2947
      %v2949 = vrot.slane %v2948, 2
      %v2950 = vmax.f32 %v2948, %v2949
      %v2951 = vrot.slane %v2950, 1
      %v2952 = vmax.f32 %v2950, %v2951
      %v2953 = vsel %vm2672, %v2513, -inf
      %v2954 = vrot.slane %v2953, 4
      %v2955 = vmax.f32 %v2953, %v2954
      %v2956 = vrot.slane %v2955, 2
      %v2957 = vmax.f32 %v2955, %v2956
      %v2958 = vrot.slane %v2957, 1
      %v2959 = vmax.f32 %v2957, %v2958
      %v2960 = vsel %vm2672, %v2521, -inf
      %v2961 = vrot.slane %v2960, 4
      %v2962 = vmax.f32 %v2960, %v2961
      %v2963 = vrot.slane %v2962, 2
      %v2964 = vmax.f32 %v2962, %v2963
      %v2965 = vrot.slane %v2964, 1
      %v2966 = vmax.f32 %v2964, %v2965
      %v2967 = vsel %vm2672, %v2520, -inf
      %v2968 = vrot.slane %v2967, 4
      %v2969 = vmax.f32 %v2967, %v2968
      %v2970 = vrot.slane %v2969, 2
      %v2971 = vmax.f32 %v2969, %v2970
      %v2972 = vrot.slane %v2971, 1
      %v2973 = vmax.f32 %v2971, %v2972
      %v2974 = vsel %vm2672, %v2522, -inf
      %v2975 = vrot.slane %v2974, 4
      %v2976 = vmax.f32 %v2974, %v2975
      %v2977 = vrot.slane %v2976, 2
      %v2978 = vmax.f32 %v2976, %v2977
      %v2979 = vrot.slane %v2978, 1
      %v2980 = vmax.f32 %v2978, %v2979
      %v2981 = vsel %vm2672, %v2530, -inf
      %v2982 = vrot.slane %v2981, 4
      %v2983 = vmax.f32 %v2981, %v2982
      %v2984 = vrot.slane %v2983, 2
      %v2985 = vmax.f32 %v2983, %v2984
      %v2986 = vrot.slane %v2985, 1
      %v2987 = vmax.f32 %v2985, %v2986
      %v2988 = vsel %vm2672, %v2538, -inf
      %v2989 = vrot.slane %v2988, 4
      %v2990 = vmax.f32 %v2988, %v2989
      %v2991 = vrot.slane %v2990, 2
      %v2992 = vmax.f32 %v2990, %v2991
      %v2993 = vrot.slane %v2992, 1
      %v2994 = vmax.f32 %v2992, %v2993
      %v2995 = vsel %vm2672, %v2537, -inf
      %v2996 = vrot.slane %v2995, 4
      %v2997 = vmax.f32 %v2995, %v2996
      %v2998 = vrot.slane %v2997, 2
      %v2999 = vmax.f32 %v2997, %v2998
      %v3000 = vrot.slane %v2999, 1
      %v3001 = vmax.f32 %v2999, %v3000
      %v3002 = vsel %vm2672, %v2539, -inf
      %v3003 = vrot.slane %v3002, 4
      %v3004 = vmax.f32 %v3002, %v3003
      %v3005 = vrot.slane %v3004, 2
      %v3006 = vmax.f32 %v3004, %v3005
      %v3007 = vrot.slane %v3006, 1
      %v3008 = vmax.f32 %v3006, %v3007
      %v3009 = vsel %vm2672, %v2547, -inf
      %v3010 = vrot.slane %v3009, 4
      %v3011 = vmax.f32 %v3009, %v3010
      %v3012 = vrot.slane %v3011, 2
      %v3013 = vmax.f32 %v3011, %v3012
      %v3014 = vrot.slane %v3013, 1
      %v3015 = vmax.f32 %v3013, %v3014
      %v3016 = vsel %vm2672, %v2555, -inf
      %v3017 = vrot.slane %v3016, 4
      %v3018 = vmax.f32 %v3016, %v3017
      %v3019 = vrot.slane %v3018, 2
      %v3020 = vmax.f32 %v3018, %v3019
      %v3021 = vrot.slane %v3020, 1
      %v3022 = vmax.f32 %v3020, %v3021
      %v3023 = vsel %vm2672, %v2554, -inf
      %v3024 = vrot.slane %v3023, 4
      %v3025 = vmax.f32 %v3023, %v3024
      %v3026 = vrot.slane %v3025, 2
      %v3027 = vmax.f32 %v3025, %v3026
      %v3028 = vrot.slane %v3027, 1
      %v3029 = vmax.f32 %v3027, %v3028
      %v3030 = vsel %vm2672, %v2556, -inf
      %v3031 = vrot.slane %v3030, 4
      %v3032 = vmax.f32 %v3030, %v3031
      %v3033 = vrot.slane %v3032, 2
      %v3034 = vmax.f32 %v3032, %v3033
      %v3035 = vrot.slane %v3034, 1
      %v3036 = vmax.f32 %v3034, %v3035
      %v3037 = vsel %vm2672, %v2564, -inf
      %v3038 = vrot.slane %v3037, 4
      %v3039 = vmax.f32 %v3037, %v3038
      %v3040 = vrot.slane %v3039, 2
      %v3041 = vmax.f32 %v3039, %v3040
      %v3042 = vrot.slane %v3041, 1
      %v3043 = vmax.f32 %v3041, %v3042
      %v3044 = vsel %vm2672, %v2572, -inf
      %v3045 = vrot.slane %v3044, 4
      %v3046 = vmax.f32 %v3044, %v3045
      %v3047 = vrot.slane %v3046, 2
      %v3048 = vmax.f32 %v3046, %v3047
      %v3049 = vrot.slane %v3048, 1
      %v3050 = vmax.f32 %v3048, %v3049
      %v3051 = vsel %vm2672, %v2571, -inf
      %v3052 = vrot.slane %v3051, 4
      %v3053 = vmax.f32 %v3051, %v3052
      %v3054 = vrot.slane %v3053, 2
      %v3055 = vmax.f32 %v3053, %v3054
      %v3056 = vrot.slane %v3055, 1
      %v3057 = vmax.f32 %v3055, %v3056
      %v3058 = vsel %vm2672, %v2573, -inf
      %v3059 = vrot.slane %v3058, 4
      %v3060 = vmax.f32 %v3058, %v3059
      %v3061 = vrot.slane %v3060, 2
      %v3062 = vmax.f32 %v3060, %v3061
      %v3063 = vrot.slane %v3062, 1
      %v3064 = vmax.f32 %v3062, %v3063
      %v3065 = vsel %vm2672, %v2581, -inf
      %v3066 = vrot.slane %v3065, 4
      %v3067 = vmax.f32 %v3065, %v3066
      %v3068 = vrot.slane %v3067, 2
      %v3069 = vmax.f32 %v3067, %v3068
      %v3070 = vrot.slane %v3069, 1
      %v3071 = vmax.f32 %v3069, %v3070
      %v3072 = vsel %vm2672, %v2589, -inf
      %v3073 = vrot.slane %v3072, 4
      %v3074 = vmax.f32 %v3072, %v3073
      %v3075 = vrot.slane %v3074, 2
      %v3076 = vmax.f32 %v3074, %v3075
      %v3077 = vrot.slane %v3076, 1
      %v3078 = vmax.f32 %v3076, %v3077
      %v3079 = vsel %vm2672, %v2588, -inf
      %v3080 = vrot.slane %v3079, 4
      %v3081 = vmax.f32 %v3079, %v3080
      %v3082 = vrot.slane %v3081, 2
      %v3083 = vmax.f32 %v3081, %v3082
      %v3084 = vrot.slane %v3083, 1
      %v3085 = vmax.f32 %v3083, %v3084
      %v3086 = vsel %vm2672, %v2590, -inf
      %v3087 = vrot.slane %v3086, 4
      %v3088 = vmax.f32 %v3086, %v3087
      %v3089 = vrot.slane %v3088, 2
      %v3090 = vmax.f32 %v3088, %v3089
      %v3091 = vrot.slane %v3090, 1
      %v3092 = vmax.f32 %v3090, %v3091
      %v3093 = vsel %vm2672, %v2598, -inf
      %v3094 = vrot.slane %v3093, 4
      %v3095 = vmax.f32 %v3093, %v3094
      %v3096 = vrot.slane %v3095, 2
      %v3097 = vmax.f32 %v3095, %v3096
      %v3098 = vrot.slane %v3097, 1
      %v3099 = vmax.f32 %v3097, %v3098
      %v3100 = vsel %vm2672, %v2606, -inf
      %v3101 = vrot.slane %v3100, 4
      %v3102 = vmax.f32 %v3100, %v3101
      %v3103 = vrot.slane %v3102, 2
      %v3104 = vmax.f32 %v3102, %v3103
      %v3105 = vrot.slane %v3104, 1
      %v3106 = vmax.f32 %v3104, %v3105
      %v3107 = vsel %vm2672, %v2605, -inf
      %v3108 = vrot.slane %v3107, 4
      %v3109 = vmax.f32 %v3107, %v3108
      %v3110 = vrot.slane %v3109, 2
      %v3111 = vmax.f32 %v3109, %v3110
      %v3112 = vrot.slane %v3111, 1
      %v3113 = vmax.f32 %v3111, %v3112
      %v3114 = vsel %vm2672, %v2607, -inf
      %v3115 = vrot.slane %v3114, 4
      %v3116 = vmax.f32 %v3114, %v3115
      %v3117 = vrot.slane %v3116, 2
      %v3118 = vmax.f32 %v3116, %v3117
      %v3119 = vrot.slane %v3118, 1
      %v3120 = vmax.f32 %v3118, %v3119
      %v3121 = vmax.f32 %v2679, 0.0
      %v3122 = vmax.f32 %v2686, 0.0
      %v3123 = vmax.f32 %v2693, 0.0
      %v3124 = vmax.f32 %v2700, 0.0
      %v3125 = vmax.f32 %v2707, 0.0
      %v3126 = vmax.f32 %v2714, 0.0
      %v3127 = vmax.f32 %v2721, 0.0
      %v3128 = vmax.f32 %v2728, 0.0
      %v3129 = vmax.f32 %v2735, 0.0
      %v3130 = vmax.f32 %v2742, 0.0
      %v3131 = vmax.f32 %v2749, 0.0
      %v3132 = vmax.f32 %v2756, 0.0
      %v3133 = vmax.f32 %v2763, 0.0
      %v3134 = vmax.f32 %v2770, 0.0
      %v3135 = vmax.f32 %v2777, 0.0
      %v3136 = vmax.f32 %v2784, 0.0
      %v3137 = vmax.f32 %v2791, 0.0
      %v3138 = vmax.f32 %v2798, 0.0
      %v3139 = vmax.f32 %v2805, 0.0
      %v3140 = vmax.f32 %v2812, 0.0
      %v3141 = vmax.f32 %v2819, 0.0
      %v3142 = vmax.f32 %v2826, 0.0
      %v3143 = vmax.f32 %v2833, 0.0
      %v3144 = vmax.f32 %v2840, 0.0
      %v3145 = vmax.f32 %v2847, 0.0
      %v3146 = vmax.f32 %v2854, 0.0
      %v3147 = vmax.f32 %v2861, 0.0
      %v3148 = vmax.f32 %v2868, 0.0
      %v3149 = vmax.f32 %v2875, 0.0
      %v3150 = vmax.f32 %v2882, 0.0
      %v3151 = vmax.f32 %v2889, 0.0
      %v3152 = vmax.f32 %v2896, 0.0
      %v3153 = vmax.f32 %v2903, 0.0
      %v3154 = vmax.f32 %v2910, 0.0
      %v3155 = vmax.f32 %v2917, 0.0
      %v3156 = vmax.f32 %v2924, 0.0
      %v3157 = vmax.f32 %v2931, 0.0
      %v3158 = vmax.f32 %v2938, 0.0
      %v3159 = vmax.f32 %v2945, 0.0
      %v3160 = vmax.f32 %v2952, 0.0
      %v3161 = vmax.f32 %v2959, 0.0
      %v3162 = vmax.f32 %v2966, 0.0
      %v3163 = vmax.f32 %v2973, 0.0
      %v3164 = vmax.f32 %v2980, 0.0
      %v3165 = vmax.f32 %v2987, 0.0
      %v3166 = vmax.f32 %v2994, 0.0
      %v3167 = vmax.f32 %v3001, 0.0
      %v3168 = vmax.f32 %v3008, 0.0
      %v3169 = vmax.f32 %v3015, 0.0
      %v3170 = vmax.f32 %v3022, 0.0
      %v3171 = vmax.f32 %v3029, 0.0
      %v3172 = vmax.f32 %v3036, 0.0
      %v3173 = vmax.f32 %v3043, 0.0
      %v3174 = vmax.f32 %v3050, 0.0
      %v3175 = vmax.f32 %v3057, 0.0
      %v3176 = vmax.f32 %v3064, 0.0
      %v3177 = vmax.f32 %v3071, 0.0
      %v3178 = vmax.f32 %v3078, 0.0
      %v3179 = vmax.f32 %v3085, 0.0
      %v3180 = vmax.f32 %v3092, 0.0
      %v3181 = vmax.f32 %v3099, 0.0
      %v3182 = vmax.f32 %v3106, 0.0
      %v3183 = vmax.f32 %v3113, 0.0
      %v3184 = vmax.f32 %v3120, 0.0
      %vm3249 = vcmask 1041409
      %v3250 = vsel %vm3249, %v3122, %v3121
      %vm3251 = vcmask 1042434
      %v3252 = vsel %vm3251, %v3123, %v3250
      %vm3253 = vcmask 1043459
      %v3254 = vsel %vm3253, %v3124, %v3252
      %vm3255 = vcmask 1044484
      %v3256 = vsel %vm3255, %v3125, %v3254
      %vm3257 = vcmask 1045509
      %v3258 = vsel %vm3257, %v3126, %v3256
      %vm3259 = vcmask 1046534
      %v3260 = vsel %vm3259, %v3127, %v3258
      %vm3261 = vcmask 1047559
      %v3262 = vsel %vm3261, %v3128, %v3260
      %v3263 = vsel %vm3249, %v3130, %v3129
      %v3264 = vsel %vm3251, %v3131, %v3263
      %v3265 = vsel %vm3253, %v3132, %v3264
      %v3266 = vsel %vm3255, %v3133, %v3265
      %v3267 = vsel %vm3257, %v3134, %v3266
      %v3268 = vsel %vm3259, %v3135, %v3267
      %v3269 = vsel %vm3261, %v3136, %v3268
      %v3270 = vsel %vm3249, %v3138, %v3137
      %v3271 = vsel %vm3251, %v3139, %v3270
      %v3272 = vsel %vm3253, %v3140, %v3271
      %v3273 = vsel %vm3255, %v3141, %v3272
      %v3274 = vsel %vm3257, %v3142, %v3273
      %v3275 = vsel %vm3259, %v3143, %v3274
      %v3276 = vsel %vm3261, %v3144, %v3275
      %v3277 = vsel %vm3249, %v3146, %v3145
      %v3278 = vsel %vm3251, %v3147, %v3277
      %v3279 = vsel %vm3253, %v3148, %v3278
      %v3280 = vsel %vm3255, %v3149, %v3279
      %v3281 = vsel %vm3257, %v3150, %v3280
      %v3282 = vsel %vm3259, %v3151, %v3281
      %v3283 = vsel %vm3261, %v3152, %v3282
      %v3284 = vsel %vm3249, %v3154, %v3153
      %v3285 = vsel %vm3251, %v3155, %v3284
      %v3286 = vsel %vm3253, %v3156, %v3285
      %v3287 = vsel %vm3255, %v3157, %v3286
      %v3288 = vsel %vm3257, %v3158, %v3287
      %v3289 = vsel %vm3259, %v3159, %v3288
      %v3290 = vsel %vm3261, %v3160, %v3289
      %v3291 = vsel %vm3249, %v3162, %v3161
      %v3292 = vsel %vm3251, %v3163, %v3291
      %v3293 = vsel %vm3253, %v3164, %v3292
      %v3294 = vsel %vm3255, %v3165, %v3293
      %v3295 = vsel %vm3257, %v3166, %v3294
      %v3296 = vsel %vm3259, %v3167, %v3295
      %v3297 = vsel %vm3261, %v3168, %v3296
      %v3298 = vsel %vm3249, %v3170, %v3169
      %v3299 = vsel %vm3251, %v3171, %v3298
      %v3300 = vsel %vm3253, %v3172, %v3299
      %v3301 = vsel %vm3255, %v3173, %v3300
      %v3302 = vsel %vm3257, %v3174, %v3301
      %v3303 = vsel %vm3259, %v3175, %v3302
      %v3304 = vsel %vm3261, %v3176, %v3303
      %v3305 = vsel %vm3249, %v3178, %v3177
      %v3306 = vsel %vm3251, %v3179, %v3305
      %v3307 = vsel %vm3253, %v3180, %v3306
      %v3308 = vsel %vm3255, %v3181, %v3307
      %v3309 = vsel %vm3257, %v3182, %v3308
      %v3310 = vsel %vm3259, %v3183, %v3309
      %v3311 = vsel %vm3261, %v3184, %v3310
      %3320 = vst.msk [vmem:[%s170] sm:$0xff] %vm2271, %v3262
      %3321 = vst.msk [vmem:[%s170 + $0x8] sm:$0xff] %vm2271, %v3269
      %3322 = vst.msk [vmem:[%s170 + $0x10] sm:$0xff] %vm2271, %v3276
      %3323 = vst.msk [vmem:[%s170 + $0x18] sm:$0xff] %vm2271, %v3283
      %3324 = vst.msk [vmem:[%s170 + $0x20] sm:$0xff] %vm2271, %v3290
      %3325 = vst.msk [vmem:[%s170 + $0x28] sm:$0xff] %vm2271, %v3297
      %3326 = vst.msk [vmem:[%s170 + $0x30] sm:$0xff] %vm2271, %v3304
      %3327 = vst.msk [vmem:[%s170 + $0x38] sm:$0xff] %vm2271, %v3311
      %p3328 = scmp.lt.s32.totalorder %s14, 1
      %s3329 = scalar_select %p3328, %s14, 1
      %s3330 = smul.addr %s3329, 8
      %s3331 = smul.addr %s3330, 8
      %s3332 = scalar_lea.vmem %s3, %s3331
      // Predicated region
      $region33: #{base_network_forward.2} parent=31 // pred_check
        %p3333 = pneg %p100
      $region34: #{base_network_forward.2} parent=31 // pred_check_branch
        %3335 = sbr.rel (%p3333) target = $region36
      $region35: #{base_network_forward.2} parent=31 // pred_region
        _
      $region36: #{base_network_forward.2} parent=31 // pred_fallthru
        _
    $region32: #{base_network_forward.2} parent=5 // pred_fallthru
      _
    %p3336 = scmp.le.s32.totalorder 2, %s9
    // Predicated region
    $region37: #{base_network_forward.2} parent=5 // pred_check
      %p3337 = pneg %p3336
    $region38: #{base_network_forward.2} parent=5 // pred_check_branch
      %3339 = sbr.rel (%p3337) target = $region40
    $region39: #{base_network_forward.2} parent=5 // pred_region
      %s3340 = ssub.s32 %s9, 2
      // Predicated region
      $region41: #{base_network_forward.2} parent=39 // pred_check
        %p3341 = pneg %p106
      $region42: #{base_network_forward.2} parent=39 // pred_check_branch
        %3343 = sbr.rel (%p3341) target = $region44
      $region43: #{base_network_forward.2} parent=39 // pred_region
        %p3344 = scmp.lt.s32.totalorder %s15, 1
        %s3345 = scalar_select %p3344, %s15, 1
        %s3346 = smul.addr %s3345, 8
        %s3347 = smul.addr %s3346, 8
        %s3348 = scalar_lea.vmem %s3, %s3347
      $region44: #{base_network_forward.2} parent=39 // pred_fallthru
        _
    $region40: #{base_network_forward.2} parent=5 // pred_fallthru
      _
  $region6: #{base_network_forward.2} parent=0 // loop_footer
    %s13 = sadd.s32 1, %s9
  $region7: #{base_network_forward.2} parent=0 // loop_footer_branch
    %8 = sbr.rel target = $region3
  $region8: #{base_network_forward.2} parent=0 // loop_exit
    _

</llo_original>
